<compile_context>
chip_gen: v6e
topology: v6e:2x2x1
jax: 0.10.0
libtpu: 0.0.40
codegen_flags: <defaults>
</compile_context>

<pallas_src>
import math

import jax
import jax.numpy as jnp
import numpy as np
from jax.experimental import pallas as pl
from jax.experimental.pallas import tpu as pltpu


def _sigmoid(x):
    # sigmoid(x) = 0.5 * (tanh(x/2) + 1): keeps the nonlinearity on the EUP
    # (tanh) with no exact divide in the recurrence.
    return 0.5 * jnp.tanh(0.5 * x) + 0.5


# ---------------------------------------------------------------------------
# Fused Pallas kernel: all LSTM layers + FC head in one invocation (no grid)
# ---------------------------------------------------------------------------
def _make_speech_lstm_kernel(num_layers, seq_len, batch, hidden):
    H = hidden

    def kernel(*refs):
        refs = list(refs)
        gates0_ref = refs.pop(0)          # (T, B, 4H): precomputed x@W_ih0^T + b0
        whh0_ref = refs.pop(0)            # (H, 4H)
        upper_refs = []
        for _ in range(num_layers - 1):   # per upper layer: (H,4H), (H,4H), (1,4H)
            upper_refs.append((refs.pop(0), refs.pop(0), refs.pop(0)))
        fcw_ref = refs.pop(0)             # (H, 1)
        fcb_ref = refs.pop(0)             # (1, 1)
        out_ref = refs.pop(0)             # (B, 1)

        # Hoist constant weight loads / bias broadcasts out of the time loop.
        whh0 = whh0_ref[...]
        upper = [
            (wih_ref[...], whh_ref[...],
             jnp.broadcast_to(b_ref[...], (batch, 4 * H)))
            for (wih_ref, whh_ref, b_ref) in upper_refs
        ]

        def cell(gates, c_prev):
            # NOTE: for H < 128 these per-gate lane slices are not 128-aligned
            # (small XLU relayout); at realistic H (>=128) they are free.
            i_g = _sigmoid(gates[:, 0 * H:1 * H])
            f_g = _sigmoid(gates[:, 1 * H:2 * H])
            g_g = jnp.tanh(gates[:, 2 * H:3 * H])
            o_g = _sigmoid(gates[:, 3 * H:4 * H])
            c_new = f_g * c_prev + i_g * g_g
            h_new = o_g * jnp.tanh(c_new)
            return h_new, c_new

        zeros = jnp.zeros((batch, H), jnp.float32)
        hs = [zeros] * num_layers
        cs = [zeros] * num_layers

        # T and num_layers are small static ints -> trace-time unroll gives
        # static VMEM indices and full scheduler visibility.  For long
        # sequences switch to lax.fori_loop(..., unroll=k) or chunk T on a
        # grid axis to bound code size / VMEM (especially on v7x: 64 MiB).
        for t in range(seq_len):
            # Layer 0: input projection already hoisted into gates0.
            g0 = gates0_ref[t] + jnp.dot(
                hs[0], whh0, preferred_element_type=jnp.float32)
            hs[0], cs[0] = cell(g0, cs[0])
            # Upper layers: input is the lower layer's fresh hidden state.
            for l in range(1, num_layers):
                wih_t, whh_t, b = upper[l - 1]
                g = (jnp.dot(hs[l - 1], wih_t, preferred_element_type=jnp.float32)
                     + jnp.dot(hs[l], whh_t, preferred_element_type=jnp.float32)
                     + b)
                hs[l], cs[l] = cell(g, cs[l])

        # Fused FC head on the last timestep of the top layer.
        out_ref[...] = (
            jnp.dot(hs[num_layers - 1], fcw_ref[...],
                    preferred_element_type=jnp.float32)
            + fcb_ref[...]
        )

    return kernel


# ---------------------------------------------------------------------------
# Wrapper
# ---------------------------------------------------------------------------
def speech_lstm_forward(x_btd, params):
    """x_btd: (B, T, input_size) batch-first, like the PyTorch module."""
    x = x_btd.astype(jnp.float32)
    B, T, _ = x.shape
    lstm = params["lstm"]
    num_layers = len(lstm)
    H = lstm[0][1].shape[0]

    # (1) Hoisted layer-0 input projection: one batched matmul over all
    #     timesteps (plain XLA) instead of T tiny M=B matmuls in the loop.
    wih0_t, whh0_t, b0 = lstm[0]
    x_tbd = jnp.transpose(x, (1, 0, 2))                              # (T, B, D)
    gates0 = jnp.einsum("tbd,dg->tbg", x_tbd, wih0_t,
                        preferred_element_type=jnp.float32) + b0     # (T, B, 4H)

    args = [gates0, whh0_t]
    for (wih_t, whh_t, b) in lstm[1:]:
        args += [wih_t, whh_t, b]
    args += [params["fc_w_t"], params["fc_b"]]

    kernel = _make_speech_lstm_kernel(num_layers, T, B, H)
    # (2) Single pallas_call, no grid: whole recurrence + FC fused, every
    #     operand resident in VMEM (nothing to double-buffer).
    return pl.pallas_call(
        kernel,
        out_shape=jax.ShapeDtypeStruct((B, 1), jnp.float32),
        compiler_params=pltpu.CompilerParams(
            # Explicit VMEM budget; footprint here is ~100 KiB, and 32 MiB
            # fits every generation (v5e/v6e: 128 MiB phys, v7x: 64 MiB).
            vmem_limit_bytes=32 * 1024 * 1024,
        ),
    )(*args)


# ---------------------------------------------------------------------------
# Deterministic parameter init (PyTorch-style U(-1/sqrt(H), 1/sqrt(H)))
# ---------------------------------------------------------------------------
def init_params(key, input_size, hidden_size, num_layers):
    scale = 1.0 / math.sqrt(hidden_size)
    raw_lstm = []
    for layer in range(num_layers):
        in_dim = input_size if layer == 0 else hidden_size
        key, k1, k2, k3, k4 = jax.random.split(key, 5)
        w_ih = jax.random.uniform(k1, (4 * hidden_size, in_dim), jnp.float32, -scale, scale)
        w_hh = jax.random.uniform(k2, (4 * hidden_size, hidden_size), jnp.float32, -scale, scale)
        b_ih = jax.random.uniform(k3, (4 * hidden_size,), jnp.float32, -scale, scale)
        b_hh = jax.random.uniform(k4, (4 * hidden_size,), jnp.float32, -scale, scale)
        raw_lstm.append((w_ih, w_hh, b_ih, b_hh))
    key, kw, kb = jax.random.split(key, 3)
    fc_w = jax.random.uniform(kw, (1, hidden_size), jnp.float32, -scale, scale)
    fc_b = jax.random.uniform(kb, (1,), jnp.float32, -scale, scale)

    kernel_params = {
        "lstm": [
            (w_ih.T, w_hh.T, (b_ih + b_hh)[None, :])        # (in,4H),(H,4H),(1,4H)
            for (w_ih, w_hh, b_ih, b_hh) in raw_lstm
        ],
        "fc_w_t": fc_w.T,          # (H, 1)
        "fc_b": fc_b[None, :],     # (1, 1)
    }
    raw_params = {"lstm": raw_lstm, "fc_w": fc_w, "fc_b": fc_b}
    return kernel_params, raw_params


# ---------------------------------------------------------------------------
# Pure-JAX reference (matches torch.nn.LSTM semantics) for verification
# ---------------------------------------------------------------------------
def ref_forward(x_btd, raw_params):
    B, T, _ = x_btd.shape
    x = x_btd.astype(jnp.float32)
    for (w_ih, w_hh, b_ih, b_hh) in raw_params["lstm"]:
        H = w_hh.shape[1]
        h = jnp.zeros((B, H), jnp.float32)
        c = jnp.zeros((B, H), jnp.float32)
        outs = []
        for t in range(T):
            gates = x[:, t, :] @ w_ih.T + b_ih + h @ w_hh.T + b_hh
            i_g = jax.nn.sigmoid(gates[:, 0 * H:1 * H])
            f_g = jax.nn.sigmoid(gates[:, 1 * H:2 * H])
            g_g = jnp.tanh(gates[:, 2 * H:3 * H])
            o_g = jax.nn.sigmoid(gates[:, 3 * H:4 * H])
            c = f_g * c + i_g * g_g
            h = o_g * jnp.tanh(c)
            outs.append(h)
        x = jnp.stack(outs, axis=1)  # (B, T, H)
    return x[:, -1, :] @ raw_params["fc_w"].T + raw_params["fc_b"]


# ---------------------------------------------------------------------------
if __name__ == "__main__":
    B, T, INPUT_SIZE, HIDDEN_SIZE, NUM_LAYERS = 2, 8, 16, 32, 2

    key = jax.random.PRNGKey(0)
    key, pkey, xkey = jax.random.split(key, 3)
    kernel_params, raw_params = init_params(pkey, INPUT_SIZE, HIDDEN_SIZE, NUM_LAYERS)
    x = jax.random.normal(xkey, (B, T, INPUT_SIZE), jnp.float32)

    fwd = jax.jit(speech_lstm_forward)
    out = fwd(x, kernel_params)
    out = jax.block_until_ready(out)
    assert out.shape == (B, 1), out.shape

    expected = ref_forward(x, raw_params)
    np.testing.assert_allclose(np.asarray(out), np.asarray(expected),
                               rtol=1e-3, atol=1e-3)

    print("KERNEL_OK")
</pallas_src>

<mosaic_0001>
module attributes {stable_mosaic.version = 11 : i64} {
  func.func @kernel(%arg0: memref<8x2x128xf32, #tpu.memory_space<vmem>>, %arg1: memref<32x128xf32, #tpu.memory_space<vmem>>, %arg2: memref<32x128xf32, #tpu.memory_space<vmem>>, %arg3: memref<32x128xf32, #tpu.memory_space<vmem>>, %arg4: memref<1x128xf32, #tpu.memory_space<vmem>>, %arg5: memref<32x1xf32, #tpu.memory_space<vmem>>, %arg6: memref<1x1xf32, #tpu.memory_space<vmem>>, %arg7: memref<2x1xf32, #tpu.memory_space<vmem>>) attributes {dimension_semantics = [], scalar_prefetch = 0 : i64, scratch_operands = 0 : i64, tpu.core_type = #tpu.core_type<tc>} {
    %c0 = arith.constant 0 : index
    %c0_0 = arith.constant 0 : index
    %0 = vector.load %arg1[%c0, %c0_0] : memref<32x128xf32, #tpu.memory_space<vmem>>, vector<32x128xf32>
    %c0_1 = arith.constant 0 : index
    %c0_2 = arith.constant 0 : index
    %1 = vector.load %arg2[%c0_1, %c0_2] : memref<32x128xf32, #tpu.memory_space<vmem>>, vector<32x128xf32>
    %c0_3 = arith.constant 0 : index
    %c0_4 = arith.constant 0 : index
    %2 = vector.load %arg3[%c0_3, %c0_4] : memref<32x128xf32, #tpu.memory_space<vmem>>, vector<32x128xf32>
    %c0_5 = arith.constant 0 : index
    %c0_6 = arith.constant 0 : index
    %3 = vector.load %arg4[%c0_5, %c0_6] : memref<1x128xf32, #tpu.memory_space<vmem>>, vector<1x128xf32>
    %4 = vector.shape_cast %3 : vector<1x128xf32> to vector<1x128xf32>
    %5 = vector.broadcast %4 : vector<1x128xf32> to vector<2x128xf32>
    %cst = arith.constant 0.000000e+00 : f32
    %6 = vector.broadcast %cst : f32 to vector<2x32xf32>
    %c0_7 = arith.constant 0 : index
    %c0_8 = arith.constant 0 : index
    %c0_9 = arith.constant 0 : index
    %7 = vector.load %arg0[%c0_7, %c0_8, %c0_9] : memref<8x2x128xf32, #tpu.memory_space<vmem>>, vector<1x2x128xf32>
    %8 = vector.shape_cast %7 : vector<1x2x128xf32> to vector<2x128xf32>
    %cst_10 = arith.constant dense<0.000000e+00> : vector<2x128xf32>
    %9 = tpu.matmul %6, %0, %cst_10 {dimension_numbers = #tpu.dot_dimension_numbers<[1], [0], [0], [1], [0, 0, 1, 1], [], []>} : vector<2x32xf32>, vector<32x128xf32>, vector<2x128xf32> -> vector<2x128xf32>
    %10 = arith.addf %8, %9 : vector<2x128xf32>
    %11 = vector.extract_strided_slice %10 {offsets = [0, 0], sizes = [2, 32], strides = [1, 1]} : vector<2x128xf32> to vector<2x32xf32>
    %cst_11 = arith.constant 5.000000e-01 : f32
    %12 = vector.broadcast %cst_11 : f32 to vector<2x32xf32>
    %13 = arith.mulf %12, %11 : vector<2x32xf32>
    %14 = math.tanh %13 : vector<2x32xf32>
    %cst_12 = arith.constant 5.000000e-01 : f32
    %15 = vector.broadcast %cst_12 : f32 to vector<2x32xf32>
    %16 = arith.mulf %15, %14 : vector<2x32xf32>
    %cst_13 = arith.constant 5.000000e-01 : f32
    %17 = vector.broadcast %cst_13 : f32 to vector<2x32xf32>
    %18 = arith.addf %16, %17 : vector<2x32xf32>
    %19 = vector.extract_strided_slice %10 {offsets = [0, 32], sizes = [2, 32], strides = [1, 1]} : vector<2x128xf32> to vector<2x32xf32>
    %cst_14 = arith.constant 5.000000e-01 : f32
    %20 = vector.broadcast %cst_14 : f32 to vector<2x32xf32>
    %21 = arith.mulf %20, %19 : vector<2x32xf32>
    %22 = math.tanh %21 : vector<2x32xf32>
    %cst_15 = arith.constant 5.000000e-01 : f32
    %23 = vector.broadcast %cst_15 : f32 to vector<2x32xf32>
    %24 = arith.mulf %23, %22 : vector<2x32xf32>
    %cst_16 = arith.constant 5.000000e-01 : f32
    %25 = vector.broadcast %cst_16 : f32 to vector<2x32xf32>
    %26 = arith.addf %24, %25 : vector<2x32xf32>
    %27 = vector.extract_strided_slice %10 {offsets = [0, 64], sizes = [2, 32], strides = [1, 1]} : vector<2x128xf32> to vector<2x32xf32>
    %28 = math.tanh %27 : vector<2x32xf32>
    %29 = vector.extract_strided_slice %10 {offsets = [0, 96], sizes = [2, 32], strides = [1, 1]} : vector<2x128xf32> to vector<2x32xf32>
    %cst_17 = arith.constant 5.000000e-01 : f32
    %30 = vector.broadcast %cst_17 : f32 to vector<2x32xf32>
    %31 = arith.mulf %30, %29 : vector<2x32xf32>
    %32 = math.tanh %31 : vector<2x32xf32>
    %cst_18 = arith.constant 5.000000e-01 : f32
    %33 = vector.broadcast %cst_18 : f32 to vector<2x32xf32>
    %34 = arith.mulf %33, %32 : vector<2x32xf32>
    %cst_19 = arith.constant 5.000000e-01 : f32
    %35 = vector.broadcast %cst_19 : f32 to vector<2x32xf32>
    %36 = arith.addf %34, %35 : vector<2x32xf32>
    %37 = arith.mulf %26, %6 : vector<2x32xf32>
    %38 = arith.mulf %18, %28 : vector<2x32xf32>
    %39 = arith.addf %37, %38 : vector<2x32xf32>
    %40 = math.tanh %39 : vector<2x32xf32>
    %41 = arith.mulf %36, %40 : vector<2x32xf32>
    %cst_20 = arith.constant dense<0.000000e+00> : vector<2x128xf32>
    %42 = tpu.matmul %41, %1, %cst_20 {dimension_numbers = #tpu.dot_dimension_numbers<[1], [0], [0], [1], [0, 0, 1, 1], [], []>} : vector<2x32xf32>, vector<32x128xf32>, vector<2x128xf32> -> vector<2x128xf32>
    %cst_21 = arith.constant dense<0.000000e+00> : vector<2x128xf32>
    %43 = tpu.matmul %6, %2, %cst_21 {dimension_numbers = #tpu.dot_dimension_numbers<[1], [0], [0], [1], [0, 0, 1, 1], [], []>} : vector<2x32xf32>, vector<32x128xf32>, vector<2x128xf32> -> vector<2x128xf32>
    %44 = arith.addf %42, %43 : vector<2x128xf32>
    %45 = arith.addf %44, %5 : vector<2x128xf32>
    %46 = vector.extract_strided_slice %45 {offsets = [0, 0], sizes = [2, 32], strides = [1, 1]} : vector<2x128xf32> to vector<2x32xf32>
    %cst_22 = arith.constant 5.000000e-01 : f32
    %47 = vector.broadcast %cst_22 : f32 to vector<2x32xf32>
    %48 = arith.mulf %47, %46 : vector<2x32xf32>
    %49 = math.tanh %48 : vector<2x32xf32>
    %cst_23 = arith.constant 5.000000e-01 : f32
    %50 = vector.broadcast %cst_23 : f32 to vector<2x32xf32>
    %51 = arith.mulf %50, %49 : vector<2x32xf32>
    %cst_24 = arith.constant 5.000000e-01 : f32
    %52 = vector.broadcast %cst_24 : f32 to vector<2x32xf32>
    %53 = arith.addf %51, %52 : vector<2x32xf32>
    %54 = vector.extract_strided_slice %45 {offsets = [0, 32], sizes = [2, 32], strides = [1, 1]} : vector<2x128xf32> to vector<2x32xf32>
    %cst_25 = arith.constant 5.000000e-01 : f32
    %55 = vector.broadcast %cst_25 : f32 to vector<2x32xf32>
    %56 = arith.mulf %55, %54 : vector<2x32xf32>
    %57 = math.tanh %56 : vector<2x32xf32>
    %cst_26 = arith.constant 5.000000e-01 : f32
    %58 = vector.broadcast %cst_26 : f32 to vector<2x32xf32>
    %59 = arith.mulf %58, %57 : vector<2x32xf32>
    %cst_27 = arith.constant 5.000000e-01 : f32
    %60 = vector.broadcast %cst_27 : f32 to vector<2x32xf32>
    %61 = arith.addf %59, %60 : vector<2x32xf32>
    %62 = vector.extract_strided_slice %45 {offsets = [0, 64], sizes = [2, 32], strides = [1, 1]} : vector<2x128xf32> to vector<2x32xf32>
    %63 = math.tanh %62 : vector<2x32xf32>
    %64 = vector.extract_strided_slice %45 {offsets = [0, 96], sizes = [2, 32], strides = [1, 1]} : vector<2x128xf32> to vector<2x32xf32>
    %cst_28 = arith.constant 5.000000e-01 : f32
    %65 = vector.broadcast %cst_28 : f32 to vector<2x32xf32>
    %66 = arith.mulf %65, %64 : vector<2x32xf32>
    %67 = math.tanh %66 : vector<2x32xf32>
    %cst_29 = arith.constant 5.000000e-01 : f32
    %68 = vector.broadcast %cst_29 : f32 to vector<2x32xf32>
    %69 = arith.mulf %68, %67 : vector<2x32xf32>
    %cst_30 = arith.constant 5.000000e-01 : f32
    %70 = vector.broadcast %cst_30 : f32 to vector<2x32xf32>
    %71 = arith.addf %69, %70 : vector<2x32xf32>
    %72 = arith.mulf %61, %6 : vector<2x32xf32>
    %73 = arith.mulf %53, %63 : vector<2x32xf32>
    %74 = arith.addf %72, %73 : vector<2x32xf32>
    %75 = math.tanh %74 : vector<2x32xf32>
    %76 = arith.mulf %71, %75 : vector<2x32xf32>
    %c1 = arith.constant 1 : index
    %c0_31 = arith.constant 0 : index
    %c0_32 = arith.constant 0 : index
    %77 = vector.load %arg0[%c1, %c0_31, %c0_32] : memref<8x2x128xf32, #tpu.memory_space<vmem>>, vector<1x2x128xf32>
    %78 = vector.shape_cast %77 : vector<1x2x128xf32> to vector<2x128xf32>
    %cst_33 = arith.constant dense<0.000000e+00> : vector<2x128xf32>
    %79 = tpu.matmul %41, %0, %cst_33 {dimension_numbers = #tpu.dot_dimension_numbers<[1], [0], [0], [1], [0, 0, 1, 1], [], []>} : vector<2x32xf32>, vector<32x128xf32>, vector<2x128xf32> -> vector<2x128xf32>
    %80 = arith.addf %78, %79 : vector<2x128xf32>
    %81 = vector.extract_strided_slice %80 {offsets = [0, 0], sizes = [2, 32], strides = [1, 1]} : vector<2x128xf32> to vector<2x32xf32>
    %cst_34 = arith.constant 5.000000e-01 : f32
    %82 = vector.broadcast %cst_34 : f32 to vector<2x32xf32>
    %83 = arith.mulf %82, %81 : vector<2x32xf32>
    %84 = math.tanh %83 : vector<2x32xf32>
    %cst_35 = arith.constant 5.000000e-01 : f32
    %85 = vector.broadcast %cst_35 : f32 to vector<2x32xf32>
    %86 = arith.mulf %85, %84 : vector<2x32xf32>
    %cst_36 = arith.constant 5.000000e-01 : f32
    %87 = vector.broadcast %cst_36 : f32 to vector<2x32xf32>
    %88 = arith.addf %86, %87 : vector<2x32xf32>
    %89 = vector.extract_strided_slice %80 {offsets = [0, 32], sizes = [2, 32], strides = [1, 1]} : vector<2x128xf32> to vector<2x32xf32>
    %cst_37 = arith.constant 5.000000e-01 : f32
    %90 = vector.broadcast %cst_37 : f32 to vector<2x32xf32>
    %91 = arith.mulf %90, %89 : vector<2x32xf32>
    %92 = math.tanh %91 : vector<2x32xf32>
    %cst_38 = arith.constant 5.000000e-01 : f32
    %93 = vector.broadcast %cst_38 : f32 to vector<2x32xf32>
    %94 = arith.mulf %93, %92 : vector<2x32xf32>
    %cst_39 = arith.constant 5.000000e-01 : f32
    %95 = vector.broadcast %cst_39 : f32 to vector<2x32xf32>
    %96 = arith.addf %94, %95 : vector<2x32xf32>
    %97 = vector.extract_strided_slice %80 {offsets = [0, 64], sizes = [2, 32], strides = [1, 1]} : vector<2x128xf32> to vector<2x32xf32>
    %98 = math.tanh %97 : vector<2x32xf32>
    %99 = vector.extract_strided_slice %80 {offsets = [0, 96], sizes = [2, 32], strides = [1, 1]} : vector<2x128xf32> to vector<2x32xf32>
    %cst_40 = arith.constant 5.000000e-01 : f32
    %100 = vector.broadcast %cst_40 : f32 to vector<2x32xf32>
    %101 = arith.mulf %100, %99 : vector<2x32xf32>
    %102 = math.tanh %101 : vector<2x32xf32>
    %cst_41 = arith.constant 5.000000e-01 : f32
    %103 = vector.broadcast %cst_41 : f32 to vector<2x32xf32>
    %104 = arith.mulf %103, %102 : vector<2x32xf32>
    %cst_42 = arith.constant 5.000000e-01 : f32
    %105 = vector.broadcast %cst_42 : f32 to vector<2x32xf32>
    %106 = arith.addf %104, %105 : vector<2x32xf32>
    %107 = arith.mulf %96, %39 : vector<2x32xf32>
    %108 = arith.mulf %88, %98 : vector<2x32xf32>
    %109 = arith.addf %107, %108 : vector<2x32xf32>
    %110 = math.tanh %109 : vector<2x32xf32>
    %111 = arith.mulf %106, %110 : vector<2x32xf32>
    %cst_43 = arith.constant dense<0.000000e+00> : vector<2x128xf32>
    %112 = tpu.matmul %111, %1, %cst_43 {dimension_numbers = #tpu.dot_dimension_numbers<[1], [0], [0], [1], [0, 0, 1, 1], [], []>} : vector<2x32xf32>, vector<32x128xf32>, vector<2x128xf32> -> vector<2x128xf32>
    %cst_44 = arith.constant dense<0.000000e+00> : vector<2x128xf32>
    %113 = tpu.matmul %76, %2, %cst_44 {dimension_numbers = #tpu.dot_dimension_numbers<[1], [0], [0], [1], [0, 0, 1, 1], [], []>} : vector<2x32xf32>, vector<32x128xf32>, vector<2x128xf32> -> vector<2x128xf32>
    %114 = arith.addf %112, %113 : vector<2x128xf32>
    %115 = arith.addf %114, %5 : vector<2x128xf32>
    %116 = vector.extract_strided_slice %115 {offsets = [0, 0], sizes = [2, 32], strides = [1, 1]} : vector<2x128xf32> to vector<2x32xf32>
    %cst_45 = arith.constant 5.000000e-01 : f32
    %117 = vector.broadcast %cst_45 : f32 to vector<2x32xf32>
    %118 = arith.mulf %117, %116 : vector<2x32xf32>
    %119 = math.tanh %118 : vector<2x32xf32>
    %cst_46 = arith.constant 5.000000e-01 : f32
    %120 = vector.broadcast %cst_46 : f32 to vector<2x32xf32>
    %121 = arith.mulf %120, %119 : vector<2x32xf32>
    %cst_47 = arith.constant 5.000000e-01 : f32
    %122 = vector.broadcast %cst_47 : f32 to vector<2x32xf32>
    %123 = arith.addf %121, %122 : vector<2x32xf32>
    %124 = vector.extract_strided_slice %115 {offsets = [0, 32], sizes = [2, 32], strides = [1, 1]} : vector<2x128xf32> to vector<2x32xf32>
    %cst_48 = arith.constant 5.000000e-01 : f32
    %125 = vector.broadcast %cst_48 : f32 to vector<2x32xf32>
    %126 = arith.mulf %125, %124 : vector<2x32xf32>
    %127 = math.tanh %126 : vector<2x32xf32>
    %cst_49 = arith.constant 5.000000e-01 : f32
    %128 = vector.broadcast %cst_49 : f32 to vector<2x32xf32>
    %129 = arith.mulf %128, %127 : vector<2x32xf32>
    %cst_50 = arith.constant 5.000000e-01 : f32
    %130 = vector.broadcast %cst_50 : f32 to vector<2x32xf32>
    %131 = arith.addf %129, %130 : vector<2x32xf32>
    %132 = vector.extract_strided_slice %115 {offsets = [0, 64], sizes = [2, 32], strides = [1, 1]} : vector<2x128xf32> to vector<2x32xf32>
    %133 = math.tanh %132 : vector<2x32xf32>
    %134 = vector.extract_strided_slice %115 {offsets = [0, 96], sizes = [2, 32], strides = [1, 1]} : vector<2x128xf32> to vector<2x32xf32>
    %cst_51 = arith.constant 5.000000e-01 : f32
    %135 = vector.broadcast %cst_51 : f32 to vector<2x32xf32>
    %136 = arith.mulf %135, %134 : vector<2x32xf32>
    %137 = math.tanh %136 : vector<2x32xf32>
    %cst_52 = arith.constant 5.000000e-01 : f32
    %138 = vector.broadcast %cst_52 : f32 to vector<2x32xf32>
    %139 = arith.mulf %138, %137 : vector<2x32xf32>
    %cst_53 = arith.constant 5.000000e-01 : f32
    %140 = vector.broadcast %cst_53 : f32 to vector<2x32xf32>
    %141 = arith.addf %139, %140 : vector<2x32xf32>
    %142 = arith.mulf %131, %74 : vector<2x32xf32>
    %143 = arith.mulf %123, %133 : vector<2x32xf32>
    %144 = arith.addf %142, %143 : vector<2x32xf32>
    %145 = math.tanh %144 : vector<2x32xf32>
    %146 = arith.mulf %141, %145 : vector<2x32xf32>
    %c2 = arith.constant 2 : index
    %c0_54 = arith.constant 0 : index
    %c0_55 = arith.constant 0 : index
    %147 = vector.load %arg0[%c2, %c0_54, %c0_55] : memref<8x2x128xf32, #tpu.memory_space<vmem>>, vector<1x2x128xf32>
    %148 = vector.shape_cast %147 : vector<1x2x128xf32> to vector<2x128xf32>
    %cst_56 = arith.constant dense<0.000000e+00> : vector<2x128xf32>
    %149 = tpu.matmul %111, %0, %cst_56 {dimension_numbers = #tpu.dot_dimension_numbers<[1], [0], [0], [1], [0, 0, 1, 1], [], []>} : vector<2x32xf32>, vector<32x128xf32>, vector<2x128xf32> -> vector<2x128xf32>
    %150 = arith.addf %148, %149 : vector<2x128xf32>
    %151 = vector.extract_strided_slice %150 {offsets = [0, 0], sizes = [2, 32], strides = [1, 1]} : vector<2x128xf32> to vector<2x32xf32>
    %cst_57 = arith.constant 5.000000e-01 : f32
    %152 = vector.broadcast %cst_57 : f32 to vector<2x32xf32>
    %153 = arith.mulf %152, %151 : vector<2x32xf32>
    %154 = math.tanh %153 : vector<2x32xf32>
    %cst_58 = arith.constant 5.000000e-01 : f32
    %155 = vector.broadcast %cst_58 : f32 to vector<2x32xf32>
    %156 = arith.mulf %155, %154 : vector<2x32xf32>
    %cst_59 = arith.constant 5.000000e-01 : f32
    %157 = vector.broadcast %cst_59 : f32 to vector<2x32xf32>
    %158 = arith.addf %156, %157 : vector<2x32xf32>
    %159 = vector.extract_strided_slice %150 {offsets = [0, 32], sizes = [2, 32], strides = [1, 1]} : vector<2x128xf32> to vector<2x32xf32>
    %cst_60 = arith.constant 5.000000e-01 : f32
    %160 = vector.broadcast %cst_60 : f32 to vector<2x32xf32>
    %161 = arith.mulf %160, %159 : vector<2x32xf32>
    %162 = math.tanh %161 : vector<2x32xf32>
    %cst_61 = arith.constant 5.000000e-01 : f32
    %163 = vector.broadcast %cst_61 : f32 to vector<2x32xf32>
    %164 = arith.mulf %163, %162 : vector<2x32xf32>
    %cst_62 = arith.constant 5.000000e-01 : f32
    %165 = vector.broadcast %cst_62 : f32 to vector<2x32xf32>
    %166 = arith.addf %164, %165 : vector<2x32xf32>
    %167 = vector.extract_strided_slice %150 {offsets = [0, 64], sizes = [2, 32], strides = [1, 1]} : vector<2x128xf32> to vector<2x32xf32>
    %168 = math.tanh %167 : vector<2x32xf32>
    %169 = vector.extract_strided_slice %150 {offsets = [0, 96], sizes = [2, 32], strides = [1, 1]} : vector<2x128xf32> to vector<2x32xf32>
    %cst_63 = arith.constant 5.000000e-01 : f32
    %170 = vector.broadcast %cst_63 : f32 to vector<2x32xf32>
    %171 = arith.mulf %170, %169 : vector<2x32xf32>
    %172 = math.tanh %171 : vector<2x32xf32>
    %cst_64 = arith.constant 5.000000e-01 : f32
    %173 = vector.broadcast %cst_64 : f32 to vector<2x32xf32>
    %174 = arith.mulf %173, %172 : vector<2x32xf32>
    %cst_65 = arith.constant 5.000000e-01 : f32
    %175 = vector.broadcast %cst_65 : f32 to vector<2x32xf32>
    %176 = arith.addf %174, %175 : vector<2x32xf32>
    %177 = arith.mulf %166, %109 : vector<2x32xf32>
    %178 = arith.mulf %158, %168 : vector<2x32xf32>
    %179 = arith.addf %177, %178 : vector<2x32xf32>
    %180 = math.tanh %179 : vector<2x32xf32>
    %181 = arith.mulf %176, %180 : vector<2x32xf32>
    %cst_66 = arith.constant dense<0.000000e+00> : vector<2x128xf32>
    %182 = tpu.matmul %181, %1, %cst_66 {dimension_numbers = #tpu.dot_dimension_numbers<[1], [0], [0], [1], [0, 0, 1, 1], [], []>} : vector<2x32xf32>, vector<32x128xf32>, vector<2x128xf32> -> vector<2x128xf32>
    %cst_67 = arith.constant dense<0.000000e+00> : vector<2x128xf32>
    %183 = tpu.matmul %146, %2, %cst_67 {dimension_numbers = #tpu.dot_dimension_numbers<[1], [0], [0], [1], [0, 0, 1, 1], [], []>} : vector<2x32xf32>, vector<32x128xf32>, vector<2x128xf32> -> vector<2x128xf32>
    %184 = arith.addf %182, %183 : vector<2x128xf32>
    %185 = arith.addf %184, %5 : vector<2x128xf32>
    %186 = vector.extract_strided_slice %185 {offsets = [0, 0], sizes = [2, 32], strides = [1, 1]} : vector<2x128xf32> to vector<2x32xf32>
    %cst_68 = arith.constant 5.000000e-01 : f32
    %187 = vector.broadcast %cst_68 : f32 to vector<2x32xf32>
    %188 = arith.mulf %187, %186 : vector<2x32xf32>
    %189 = math.tanh %188 : vector<2x32xf32>
    %cst_69 = arith.constant 5.000000e-01 : f32
    %190 = vector.broadcast %cst_69 : f32 to vector<2x32xf32>
    %191 = arith.mulf %190, %189 : vector<2x32xf32>
    %cst_70 = arith.constant 5.000000e-01 : f32
    %192 = vector.broadcast %cst_70 : f32 to vector<2x32xf32>
    %193 = arith.addf %191, %192 : vector<2x32xf32>
    %194 = vector.extract_strided_slice %185 {offsets = [0, 32], sizes = [2, 32], strides = [1, 1]} : vector<2x128xf32> to vector<2x32xf32>
    %cst_71 = arith.constant 5.000000e-01 : f32
    %195 = vector.broadcast %cst_71 : f32 to vector<2x32xf32>
    %196 = arith.mulf %195, %194 : vector<2x32xf32>
    %197 = math.tanh %196 : vector<2x32xf32>
    %cst_72 = arith.constant 5.000000e-01 : f32
    %198 = vector.broadcast %cst_72 : f32 to vector<2x32xf32>
    %199 = arith.mulf %198, %197 : vector<2x32xf32>
    %cst_73 = arith.constant 5.000000e-01 : f32
    %200 = vector.broadcast %cst_73 : f32 to vector<2x32xf32>
    %201 = arith.addf %199, %200 : vector<2x32xf32>
    %202 = vector.extract_strided_slice %185 {offsets = [0, 64], sizes = [2, 32], strides = [1, 1]} : vector<2x128xf32> to vector<2x32xf32>
    %203 = math.tanh %202 : vector<2x32xf32>
    %204 = vector.extract_strided_slice %185 {offsets = [0, 96], sizes = [2, 32], strides = [1, 1]} : vector<2x128xf32> to vector<2x32xf32>
    %cst_74 = arith.constant 5.000000e-01 : f32
    %205 = vector.broadcast %cst_74 : f32 to vector<2x32xf32>
    %206 = arith.mulf %205, %204 : vector<2x32xf32>
    %207 = math.tanh %206 : vector<2x32xf32>
    %cst_75 = arith.constant 5.000000e-01 : f32
    %208 = vector.broadcast %cst_75 : f32 to vector<2x32xf32>
    %209 = arith.mulf %208, %207 : vector<2x32xf32>
    %cst_76 = arith.constant 5.000000e-01 : f32
    %210 = vector.broadcast %cst_76 : f32 to vector<2x32xf32>
    %211 = arith.addf %209, %210 : vector<2x32xf32>
    %212 = arith.mulf %201, %144 : vector<2x32xf32>
    %213 = arith.mulf %193, %203 : vector<2x32xf32>
    %214 = arith.addf %212, %213 : vector<2x32xf32>
    %215 = math.tanh %214 : vector<2x32xf32>
    %216 = arith.mulf %211, %215 : vector<2x32xf32>
    %c3 = arith.constant 3 : index
    %c0_77 = arith.constant 0 : index
    %c0_78 = arith.constant 0 : index
    %217 = vector.load %arg0[%c3, %c0_77, %c0_78] : memref<8x2x128xf32, #tpu.memory_space<vmem>>, vector<1x2x128xf32>
    %218 = vector.shape_cast %217 : vector<1x2x128xf32> to vector<2x128xf32>
    %cst_79 = arith.constant dense<0.000000e+00> : vector<2x128xf32>
    %219 = tpu.matmul %181, %0, %cst_79 {dimension_numbers = #tpu.dot_dimension_numbers<[1], [0], [0], [1], [0, 0, 1, 1], [], []>} : vector<2x32xf32>, vector<32x128xf32>, vector<2x128xf32> -> vector<2x128xf32>
    %220 = arith.addf %218, %219 : vector<2x128xf32>
    %221 = vector.extract_strided_slice %220 {offsets = [0, 0], sizes = [2, 32], strides = [1, 1]} : vector<2x128xf32> to vector<2x32xf32>
    %cst_80 = arith.constant 5.000000e-01 : f32
    %222 = vector.broadcast %cst_80 : f32 to vector<2x32xf32>
    %223 = arith.mulf %222, %221 : vector<2x32xf32>
    %224 = math.tanh %223 : vector<2x32xf32>
    %cst_81 = arith.constant 5.000000e-01 : f32
    %225 = vector.broadcast %cst_81 : f32 to vector<2x32xf32>
    %226 = arith.mulf %225, %224 : vector<2x32xf32>
    %cst_82 = arith.constant 5.000000e-01 : f32
    %227 = vector.broadcast %cst_82 : f32 to vector<2x32xf32>
    %228 = arith.addf %226, %227 : vector<2x32xf32>
    %229 = vector.extract_strided_slice %220 {offsets = [0, 32], sizes = [2, 32], strides = [1, 1]} : vector<2x128xf32> to vector<2x32xf32>
    %cst_83 = arith.constant 5.000000e-01 : f32
    %230 = vector.broadcast %cst_83 : f32 to vector<2x32xf32>
    %231 = arith.mulf %230, %229 : vector<2x32xf32>
    %232 = math.tanh %231 : vector<2x32xf32>
    %cst_84 = arith.constant 5.000000e-01 : f32
    %233 = vector.broadcast %cst_84 : f32 to vector<2x32xf32>
    %234 = arith.mulf %233, %232 : vector<2x32xf32>
    %cst_85 = arith.constant 5.000000e-01 : f32
    %235 = vector.broadcast %cst_85 : f32 to vector<2x32xf32>
    %236 = arith.addf %234, %235 : vector<2x32xf32>
    %237 = vector.extract_strided_slice %220 {offsets = [0, 64], sizes = [2, 32], strides = [1, 1]} : vector<2x128xf32> to vector<2x32xf32>
    %238 = math.tanh %237 : vector<2x32xf32>
    %239 = vector.extract_strided_slice %220 {offsets = [0, 96], sizes = [2, 32], strides = [1, 1]} : vector<2x128xf32> to vector<2x32xf32>
    %cst_86 = arith.constant 5.000000e-01 : f32
    %240 = vector.broadcast %cst_86 : f32 to vector<2x32xf32>
    %241 = arith.mulf %240, %239 : vector<2x32xf32>
    %242 = math.tanh %241 : vector<2x32xf32>
    %cst_87 = arith.constant 5.000000e-01 : f32
    %243 = vector.broadcast %cst_87 : f32 to vector<2x32xf32>
    %244 = arith.mulf %243, %242 : vector<2x32xf32>
    %cst_88 = arith.constant 5.000000e-01 : f32
    %245 = vector.broadcast %cst_88 : f32 to vector<2x32xf32>
    %246 = arith.addf %244, %245 : vector<2x32xf32>
    %247 = arith.mulf %236, %179 : vector<2x32xf32>
    %248 = arith.mulf %228, %238 : vector<2x32xf32>
    %249 = arith.addf %247, %248 : vector<2x32xf32>
    %250 = math.tanh %249 : vector<2x32xf32>
    %251 = arith.mulf %246, %250 : vector<2x32xf32>
    %cst_89 = arith.constant dense<0.000000e+00> : vector<2x128xf32>
    %252 = tpu.matmul %251, %1, %cst_89 {dimension_numbers = #tpu.dot_dimension_numbers<[1], [0], [0], [1], [0, 0, 1, 1], [], []>} : vector<2x32xf32>, vector<32x128xf32>, vector<2x128xf32> -> vector<2x128xf32>
    %cst_90 = arith.constant dense<0.000000e+00> : vector<2x128xf32>
    %253 = tpu.matmul %216, %2, %cst_90 {dimension_numbers = #tpu.dot_dimension_numbers<[1], [0], [0], [1], [0, 0, 1, 1], [], []>} : vector<2x32xf32>, vector<32x128xf32>, vector<2x128xf32> -> vector<2x128xf32>
    %254 = arith.addf %252, %253 : vector<2x128xf32>
    %255 = arith.addf %254, %5 : vector<2x128xf32>
    %256 = vector.extract_strided_slice %255 {offsets = [0, 0], sizes = [2, 32], strides = [1, 1]} : vector<2x128xf32> to vector<2x32xf32>
    %cst_91 = arith.constant 5.000000e-01 : f32
    %257 = vector.broadcast %cst_91 : f32 to vector<2x32xf32>
    %258 = arith.mulf %257, %256 : vector<2x32xf32>
    %259 = math.tanh %258 : vector<2x32xf32>
    %cst_92 = arith.constant 5.000000e-01 : f32
    %260 = vector.broadcast %cst_92 : f32 to vector<2x32xf32>
    %261 = arith.mulf %260, %259 : vector<2x32xf32>
    %cst_93 = arith.constant 5.000000e-01 : f32
    %262 = vector.broadcast %cst_93 : f32 to vector<2x32xf32>
    %263 = arith.addf %261, %262 : vector<2x32xf32>
    %264 = vector.extract_strided_slice %255 {offsets = [0, 32], sizes = [2, 32], strides = [1, 1]} : vector<2x128xf32> to vector<2x32xf32>
    %cst_94 = arith.constant 5.000000e-01 : f32
    %265 = vector.broadcast %cst_94 : f32 to vector<2x32xf32>
    %266 = arith.mulf %265, %264 : vector<2x32xf32>
    %267 = math.tanh %266 : vector<2x32xf32>
    %cst_95 = arith.constant 5.000000e-01 : f32
    %268 = vector.broadcast %cst_95 : f32 to vector<2x32xf32>
    %269 = arith.mulf %268, %267 : vector<2x32xf32>
    %cst_96 = arith.constant 5.000000e-01 : f32
    %270 = vector.broadcast %cst_96 : f32 to vector<2x32xf32>
    %271 = arith.addf %269, %270 : vector<2x32xf32>
    %272 = vector.extract_strided_slice %255 {offsets = [0, 64], sizes = [2, 32], strides = [1, 1]} : vector<2x128xf32> to vector<2x32xf32>
    %273 = math.tanh %272 : vector<2x32xf32>
    %274 = vector.extract_strided_slice %255 {offsets = [0, 96], sizes = [2, 32], strides = [1, 1]} : vector<2x128xf32> to vector<2x32xf32>
    %cst_97 = arith.constant 5.000000e-01 : f32
    %275 = vector.broadcast %cst_97 : f32 to vector<2x32xf32>
    %276 = arith.mulf %275, %274 : vector<2x32xf32>
    %277 = math.tanh %276 : vector<2x32xf32>
    %cst_98 = arith.constant 5.000000e-01 : f32
    %278 = vector.broadcast %cst_98 : f32 to vector<2x32xf32>
    %279 = arith.mulf %278, %277 : vector<2x32xf32>
    %cst_99 = arith.constant 5.000000e-01 : f32
    %280 = vector.broadcast %cst_99 : f32 to vector<2x32xf32>
    %281 = arith.addf %279, %280 : vector<2x32xf32>
    %282 = arith.mulf %271, %214 : vector<2x32xf32>
    %283 = arith.mulf %263, %273 : vector<2x32xf32>
    %284 = arith.addf %282, %283 : vector<2x32xf32>
    %285 = math.tanh %284 : vector<2x32xf32>
    %286 = arith.mulf %281, %285 : vector<2x32xf32>
    %c4 = arith.constant 4 : index
    %c0_100 = arith.constant 0 : index
    %c0_101 = arith.constant 0 : index
    %287 = vector.load %arg0[%c4, %c0_100, %c0_101] : memref<8x2x128xf32, #tpu.memory_space<vmem>>, vector<1x2x128xf32>
    %288 = vector.shape_cast %287 : vector<1x2x128xf32> to vector<2x128xf32>
    %cst_102 = arith.constant dense<0.000000e+00> : vector<2x128xf32>
    %289 = tpu.matmul %251, %0, %cst_102 {dimension_numbers = #tpu.dot_dimension_numbers<[1], [0], [0], [1], [0, 0, 1, 1], [], []>} : vector<2x32xf32>, vector<32x128xf32>, vector<2x128xf32> -> vector<2x128xf32>
    %290 = arith.addf %288, %289 : vector<2x128xf32>
    %291 = vector.extract_strided_slice %290 {offsets = [0, 0], sizes = [2, 32], strides = [1, 1]} : vector<2x128xf32> to vector<2x32xf32>
    %cst_103 = arith.constant 5.000000e-01 : f32
    %292 = vector.broadcast %cst_103 : f32 to vector<2x32xf32>
    %293 = arith.mulf %292, %291 : vector<2x32xf32>
    %294 = math.tanh %293 : vector<2x32xf32>
    %cst_104 = arith.constant 5.000000e-01 : f32
    %295 = vector.broadcast %cst_104 : f32 to vector<2x32xf32>
    %296 = arith.mulf %295, %294 : vector<2x32xf32>
    %cst_105 = arith.constant 5.000000e-01 : f32
    %297 = vector.broadcast %cst_105 : f32 to vector<2x32xf32>
    %298 = arith.addf %296, %297 : vector<2x32xf32>
    %299 = vector.extract_strided_slice %290 {offsets = [0, 32], sizes = [2, 32], strides = [1, 1]} : vector<2x128xf32> to vector<2x32xf32>
    %cst_106 = arith.constant 5.000000e-01 : f32
    %300 = vector.broadcast %cst_106 : f32 to vector<2x32xf32>
    %301 = arith.mulf %300, %299 : vector<2x32xf32>
    %302 = math.tanh %301 : vector<2x32xf32>
    %cst_107 = arith.constant 5.000000e-01 : f32
    %303 = vector.broadcast %cst_107 : f32 to vector<2x32xf32>
    %304 = arith.mulf %303, %302 : vector<2x32xf32>
    %cst_108 = arith.constant 5.000000e-01 : f32
    %305 = vector.broadcast %cst_108 : f32 to vector<2x32xf32>
    %306 = arith.addf %304, %305 : vector<2x32xf32>
    %307 = vector.extract_strided_slice %290 {offsets = [0, 64], sizes = [2, 32], strides = [1, 1]} : vector<2x128xf32> to vector<2x32xf32>
    %308 = math.tanh %307 : vector<2x32xf32>
    %309 = vector.extract_strided_slice %290 {offsets = [0, 96], sizes = [2, 32], strides = [1, 1]} : vector<2x128xf32> to vector<2x32xf32>
    %cst_109 = arith.constant 5.000000e-01 : f32
    %310 = vector.broadcast %cst_109 : f32 to vector<2x32xf32>
    %311 = arith.mulf %310, %309 : vector<2x32xf32>
    %312 = math.tanh %311 : vector<2x32xf32>
    %cst_110 = arith.constant 5.000000e-01 : f32
    %313 = vector.broadcast %cst_110 : f32 to vector<2x32xf32>
    %314 = arith.mulf %313, %312 : vector<2x32xf32>
    %cst_111 = arith.constant 5.000000e-01 : f32
    %315 = vector.broadcast %cst_111 : f32 to vector<2x32xf32>
    %316 = arith.addf %314, %315 : vector<2x32xf32>
    %317 = arith.mulf %306, %249 : vector<2x32xf32>
    %318 = arith.mulf %298, %308 : vector<2x32xf32>
    %319 = arith.addf %317, %318 : vector<2x32xf32>
    %320 = math.tanh %319 : vector<2x32xf32>
    %321 = arith.mulf %316, %320 : vector<2x32xf32>
    %cst_112 = arith.constant dense<0.000000e+00> : vector<2x128xf32>
    %322 = tpu.matmul %321, %1, %cst_112 {dimension_numbers = #tpu.dot_dimension_numbers<[1], [0], [0], [1], [0, 0, 1, 1], [], []>} : vector<2x32xf32>, vector<32x128xf32>, vector<2x128xf32> -> vector<2x128xf32>
    %cst_113 = arith.constant dense<0.000000e+00> : vector<2x128xf32>
    %323 = tpu.matmul %286, %2, %cst_113 {dimension_numbers = #tpu.dot_dimension_numbers<[1], [0], [0], [1], [0, 0, 1, 1], [], []>} : vector<2x32xf32>, vector<32x128xf32>, vector<2x128xf32> -> vector<2x128xf32>
    %324 = arith.addf %322, %323 : vector<2x128xf32>
    %325 = arith.addf %324, %5 : vector<2x128xf32>
    %326 = vector.extract_strided_slice %325 {offsets = [0, 0], sizes = [2, 32], strides = [1, 1]} : vector<2x128xf32> to vector<2x32xf32>
    %cst_114 = arith.constant 5.000000e-01 : f32
    %327 = vector.broadcast %cst_114 : f32 to vector<2x32xf32>
    %328 = arith.mulf %327, %326 : vector<2x32xf32>
    %329 = math.tanh %328 : vector<2x32xf32>
    %cst_115 = arith.constant 5.000000e-01 : f32
    %330 = vector.broadcast %cst_115 : f32 to vector<2x32xf32>
    %331 = arith.mulf %330, %329 : vector<2x32xf32>
    %cst_116 = arith.constant 5.000000e-01 : f32
    %332 = vector.broadcast %cst_116 : f32 to vector<2x32xf32>
    %333 = arith.addf %331, %332 : vector<2x32xf32>
    %334 = vector.extract_strided_slice %325 {offsets = [0, 32], sizes = [2, 32], strides = [1, 1]} : vector<2x128xf32> to vector<2x32xf32>
    %cst_117 = arith.constant 5.000000e-01 : f32
    %335 = vector.broadcast %cst_117 : f32 to vector<2x32xf32>
    %336 = arith.mulf %335, %334 : vector<2x32xf32>
    %337 = math.tanh %336 : vector<2x32xf32>
    %cst_118 = arith.constant 5.000000e-01 : f32
    %338 = vector.broadcast %cst_118 : f32 to vector<2x32xf32>
    %339 = arith.mulf %338, %337 : vector<2x32xf32>
    %cst_119 = arith.constant 5.000000e-01 : f32
    %340 = vector.broadcast %cst_119 : f32 to vector<2x32xf32>
    %341 = arith.addf %339, %340 : vector<2x32xf32>
    %342 = vector.extract_strided_slice %325 {offsets = [0, 64], sizes = [2, 32], strides = [1, 1]} : vector<2x128xf32> to vector<2x32xf32>
    %343 = math.tanh %342 : vector<2x32xf32>
    %344 = vector.extract_strided_slice %325 {offsets = [0, 96], sizes = [2, 32], strides = [1, 1]} : vector<2x128xf32> to vector<2x32xf32>
    %cst_120 = arith.constant 5.000000e-01 : f32
    %345 = vector.broadcast %cst_120 : f32 to vector<2x32xf32>
    %346 = arith.mulf %345, %344 : vector<2x32xf32>
    %347 = math.tanh %346 : vector<2x32xf32>
    %cst_121 = arith.constant 5.000000e-01 : f32
    %348 = vector.broadcast %cst_121 : f32 to vector<2x32xf32>
    %349 = arith.mulf %348, %347 : vector<2x32xf32>
    %cst_122 = arith.constant 5.000000e-01 : f32
    %350 = vector.broadcast %cst_122 : f32 to vector<2x32xf32>
    %351 = arith.addf %349, %350 : vector<2x32xf32>
    %352 = arith.mulf %341, %284 : vector<2x32xf32>
    %353 = arith.mulf %333, %343 : vector<2x32xf32>
    %354 = arith.addf %352, %353 : vector<2x32xf32>
    %355 = math.tanh %354 : vector<2x32xf32>
    %356 = arith.mulf %351, %355 : vector<2x32xf32>
    %c5 = arith.constant 5 : index
    %c0_123 = arith.constant 0 : index
    %c0_124 = arith.constant 0 : index
    %357 = vector.load %arg0[%c5, %c0_123, %c0_124] : memref<8x2x128xf32, #tpu.memory_space<vmem>>, vector<1x2x128xf32>
    %358 = vector.shape_cast %357 : vector<1x2x128xf32> to vector<2x128xf32>
    %cst_125 = arith.constant dense<0.000000e+00> : vector<2x128xf32>
    %359 = tpu.matmul %321, %0, %cst_125 {dimension_numbers = #tpu.dot_dimension_numbers<[1], [0], [0], [1], [0, 0, 1, 1], [], []>} : vector<2x32xf32>, vector<32x128xf32>, vector<2x128xf32> -> vector<2x128xf32>
    %360 = arith.addf %358, %359 : vector<2x128xf32>
    %361 = vector.extract_strided_slice %360 {offsets = [0, 0], sizes = [2, 32], strides = [1, 1]} : vector<2x128xf32> to vector<2x32xf32>
    %cst_126 = arith.constant 5.000000e-01 : f32
    %362 = vector.broadcast %cst_126 : f32 to vector<2x32xf32>
    %363 = arith.mulf %362, %361 : vector<2x32xf32>
    %364 = math.tanh %363 : vector<2x32xf32>
    %cst_127 = arith.constant 5.000000e-01 : f32
    %365 = vector.broadcast %cst_127 : f32 to vector<2x32xf32>
    %366 = arith.mulf %365, %364 : vector<2x32xf32>
    %cst_128 = arith.constant 5.000000e-01 : f32
    %367 = vector.broadcast %cst_128 : f32 to vector<2x32xf32>
    %368 = arith.addf %366, %367 : vector<2x32xf32>
    %369 = vector.extract_strided_slice %360 {offsets = [0, 32], sizes = [2, 32], strides = [1, 1]} : vector<2x128xf32> to vector<2x32xf32>
    %cst_129 = arith.constant 5.000000e-01 : f32
    %370 = vector.broadcast %cst_129 : f32 to vector<2x32xf32>
    %371 = arith.mulf %370, %369 : vector<2x32xf32>
    %372 = math.tanh %371 : vector<2x32xf32>
    %cst_130 = arith.constant 5.000000e-01 : f32
    %373 = vector.broadcast %cst_130 : f32 to vector<2x32xf32>
    %374 = arith.mulf %373, %372 : vector<2x32xf32>
    %cst_131 = arith.constant 5.000000e-01 : f32
    %375 = vector.broadcast %cst_131 : f32 to vector<2x32xf32>
    %376 = arith.addf %374, %375 : vector<2x32xf32>
    %377 = vector.extract_strided_slice %360 {offsets = [0, 64], sizes = [2, 32], strides = [1, 1]} : vector<2x128xf32> to vector<2x32xf32>
    %378 = math.tanh %377 : vector<2x32xf32>
    %379 = vector.extract_strided_slice %360 {offsets = [0, 96], sizes = [2, 32], strides = [1, 1]} : vector<2x128xf32> to vector<2x32xf32>
    %cst_132 = arith.constant 5.000000e-01 : f32
    %380 = vector.broadcast %cst_132 : f32 to vector<2x32xf32>
    %381 = arith.mulf %380, %379 : vector<2x32xf32>
    %382 = math.tanh %381 : vector<2x32xf32>
    %cst_133 = arith.constant 5.000000e-01 : f32
    %383 = vector.broadcast %cst_133 : f32 to vector<2x32xf32>
    %384 = arith.mulf %383, %382 : vector<2x32xf32>
    %cst_134 = arith.constant 5.000000e-01 : f32
    %385 = vector.broadcast %cst_134 : f32 to vector<2x32xf32>
    %386 = arith.addf %384, %385 : vector<2x32xf32>
    %387 = arith.mulf %376, %319 : vector<2x32xf32>
    %388 = arith.mulf %368, %378 : vector<2x32xf32>
    %389 = arith.addf %387, %388 : vector<2x32xf32>
    %390 = math.tanh %389 : vector<2x32xf32>
    %391 = arith.mulf %386, %390 : vector<2x32xf32>
    %cst_135 = arith.constant dense<0.000000e+00> : vector<2x128xf32>
    %392 = tpu.matmul %391, %1, %cst_135 {dimension_numbers = #tpu.dot_dimension_numbers<[1], [0], [0], [1], [0, 0, 1, 1], [], []>} : vector<2x32xf32>, vector<32x128xf32>, vector<2x128xf32> -> vector<2x128xf32>
    %cst_136 = arith.constant dense<0.000000e+00> : vector<2x128xf32>
    %393 = tpu.matmul %356, %2, %cst_136 {dimension_numbers = #tpu.dot_dimension_numbers<[1], [0], [0], [1], [0, 0, 1, 1], [], []>} : vector<2x32xf32>, vector<32x128xf32>, vector<2x128xf32> -> vector<2x128xf32>
    %394 = arith.addf %392, %393 : vector<2x128xf32>
    %395 = arith.addf %394, %5 : vector<2x128xf32>
    %396 = vector.extract_strided_slice %395 {offsets = [0, 0], sizes = [2, 32], strides = [1, 1]} : vector<2x128xf32> to vector<2x32xf32>
    %cst_137 = arith.constant 5.000000e-01 : f32
    %397 = vector.broadcast %cst_137 : f32 to vector<2x32xf32>
    %398 = arith.mulf %397, %396 : vector<2x32xf32>
    %399 = math.tanh %398 : vector<2x32xf32>
    %cst_138 = arith.constant 5.000000e-01 : f32
    %400 = vector.broadcast %cst_138 : f32 to vector<2x32xf32>
    %401 = arith.mulf %400, %399 : vector<2x32xf32>
    %cst_139 = arith.constant 5.000000e-01 : f32
    %402 = vector.broadcast %cst_139 : f32 to vector<2x32xf32>
    %403 = arith.addf %401, %402 : vector<2x32xf32>
    %404 = vector.extract_strided_slice %395 {offsets = [0, 32], sizes = [2, 32], strides = [1, 1]} : vector<2x128xf32> to vector<2x32xf32>
    %cst_140 = arith.constant 5.000000e-01 : f32
    %405 = vector.broadcast %cst_140 : f32 to vector<2x32xf32>
    %406 = arith.mulf %405, %404 : vector<2x32xf32>
    %407 = math.tanh %406 : vector<2x32xf32>
    %cst_141 = arith.constant 5.000000e-01 : f32
    %408 = vector.broadcast %cst_141 : f32 to vector<2x32xf32>
    %409 = arith.mulf %408, %407 : vector<2x32xf32>
    %cst_142 = arith.constant 5.000000e-01 : f32
    %410 = vector.broadcast %cst_142 : f32 to vector<2x32xf32>
    %411 = arith.addf %409, %410 : vector<2x32xf32>
    %412 = vector.extract_strided_slice %395 {offsets = [0, 64], sizes = [2, 32], strides = [1, 1]} : vector<2x128xf32> to vector<2x32xf32>
    %413 = math.tanh %412 : vector<2x32xf32>
    %414 = vector.extract_strided_slice %395 {offsets = [0, 96], sizes = [2, 32], strides = [1, 1]} : vector<2x128xf32> to vector<2x32xf32>
    %cst_143 = arith.constant 5.000000e-01 : f32
    %415 = vector.broadcast %cst_143 : f32 to vector<2x32xf32>
    %416 = arith.mulf %415, %414 : vector<2x32xf32>
    %417 = math.tanh %416 : vector<2x32xf32>
    %cst_144 = arith.constant 5.000000e-01 : f32
    %418 = vector.broadcast %cst_144 : f32 to vector<2x32xf32>
    %419 = arith.mulf %418, %417 : vector<2x32xf32>
    %cst_145 = arith.constant 5.000000e-01 : f32
    %420 = vector.broadcast %cst_145 : f32 to vector<2x32xf32>
    %421 = arith.addf %419, %420 : vector<2x32xf32>
    %422 = arith.mulf %411, %354 : vector<2x32xf32>
    %423 = arith.mulf %403, %413 : vector<2x32xf32>
    %424 = arith.addf %422, %423 : vector<2x32xf32>
    %425 = math.tanh %424 : vector<2x32xf32>
    %426 = arith.mulf %421, %425 : vector<2x32xf32>
    %c6 = arith.constant 6 : index
    %c0_146 = arith.constant 0 : index
    %c0_147 = arith.constant 0 : index
    %427 = vector.load %arg0[%c6, %c0_146, %c0_147] : memref<8x2x128xf32, #tpu.memory_space<vmem>>, vector<1x2x128xf32>
    %428 = vector.shape_cast %427 : vector<1x2x128xf32> to vector<2x128xf32>
    %cst_148 = arith.constant dense<0.000000e+00> : vector<2x128xf32>
    %429 = tpu.matmul %391, %0, %cst_148 {dimension_numbers = #tpu.dot_dimension_numbers<[1], [0], [0], [1], [0, 0, 1, 1], [], []>} : vector<2x32xf32>, vector<32x128xf32>, vector<2x128xf32> -> vector<2x128xf32>
    %430 = arith.addf %428, %429 : vector<2x128xf32>
    %431 = vector.extract_strided_slice %430 {offsets = [0, 0], sizes = [2, 32], strides = [1, 1]} : vector<2x128xf32> to vector<2x32xf32>
    %cst_149 = arith.constant 5.000000e-01 : f32
    %432 = vector.broadcast %cst_149 : f32 to vector<2x32xf32>
    %433 = arith.mulf %432, %431 : vector<2x32xf32>
    %434 = math.tanh %433 : vector<2x32xf32>
    %cst_150 = arith.constant 5.000000e-01 : f32
    %435 = vector.broadcast %cst_150 : f32 to vector<2x32xf32>
    %436 = arith.mulf %435, %434 : vector<2x32xf32>
    %cst_151 = arith.constant 5.000000e-01 : f32
    %437 = vector.broadcast %cst_151 : f32 to vector<2x32xf32>
    %438 = arith.addf %436, %437 : vector<2x32xf32>
    %439 = vector.extract_strided_slice %430 {offsets = [0, 32], sizes = [2, 32], strides = [1, 1]} : vector<2x128xf32> to vector<2x32xf32>
    %cst_152 = arith.constant 5.000000e-01 : f32
    %440 = vector.broadcast %cst_152 : f32 to vector<2x32xf32>
    %441 = arith.mulf %440, %439 : vector<2x32xf32>
    %442 = math.tanh %441 : vector<2x32xf32>
    %cst_153 = arith.constant 5.000000e-01 : f32
    %443 = vector.broadcast %cst_153 : f32 to vector<2x32xf32>
    %444 = arith.mulf %443, %442 : vector<2x32xf32>
    %cst_154 = arith.constant 5.000000e-01 : f32
    %445 = vector.broadcast %cst_154 : f32 to vector<2x32xf32>
    %446 = arith.addf %444, %445 : vector<2x32xf32>
    %447 = vector.extract_strided_slice %430 {offsets = [0, 64], sizes = [2, 32], strides = [1, 1]} : vector<2x128xf32> to vector<2x32xf32>
    %448 = math.tanh %447 : vector<2x32xf32>
    %449 = vector.extract_strided_slice %430 {offsets = [0, 96], sizes = [2, 32], strides = [1, 1]} : vector<2x128xf32> to vector<2x32xf32>
    %cst_155 = arith.constant 5.000000e-01 : f32
    %450 = vector.broadcast %cst_155 : f32 to vector<2x32xf32>
    %451 = arith.mulf %450, %449 : vector<2x32xf32>
    %452 = math.tanh %451 : vector<2x32xf32>
    %cst_156 = arith.constant 5.000000e-01 : f32
    %453 = vector.broadcast %cst_156 : f32 to vector<2x32xf32>
    %454 = arith.mulf %453, %452 : vector<2x32xf32>
    %cst_157 = arith.constant 5.000000e-01 : f32
    %455 = vector.broadcast %cst_157 : f32 to vector<2x32xf32>
    %456 = arith.addf %454, %455 : vector<2x32xf32>
    %457 = arith.mulf %446, %389 : vector<2x32xf32>
    %458 = arith.mulf %438, %448 : vector<2x32xf32>
    %459 = arith.addf %457, %458 : vector<2x32xf32>
    %460 = math.tanh %459 : vector<2x32xf32>
    %461 = arith.mulf %456, %460 : vector<2x32xf32>
    %cst_158 = arith.constant dense<0.000000e+00> : vector<2x128xf32>
    %462 = tpu.matmul %461, %1, %cst_158 {dimension_numbers = #tpu.dot_dimension_numbers<[1], [0], [0], [1], [0, 0, 1, 1], [], []>} : vector<2x32xf32>, vector<32x128xf32>, vector<2x128xf32> -> vector<2x128xf32>
    %cst_159 = arith.constant dense<0.000000e+00> : vector<2x128xf32>
    %463 = tpu.matmul %426, %2, %cst_159 {dimension_numbers = #tpu.dot_dimension_numbers<[1], [0], [0], [1], [0, 0, 1, 1], [], []>} : vector<2x32xf32>, vector<32x128xf32>, vector<2x128xf32> -> vector<2x128xf32>
    %464 = arith.addf %462, %463 : vector<2x128xf32>
    %465 = arith.addf %464, %5 : vector<2x128xf32>
    %466 = vector.extract_strided_slice %465 {offsets = [0, 0], sizes = [2, 32], strides = [1, 1]} : vector<2x128xf32> to vector<2x32xf32>
    %cst_160 = arith.constant 5.000000e-01 : f32
    %467 = vector.broadcast %cst_160 : f32 to vector<2x32xf32>
    %468 = arith.mulf %467, %466 : vector<2x32xf32>
    %469 = math.tanh %468 : vector<2x32xf32>
    %cst_161 = arith.constant 5.000000e-01 : f32
    %470 = vector.broadcast %cst_161 : f32 to vector<2x32xf32>
    %471 = arith.mulf %470, %469 : vector<2x32xf32>
    %cst_162 = arith.constant 5.000000e-01 : f32
    %472 = vector.broadcast %cst_162 : f32 to vector<2x32xf32>
    %473 = arith.addf %471, %472 : vector<2x32xf32>
    %474 = vector.extract_strided_slice %465 {offsets = [0, 32], sizes = [2, 32], strides = [1, 1]} : vector<2x128xf32> to vector<2x32xf32>
    %cst_163 = arith.constant 5.000000e-01 : f32
    %475 = vector.broadcast %cst_163 : f32 to vector<2x32xf32>
    %476 = arith.mulf %475, %474 : vector<2x32xf32>
    %477 = math.tanh %476 : vector<2x32xf32>
    %cst_164 = arith.constant 5.000000e-01 : f32
    %478 = vector.broadcast %cst_164 : f32 to vector<2x32xf32>
    %479 = arith.mulf %478, %477 : vector<2x32xf32>
    %cst_165 = arith.constant 5.000000e-01 : f32
    %480 = vector.broadcast %cst_165 : f32 to vector<2x32xf32>
    %481 = arith.addf %479, %480 : vector<2x32xf32>
    %482 = vector.extract_strided_slice %465 {offsets = [0, 64], sizes = [2, 32], strides = [1, 1]} : vector<2x128xf32> to vector<2x32xf32>
    %483 = math.tanh %482 : vector<2x32xf32>
    %484 = vector.extract_strided_slice %465 {offsets = [0, 96], sizes = [2, 32], strides = [1, 1]} : vector<2x128xf32> to vector<2x32xf32>
    %cst_166 = arith.constant 5.000000e-01 : f32
    %485 = vector.broadcast %cst_166 : f32 to vector<2x32xf32>
    %486 = arith.mulf %485, %484 : vector<2x32xf32>
    %487 = math.tanh %486 : vector<2x32xf32>
    %cst_167 = arith.constant 5.000000e-01 : f32
    %488 = vector.broadcast %cst_167 : f32 to vector<2x32xf32>
    %489 = arith.mulf %488, %487 : vector<2x32xf32>
    %cst_168 = arith.constant 5.000000e-01 : f32
    %490 = vector.broadcast %cst_168 : f32 to vector<2x32xf32>
    %491 = arith.addf %489, %490 : vector<2x32xf32>
    %492 = arith.mulf %481, %424 : vector<2x32xf32>
    %493 = arith.mulf %473, %483 : vector<2x32xf32>
    %494 = arith.addf %492, %493 : vector<2x32xf32>
    %495 = math.tanh %494 : vector<2x32xf32>
    %496 = arith.mulf %491, %495 : vector<2x32xf32>
    %c7 = arith.constant 7 : index
    %c0_169 = arith.constant 0 : index
    %c0_170 = arith.constant 0 : index
    %497 = vector.load %arg0[%c7, %c0_169, %c0_170] : memref<8x2x128xf32, #tpu.memory_space<vmem>>, vector<1x2x128xf32>
    %498 = vector.shape_cast %497 : vector<1x2x128xf32> to vector<2x128xf32>
    %cst_171 = arith.constant dense<0.000000e+00> : vector<2x128xf32>
    %499 = tpu.matmul %461, %0, %cst_171 {dimension_numbers = #tpu.dot_dimension_numbers<[1], [0], [0], [1], [0, 0, 1, 1], [], []>} : vector<2x32xf32>, vector<32x128xf32>, vector<2x128xf32> -> vector<2x128xf32>
    %500 = arith.addf %498, %499 : vector<2x128xf32>
    %501 = vector.extract_strided_slice %500 {offsets = [0, 0], sizes = [2, 32], strides = [1, 1]} : vector<2x128xf32> to vector<2x32xf32>
    %cst_172 = arith.constant 5.000000e-01 : f32
    %502 = vector.broadcast %cst_172 : f32 to vector<2x32xf32>
    %503 = arith.mulf %502, %501 : vector<2x32xf32>
    %504 = math.tanh %503 : vector<2x32xf32>
    %cst_173 = arith.constant 5.000000e-01 : f32
    %505 = vector.broadcast %cst_173 : f32 to vector<2x32xf32>
    %506 = arith.mulf %505, %504 : vector<2x32xf32>
    %cst_174 = arith.constant 5.000000e-01 : f32
    %507 = vector.broadcast %cst_174 : f32 to vector<2x32xf32>
    %508 = arith.addf %506, %507 : vector<2x32xf32>
    %509 = vector.extract_strided_slice %500 {offsets = [0, 32], sizes = [2, 32], strides = [1, 1]} : vector<2x128xf32> to vector<2x32xf32>
    %cst_175 = arith.constant 5.000000e-01 : f32
    %510 = vector.broadcast %cst_175 : f32 to vector<2x32xf32>
    %511 = arith.mulf %510, %509 : vector<2x32xf32>
    %512 = math.tanh %511 : vector<2x32xf32>
    %cst_176 = arith.constant 5.000000e-01 : f32
    %513 = vector.broadcast %cst_176 : f32 to vector<2x32xf32>
    %514 = arith.mulf %513, %512 : vector<2x32xf32>
    %cst_177 = arith.constant 5.000000e-01 : f32
    %515 = vector.broadcast %cst_177 : f32 to vector<2x32xf32>
    %516 = arith.addf %514, %515 : vector<2x32xf32>
    %517 = vector.extract_strided_slice %500 {offsets = [0, 64], sizes = [2, 32], strides = [1, 1]} : vector<2x128xf32> to vector<2x32xf32>
    %518 = math.tanh %517 : vector<2x32xf32>
    %519 = vector.extract_strided_slice %500 {offsets = [0, 96], sizes = [2, 32], strides = [1, 1]} : vector<2x128xf32> to vector<2x32xf32>
    %cst_178 = arith.constant 5.000000e-01 : f32
    %520 = vector.broadcast %cst_178 : f32 to vector<2x32xf32>
    %521 = arith.mulf %520, %519 : vector<2x32xf32>
    %522 = math.tanh %521 : vector<2x32xf32>
    %cst_179 = arith.constant 5.000000e-01 : f32
    %523 = vector.broadcast %cst_179 : f32 to vector<2x32xf32>
    %524 = arith.mulf %523, %522 : vector<2x32xf32>
    %cst_180 = arith.constant 5.000000e-01 : f32
    %525 = vector.broadcast %cst_180 : f32 to vector<2x32xf32>
    %526 = arith.addf %524, %525 : vector<2x32xf32>
    %527 = arith.mulf %516, %459 : vector<2x32xf32>
    %528 = arith.mulf %508, %518 : vector<2x32xf32>
    %529 = arith.addf %527, %528 : vector<2x32xf32>
    %530 = math.tanh %529 : vector<2x32xf32>
    %531 = arith.mulf %526, %530 : vector<2x32xf32>
    %cst_181 = arith.constant dense<0.000000e+00> : vector<2x128xf32>
    %532 = tpu.matmul %531, %1, %cst_181 {dimension_numbers = #tpu.dot_dimension_numbers<[1], [0], [0], [1], [0, 0, 1, 1], [], []>} : vector<2x32xf32>, vector<32x128xf32>, vector<2x128xf32> -> vector<2x128xf32>
    %cst_182 = arith.constant dense<0.000000e+00> : vector<2x128xf32>
    %533 = tpu.matmul %496, %2, %cst_182 {dimension_numbers = #tpu.dot_dimension_numbers<[1], [0], [0], [1], [0, 0, 1, 1], [], []>} : vector<2x32xf32>, vector<32x128xf32>, vector<2x128xf32> -> vector<2x128xf32>
    %534 = arith.addf %532, %533 : vector<2x128xf32>
    %535 = arith.addf %534, %5 : vector<2x128xf32>
    %536 = vector.extract_strided_slice %535 {offsets = [0, 0], sizes = [2, 32], strides = [1, 1]} : vector<2x128xf32> to vector<2x32xf32>
    %cst_183 = arith.constant 5.000000e-01 : f32
    %537 = vector.broadcast %cst_183 : f32 to vector<2x32xf32>
    %538 = arith.mulf %537, %536 : vector<2x32xf32>
    %539 = math.tanh %538 : vector<2x32xf32>
    %cst_184 = arith.constant 5.000000e-01 : f32
    %540 = vector.broadcast %cst_184 : f32 to vector<2x32xf32>
    %541 = arith.mulf %540, %539 : vector<2x32xf32>
    %cst_185 = arith.constant 5.000000e-01 : f32
    %542 = vector.broadcast %cst_185 : f32 to vector<2x32xf32>
    %543 = arith.addf %541, %542 : vector<2x32xf32>
    %544 = vector.extract_strided_slice %535 {offsets = [0, 32], sizes = [2, 32], strides = [1, 1]} : vector<2x128xf32> to vector<2x32xf32>
    %cst_186 = arith.constant 5.000000e-01 : f32
    %545 = vector.broadcast %cst_186 : f32 to vector<2x32xf32>
    %546 = arith.mulf %545, %544 : vector<2x32xf32>
    %547 = math.tanh %546 : vector<2x32xf32>
    %cst_187 = arith.constant 5.000000e-01 : f32
    %548 = vector.broadcast %cst_187 : f32 to vector<2x32xf32>
    %549 = arith.mulf %548, %547 : vector<2x32xf32>
    %cst_188 = arith.constant 5.000000e-01 : f32
    %550 = vector.broadcast %cst_188 : f32 to vector<2x32xf32>
    %551 = arith.addf %549, %550 : vector<2x32xf32>
    %552 = vector.extract_strided_slice %535 {offsets = [0, 64], sizes = [2, 32], strides = [1, 1]} : vector<2x128xf32> to vector<2x32xf32>
    %553 = math.tanh %552 : vector<2x32xf32>
    %554 = vector.extract_strided_slice %535 {offsets = [0, 96], sizes = [2, 32], strides = [1, 1]} : vector<2x128xf32> to vector<2x32xf32>
    %cst_189 = arith.constant 5.000000e-01 : f32
    %555 = vector.broadcast %cst_189 : f32 to vector<2x32xf32>
    %556 = arith.mulf %555, %554 : vector<2x32xf32>
    %557 = math.tanh %556 : vector<2x32xf32>
    %cst_190 = arith.constant 5.000000e-01 : f32
    %558 = vector.broadcast %cst_190 : f32 to vector<2x32xf32>
    %559 = arith.mulf %558, %557 : vector<2x32xf32>
    %cst_191 = arith.constant 5.000000e-01 : f32
    %560 = vector.broadcast %cst_191 : f32 to vector<2x32xf32>
    %561 = arith.addf %559, %560 : vector<2x32xf32>
    %562 = arith.mulf %551, %494 : vector<2x32xf32>
    %563 = arith.mulf %543, %553 : vector<2x32xf32>
    %564 = arith.addf %562, %563 : vector<2x32xf32>
    %565 = math.tanh %564 : vector<2x32xf32>
    %566 = arith.mulf %561, %565 : vector<2x32xf32>
    %c0_192 = arith.constant 0 : index
    %c0_193 = arith.constant 0 : index
    %567 = vector.load %arg5[%c0_192, %c0_193] : memref<32x1xf32, #tpu.memory_space<vmem>>, vector<32x1xf32>
    %cst_194 = arith.constant dense<0.000000e+00> : vector<2x1xf32>
    %568 = tpu.matmul %566, %567, %cst_194 {dimension_numbers = #tpu.dot_dimension_numbers<[1], [0], [0], [1], [0, 0, 1, 1], [], []>} : vector<2x32xf32>, vector<32x1xf32>, vector<2x1xf32> -> vector<2x1xf32>
    %c0_195 = arith.constant 0 : index
    %c0_196 = arith.constant 0 : index
    %569 = vector.load %arg6[%c0_195, %c0_196] : memref<1x1xf32, #tpu.memory_space<vmem>>, vector<1x1xf32>
    %570 = vector.broadcast %569 : vector<1x1xf32> to vector<2x1xf32>
    %571 = arith.addf %568, %570 : vector<2x1xf32>
    %c0_197 = arith.constant 0 : index
    %c0_198 = arith.constant 0 : index
    %572 = vector.load %arg7[%c0_197, %c0_198] : memref<2x1xf32, #tpu.memory_space<vmem>>, vector<2x1xf32>
    tpu.vector_store %arg7[%c0_197, %c0_198], %571 {strides = array<i32>} : memref<2x1xf32, #tpu.memory_space<vmem>>, vector<2x1xf32>,
    return
  }
}

</mosaic_0001>

<llo_original>
// kernel: speech_lstm_forward.1
$region0: #{speech_lstm_forward.1}
  #allocation0 [shape = 'u32[]', space=smem, size = 0x4, offset = 0x4, fixed_abs, tag = 'smem constant byte address 0x4 - core index']
  #allocation1 [shape = 'u32[144,128]{1,0:T(1,128)}', space=vmem, size = 0x12000, scoped, tag = 'internal scratch']
  #allocation2 [shape = 'f32[1,1]{1,0:T(1,128)S(1)}', space=vmem, size = 0x200, scoped, tag = 'scoped memory for speech_lstm_forward.1']
  %s0 = inlined_call_operand.vmem [shape: f32[8,2,128], index: 0, kind: input, shape index: {}]
  %s1 = inlined_call_operand.vmem [shape: f32[32,128], index: 1, kind: input, shape index: {}]
  %s2 = inlined_call_operand.vmem [shape: f32[32,128], index: 2, kind: input, shape index: {}]
  %s3 = inlined_call_operand.vmem [shape: f32[32,128], index: 3, kind: input, shape index: {}]
  %s4 = inlined_call_operand.vmem [shape: f32[1,128], index: 4, kind: input, shape index: {}]
  %s5 = inlined_call_operand.vmem [shape: f32[32,1], index: 5, kind: input, shape index: {}]
  %s6 = inlined_call_operand.<no memory space> [shape: f32[1,1], index: 6, kind: input, shape index: {}]
  %s7 = inlined_call_operand.vmem [shape: f32[2,1], index: 7, kind: output, shape index: {}]
  %s8 = sld [smem:[#allocation0]]
  $region38: #{speech_lstm_forward.1} parent=0
    _
  %s10 = ssub.s32 1, %s8
  %s11 = scalar_select 0, %s10, %s8
  %v12 = vstv %s6
  %13 = vst [vmem:[#allocation2] sm:$0x1] %v12
  // Predicated region
  $region2: #{speech_lstm_forward.1} parent=0 // pred_check
    _
  $region3: #{speech_lstm_forward.1} parent=0 // pred_check_branch
    %15 = sbr.rel (0) target = $region5
  $region4: #{speech_lstm_forward.1} parent=0 // pred_region
    _
  $region5: #{speech_lstm_forward.1} parent=0 // pred_fallthru
    _
  // Predicated region
  $region6: #{speech_lstm_forward.1} parent=0 // pred_check
    _
  $region7: #{speech_lstm_forward.1} parent=0 // pred_check_branch
    %17 = sbr.rel (0) target = $region9
  $region8: #{speech_lstm_forward.1} parent=0 // pred_region
    _
  $region9: #{speech_lstm_forward.1} parent=0 // pred_fallthru
    _
  // Predicated region
  $region10: #{speech_lstm_forward.1} parent=0 // pred_check
    _
  $region11: #{speech_lstm_forward.1} parent=0 // pred_check_branch
    %19 = sbr.rel (0) target = $region13
  $region12: #{speech_lstm_forward.1} parent=0 // pred_region
    _
  $region13: #{speech_lstm_forward.1} parent=0 // pred_fallthru
    _
  // Predicated region
  $region14: #{speech_lstm_forward.1} parent=0 // pred_check
    _
  $region15: #{speech_lstm_forward.1} parent=0 // pred_check_branch
    %21 = sbr.rel (0) target = $region17
  $region16: #{speech_lstm_forward.1} parent=0 // pred_region
    _
  $region17: #{speech_lstm_forward.1} parent=0 // pred_fallthru
    _
  // Predicated region
  $region18: #{speech_lstm_forward.1} parent=0 // pred_check
    _
  $region19: #{speech_lstm_forward.1} parent=0 // pred_check_branch
    %23 = sbr.rel (0) target = $region21
  $region20: #{speech_lstm_forward.1} parent=0 // pred_region
    _
  $region21: #{speech_lstm_forward.1} parent=0 // pred_fallthru
    _
  // Predicated region
  $region22: #{speech_lstm_forward.1} parent=0 // pred_check
    _
  $region23: #{speech_lstm_forward.1} parent=0 // pred_check_branch
    %25 = sbr.rel (0) target = $region25
  $region24: #{speech_lstm_forward.1} parent=0 // pred_region
    _
  $region25: #{speech_lstm_forward.1} parent=0 // pred_fallthru
    _
  // Predicated region
  $region26: #{speech_lstm_forward.1} parent=0 // pred_check
    _
  $region27: #{speech_lstm_forward.1} parent=0 // pred_check_branch
    %27 = sbr.rel (0) target = $region29
  $region28: #{speech_lstm_forward.1} parent=0 // pred_region
    _
  $region29: #{speech_lstm_forward.1} parent=0 // pred_fallthru
    _
  %v28 = vld [vmem:[%s1] sm:$0xff]
  %v29 = vld [vmem:[%s1 + $0x8] sm:$0xff]
  %v30 = vld [vmem:[%s1 + $0x10] sm:$0xff]
  %v31 = vld [vmem:[%s1 + $0x18] sm:$0xff]
  %v32 = vld [vmem:[%s2] sm:$0xff]
  %v33 = vld [vmem:[%s2 + $0x8] sm:$0xff]
  %v34 = vld [vmem:[%s2 + $0x10] sm:$0xff]
  %v35 = vld [vmem:[%s2 + $0x18] sm:$0xff]
  %v36 = vld [vmem:[%s3] sm:$0xff]
  %v37 = vld [vmem:[%s3 + $0x8] sm:$0xff]
  %v38 = vld [vmem:[%s3 + $0x10] sm:$0xff]
  %v39 = vld [vmem:[%s3 + $0x18] sm:$0xff]
  %v40 = vld [vmem:[%s4] sm:$0x1]
  %v42 = vlaneseq
  %v43 = vshrl.u32 %v42, 7
  %v44 = vsub.s32 0, %v43
  %v45 = vrot.slane %v40, %v44
  %v47 = vld [vmem:[%s0] sm:$0x3]
  %vm48 = vcmask 261120
  %v50 = vsel %vm48, 0.0, 0
  %52 = vmatprep.subr.mxu0 0.0
  %53 = vmatpush1.msra.mxu0 0.0
  %54 = vmatprep.subr.mxu0 0.0
  %55 = vmatpush1.msra.mxu0 0.0
  %56 = vmatprep.subr.mxu0 0.0
  %57 = vmatpush1.msra.mxu0 0.0
  %58 = vmatprep.subr.mxu0 0.0
  %59 = vmatpush1.msra.mxu0 0.0
  %60 = vmatprep.subr.mxu0 0.0
  %61 = vmatpush1.msra.mxu0 0.0
  %62 = vmatprep.subr.mxu0 0.0
  %63 = vmatpush1.msra.mxu0 0.0
  %64 = vmatprep.subr.mxu0 0.0
  %65 = vmatpush1.msra.mxu0 0.0
  %66 = vmatprep.subr.mxu0 0.0
  %67 = vmatpush1.msra.mxu0 0.0
  %68 = vmatprep.subr.mxu0 0.0
  %69 = vmatpush1.msra.mxu0 0.0
  %70 = vmatprep.subr.mxu0 0.0
  %71 = vmatpush1.msra.mxu0 0.0
  %72 = vmatprep.subr.mxu0 0.0
  %73 = vmatpush1.msra.mxu0 0.0
  %74 = vmatprep.subr.mxu0 0.0
  %75 = vmatpush1.msra.mxu0 0.0
  %76 = vmatprep.subr.mxu0 0.0
  %77 = vmatpush1.msra.mxu0 %v31
  %78 = vmatprep.subr.mxu0 0.0
  %79 = vmatpush1.msra.mxu0 %v30
  %80 = vmatprep.subr.mxu0 0.0
  %81 = vmatpush1.msra.mxu0 %v29
  %82 = vmatprep.subr.mxu0 0.0
  %83 = vmatpush1.msra.mxu0 %v28
  %84 = vmatprep.subr.mxu0 0.0
  %85 = vmatpush2.msra.mxu0 0.0
  %86 = vmatprep.subr.mxu0 0.0
  %87 = vmatpush2.msra.mxu0 0.0
  %88 = vmatprep.subr.mxu0 0.0
  %89 = vmatpush2.msra.mxu0 0.0
  %90 = vmatprep.subr.mxu0 0.0
  %91 = vmatpush2.msra.mxu0 0.0
  %92 = vmatprep.subr.mxu0 0.0
  %93 = vmatpush2.msra.mxu0 0.0
  %94 = vmatprep.subr.mxu0 0.0
  %95 = vmatpush2.msra.mxu0 0.0
  %96 = vmatprep.subr.mxu0 0.0
  %97 = vmatpush2.msra.mxu0 0.0
  %98 = vmatprep.subr.mxu0 0.0
  %99 = vmatpush2.msra.mxu0 0.0
  %100 = vmatprep.subr.mxu0 0.0
  %101 = vmatpush2.msra.mxu0 0.0
  %102 = vmatprep.subr.mxu0 0.0
  %103 = vmatpush2.msra.mxu0 0.0
  %104 = vmatprep.subr.mxu0 0.0
  %105 = vmatpush2.msra.mxu0 0.0
  %106 = vmatprep.subr.mxu0 0.0
  %107 = vmatpush2.msra.mxu0 0.0
  %108 = vmatprep.subr.mxu0 0.0
  %109 = vmatpush2.msra.mxu0 0.0
  %110 = vmatprep.subr.mxu0 0.0
  %111 = vmatpush2.msra.mxu0 0.0
  %112 = vmatprep.subr.mxu0 0.0
  %113 = vmatpush2.msra.mxu0 0.0
  %114 = vmatprep.subr.mxu0 0.0
  %115 = vmatpush2.msra.mxu0 0.0
  %116 = vmatprep.mubr.f32.mxu0 0.0
  %117 = vmatmul.mubr.f32.gmra.mxu0 %v50
  %v118 = vpop.f32.mrf.mxu0
  %v119 = vadd.f32 0.0, %v118
  %v120 = vpop.f32.mrf.mxu0
  %121 = vdwg.mxu0
  %v122 = vadd.f32 %v47, %v119
  %v123 = vmul.f32 %v122, 0.5
  %v124 = vtanh.pop %v123
  %v125 = vmul.f32 %v124, 0.5
  %v126 = vadd.f32 %v125, 0.5
  %v127 = vtanh.pop %v122
  %v128 = vmul.f32 %v126, 0.0
  %130 = vrot.lane.b32.xlu0 %v127, 64
  %v131 = vpop.permute.xlu0 %130
  %v133 = vmul.f32 %v126, %v131
  %135 = vrot.lane.b32.xlu0 %v133, 32
  %v136 = vpop.permute.xlu0 %135
  %v138 = vadd.f32 %v128, %v136
  %v139 = vtanh.pop %v138
  %141 = vrot.lane.b32.xlu0 %v139, 64
  %v142 = vpop.permute.xlu0 %141
  %v144 = vmul.f32 %v126, %v142
  %145 = vmatprep.subr.mxu0 0.0
  %146 = vmatpush1.msra.mxu0 0.0
  %147 = vmatprep.subr.mxu0 0.0
  %148 = vmatpush1.msra.mxu0 0.0
  %149 = vmatprep.subr.mxu0 0.0
  %150 = vmatpush1.msra.mxu0 0.0
  %151 = vmatprep.subr.mxu0 0.0
  %152 = vmatpush1.msra.mxu0 0.0
  %153 = vmatprep.subr.mxu0 0.0
  %154 = vmatpush1.msra.mxu0 0.0
  %155 = vmatprep.subr.mxu0 0.0
  %156 = vmatpush1.msra.mxu0 0.0
  %157 = vmatprep.subr.mxu0 0.0
  %158 = vmatpush1.msra.mxu0 0.0
  %159 = vmatprep.subr.mxu0 0.0
  %160 = vmatpush1.msra.mxu0 0.0
  %161 = vmatprep.subr.mxu0 0.0
  %162 = vmatpush1.msra.mxu0 0.0
  %163 = vmatprep.subr.mxu0 0.0
  %164 = vmatpush1.msra.mxu0 0.0
  %165 = vmatprep.subr.mxu0 0.0
  %166 = vmatpush1.msra.mxu0 0.0
  %167 = vmatprep.subr.mxu0 0.0
  %168 = vmatpush1.msra.mxu0 0.0
  %169 = vmatprep.subr.mxu0 0.0
  %170 = vmatpush1.msra.mxu0 %v39
  %171 = vmatprep.subr.mxu0 0.0
  %172 = vmatpush1.msra.mxu0 %v38
  %173 = vmatprep.subr.mxu0 0.0
  %174 = vmatpush1.msra.mxu0 %v37
  %175 = vmatprep.subr.mxu0 0.0
  %176 = vmatpush1.msra.mxu0 %v36
  %177 = vmatprep.subr.mxu0 0.0
  %178 = vmatpush2.msra.mxu0 0.0
  %179 = vmatprep.subr.mxu0 0.0
  %180 = vmatpush2.msra.mxu0 0.0
  %181 = vmatprep.subr.mxu0 0.0
  %182 = vmatpush2.msra.mxu0 0.0
  %183 = vmatprep.subr.mxu0 0.0
  %184 = vmatpush2.msra.mxu0 0.0
  %185 = vmatprep.subr.mxu0 0.0
  %186 = vmatpush2.msra.mxu0 0.0
  %187 = vmatprep.subr.mxu0 0.0
  %188 = vmatpush2.msra.mxu0 0.0
  %189 = vmatprep.subr.mxu0 0.0
  %190 = vmatpush2.msra.mxu0 0.0
  %191 = vmatprep.subr.mxu0 0.0
  %192 = vmatpush2.msra.mxu0 0.0
  %193 = vmatprep.subr.mxu0 0.0
  %194 = vmatpush2.msra.mxu0 0.0
  %195 = vmatprep.subr.mxu0 0.0
  %196 = vmatpush2.msra.mxu0 0.0
  %197 = vmatprep.subr.mxu0 0.0
  %198 = vmatpush2.msra.mxu0 0.0
  %199 = vmatprep.subr.mxu0 0.0
  %200 = vmatpush2.msra.mxu0 0.0
  %201 = vmatprep.subr.mxu0 0.0
  %202 = vmatpush2.msra.mxu0 0.0
  %203 = vmatprep.subr.mxu0 0.0
  %204 = vmatpush2.msra.mxu0 0.0
  %205 = vmatprep.subr.mxu0 0.0
  %206 = vmatpush2.msra.mxu0 0.0
  %207 = vmatprep.subr.mxu0 0.0
  %208 = vmatpush2.msra.mxu0 0.0
  %209 = vmatprep.mubr.f32.mxu0 0.0
  %210 = vmatmul.mubr.f32.gmra.mxu0 %v50
  %v211 = vpop.f32.mrf.mxu0
  %v212 = vadd.f32 0.0, %v211
  %v213 = vpop.f32.mrf.mxu0
  %214 = vdwg.mxu0
  %216 = vrot.lane.b32.xlu0 %v144, 32
  %v217 = vpop.permute.xlu0 %216
  %v218 = vsel %vm48, %v217, 0
  %220 = vmatprep.subr.mxu0 0.0
  %221 = vmatpush1.msra.mxu0 0.0
  %222 = vmatprep.subr.mxu0 0.0
  %223 = vmatpush1.msra.mxu0 0.0
  %224 = vmatprep.subr.mxu0 0.0
  %225 = vmatpush1.msra.mxu0 0.0
  %226 = vmatprep.subr.mxu0 0.0
  %227 = vmatpush1.msra.mxu0 0.0
  %228 = vmatprep.subr.mxu0 0.0
  %229 = vmatpush1.msra.mxu0 0.0
  %230 = vmatprep.subr.mxu0 0.0
  %231 = vmatpush1.msra.mxu0 0.0
  %232 = vmatprep.subr.mxu0 0.0
  %233 = vmatpush1.msra.mxu0 0.0
  %234 = vmatprep.subr.mxu0 0.0
  %235 = vmatpush1.msra.mxu0 0.0
  %236 = vmatprep.subr.mxu0 0.0
  %237 = vmatpush1.msra.mxu0 0.0
  %238 = vmatprep.subr.mxu0 0.0
  %239 = vmatpush1.msra.mxu0 0.0
  %240 = vmatprep.subr.mxu0 0.0
  %241 = vmatpush1.msra.mxu0 0.0
  %242 = vmatprep.subr.mxu0 0.0
  %243 = vmatpush1.msra.mxu0 0.0
  %244 = vmatprep.subr.mxu0 0.0
  %245 = vmatpush1.msra.mxu0 %v35
  %246 = vmatprep.subr.mxu0 0.0
  %247 = vmatpush1.msra.mxu0 %v34
  %248 = vmatprep.subr.mxu0 0.0
  %249 = vmatpush1.msra.mxu0 %v33
  %250 = vmatprep.subr.mxu0 0.0
  %251 = vmatpush1.msra.mxu0 %v32
  %252 = vmatprep.subr.mxu0 0.0
  %253 = vmatpush2.msra.mxu0 0.0
  %254 = vmatprep.subr.mxu0 0.0
  %255 = vmatpush2.msra.mxu0 0.0
  %256 = vmatprep.subr.mxu0 0.0
  %257 = vmatpush2.msra.mxu0 0.0
  %258 = vmatprep.subr.mxu0 0.0
  %259 = vmatpush2.msra.mxu0 0.0
  %260 = vmatprep.subr.mxu0 0.0
  %261 = vmatpush2.msra.mxu0 0.0
  %262 = vmatprep.subr.mxu0 0.0
  %263 = vmatpush2.msra.mxu0 0.0
  %264 = vmatprep.subr.mxu0 0.0
  %265 = vmatpush2.msra.mxu0 0.0
  %266 = vmatprep.subr.mxu0 0.0
  %267 = vmatpush2.msra.mxu0 0.0
  %268 = vmatprep.subr.mxu0 0.0
  %269 = vmatpush2.msra.mxu0 0.0
  %270 = vmatprep.subr.mxu0 0.0
  %271 = vmatpush2.msra.mxu0 0.0
  %272 = vmatprep.subr.mxu0 0.0
  %273 = vmatpush2.msra.mxu0 0.0
  %274 = vmatprep.subr.mxu0 0.0
  %275 = vmatpush2.msra.mxu0 0.0
  %276 = vmatprep.subr.mxu0 0.0
  %277 = vmatpush2.msra.mxu0 0.0
  %278 = vmatprep.subr.mxu0 0.0
  %279 = vmatpush2.msra.mxu0 0.0
  %280 = vmatprep.subr.mxu0 0.0
  %281 = vmatpush2.msra.mxu0 0.0
  %282 = vmatprep.subr.mxu0 0.0
  %283 = vmatpush2.msra.mxu0 0.0
  %284 = vmatprep.mubr.f32.mxu0 0.0
  %285 = vmatmul.mubr.f32.gmra.mxu0 %v218
  %v286 = vpop.f32.mrf.mxu0
  %v287 = vadd.f32 %v212, %v286
  %v288 = vpop.f32.mrf.mxu0
  %289 = vdwg.mxu0
  %v290 = vadd.f32 %v287, %v45
  %v291 = vmul.f32 %v290, 0.5
  %v292 = vtanh.pop %v291
  %v293 = vmul.f32 %v292, 0.5
  %v294 = vadd.f32 %v293, 0.5
  %v295 = vtanh.pop %v290
  %v296 = vmul.f32 %v294, 0.0
  %298 = vrot.lane.b32.xlu0 %v295, 64
  %v299 = vpop.permute.xlu0 %298
  %v301 = vmul.f32 %v294, %v299
  %303 = vrot.lane.b32.xlu0 %v301, 32
  %v304 = vpop.permute.xlu0 %303
  %v306 = vadd.f32 %v296, %v304
  %v307 = vtanh.pop %v306
  %309 = vrot.lane.b32.xlu0 %v307, 64
  %v310 = vpop.permute.xlu0 %309
  %v312 = vmul.f32 %v294, %v310
  %s313 = scalar_lea.vmem %s0, 2
  %v314 = vld [vmem:[%s313] sm:$0x3]
  %315 = vmatprep.subr.mxu0 0.0
  %316 = vmatpush1.msra.mxu0 0.0
  %317 = vmatprep.subr.mxu0 0.0
  %318 = vmatpush1.msra.mxu0 0.0
  %319 = vmatprep.subr.mxu0 0.0
  %320 = vmatpush1.msra.mxu0 0.0
  %321 = vmatprep.subr.mxu0 0.0
  %322 = vmatpush1.msra.mxu0 0.0
  %323 = vmatprep.subr.mxu0 0.0
  %324 = vmatpush1.msra.mxu0 0.0
  %325 = vmatprep.subr.mxu0 0.0
  %326 = vmatpush1.msra.mxu0 0.0
  %327 = vmatprep.subr.mxu0 0.0
  %328 = vmatpush1.msra.mxu0 0.0
  %329 = vmatprep.subr.mxu0 0.0
  %330 = vmatpush1.msra.mxu0 0.0
  %331 = vmatprep.subr.mxu0 0.0
  %332 = vmatpush1.msra.mxu0 0.0
  %333 = vmatprep.subr.mxu0 0.0
  %334 = vmatpush1.msra.mxu0 0.0
  %335 = vmatprep.subr.mxu0 0.0
  %336 = vmatpush1.msra.mxu0 0.0
  %337 = vmatprep.subr.mxu0 0.0
  %338 = vmatpush1.msra.mxu0 0.0
  %339 = vmatprep.subr.mxu0 0.0
  %340 = vmatpush1.msra.mxu0 %v31
  %341 = vmatprep.subr.mxu0 0.0
  %342 = vmatpush1.msra.mxu0 %v30
  %343 = vmatprep.subr.mxu0 0.0
  %344 = vmatpush1.msra.mxu0 %v29
  %345 = vmatprep.subr.mxu0 0.0
  %346 = vmatpush1.msra.mxu0 %v28
  %347 = vmatprep.subr.mxu0 0.0
  %348 = vmatpush2.msra.mxu0 0.0
  %349 = vmatprep.subr.mxu0 0.0
  %350 = vmatpush2.msra.mxu0 0.0
  %351 = vmatprep.subr.mxu0 0.0
  %352 = vmatpush2.msra.mxu0 0.0
  %353 = vmatprep.subr.mxu0 0.0
  %354 = vmatpush2.msra.mxu0 0.0
  %355 = vmatprep.subr.mxu0 0.0
  %356 = vmatpush2.msra.mxu0 0.0
  %357 = vmatprep.subr.mxu0 0.0
  %358 = vmatpush2.msra.mxu0 0.0
  %359 = vmatprep.subr.mxu0 0.0
  %360 = vmatpush2.msra.mxu0 0.0
  %361 = vmatprep.subr.mxu0 0.0
  %362 = vmatpush2.msra.mxu0 0.0
  %363 = vmatprep.subr.mxu0 0.0
  %364 = vmatpush2.msra.mxu0 0.0
  %365 = vmatprep.subr.mxu0 0.0
  %366 = vmatpush2.msra.mxu0 0.0
  %367 = vmatprep.subr.mxu0 0.0
  %368 = vmatpush2.msra.mxu0 0.0
  %369 = vmatprep.subr.mxu0 0.0
  %370 = vmatpush2.msra.mxu0 0.0
  %371 = vmatprep.subr.mxu0 0.0
  %372 = vmatpush2.msra.mxu0 0.0
  %373 = vmatprep.subr.mxu0 0.0
  %374 = vmatpush2.msra.mxu0 0.0
  %375 = vmatprep.subr.mxu0 0.0
  %376 = vmatpush2.msra.mxu0 0.0
  %377 = vmatprep.subr.mxu0 0.0
  %378 = vmatpush2.msra.mxu0 0.0
  %379 = vmatprep.mubr.f32.mxu0 0.0
  %380 = vmatmul.mubr.f32.gmra.mxu0 %v218
  %v381 = vpop.f32.mrf.mxu0
  %v382 = vadd.f32 0.0, %v381
  %v383 = vpop.f32.mrf.mxu0
  %384 = vdwg.mxu0
  %v385 = vadd.f32 %v314, %v382
  %v386 = vmul.f32 %v385, 0.5
  %v387 = vtanh.pop %v386
  %v388 = vmul.f32 %v387, 0.5
  %v389 = vadd.f32 %v388, 0.5
  %v390 = vtanh.pop %v385
  %v391 = vmul.f32 %v389, %v138
  %393 = vrot.lane.b32.xlu0 %v390, 64
  %v394 = vpop.permute.xlu0 %393
  %v396 = vmul.f32 %v389, %v394
  %398 = vrot.lane.b32.xlu0 %v396, 32
  %v399 = vpop.permute.xlu0 %398
  %v401 = vadd.f32 %v391, %v399
  %v402 = vtanh.pop %v401
  %404 = vrot.lane.b32.xlu0 %v402, 64
  %v405 = vpop.permute.xlu0 %404
  %v407 = vmul.f32 %v389, %v405
  %409 = vrot.lane.b32.xlu0 %v312, 32
  %v410 = vpop.permute.xlu0 %409
  %v411 = vsel %vm48, %v410, 0
  %413 = vmatprep.subr.mxu0 0.0
  %414 = vmatpush1.msra.mxu0 0.0
  %415 = vmatprep.subr.mxu0 0.0
  %416 = vmatpush1.msra.mxu0 0.0
  %417 = vmatprep.subr.mxu0 0.0
  %418 = vmatpush1.msra.mxu0 0.0
  %419 = vmatprep.subr.mxu0 0.0
  %420 = vmatpush1.msra.mxu0 0.0
  %421 = vmatprep.subr.mxu0 0.0
  %422 = vmatpush1.msra.mxu0 0.0
  %423 = vmatprep.subr.mxu0 0.0
  %424 = vmatpush1.msra.mxu0 0.0
  %425 = vmatprep.subr.mxu0 0.0
  %426 = vmatpush1.msra.mxu0 0.0
  %427 = vmatprep.subr.mxu0 0.0
  %428 = vmatpush1.msra.mxu0 0.0
  %429 = vmatprep.subr.mxu0 0.0
  %430 = vmatpush1.msra.mxu0 0.0
  %431 = vmatprep.subr.mxu0 0.0
  %432 = vmatpush1.msra.mxu0 0.0
  %433 = vmatprep.subr.mxu0 0.0
  %434 = vmatpush1.msra.mxu0 0.0
  %435 = vmatprep.subr.mxu0 0.0
  %436 = vmatpush1.msra.mxu0 0.0
  %437 = vmatprep.subr.mxu0 0.0
  %438 = vmatpush1.msra.mxu0 %v39
  %439 = vmatprep.subr.mxu0 0.0
  %440 = vmatpush1.msra.mxu0 %v38
  %441 = vmatprep.subr.mxu0 0.0
  %442 = vmatpush1.msra.mxu0 %v37
  %443 = vmatprep.subr.mxu0 0.0
  %444 = vmatpush1.msra.mxu0 %v36
  %445 = vmatprep.subr.mxu0 0.0
  %446 = vmatpush2.msra.mxu0 0.0
  %447 = vmatprep.subr.mxu0 0.0
  %448 = vmatpush2.msra.mxu0 0.0
  %449 = vmatprep.subr.mxu0 0.0
  %450 = vmatpush2.msra.mxu0 0.0
  %451 = vmatprep.subr.mxu0 0.0
  %452 = vmatpush2.msra.mxu0 0.0
  %453 = vmatprep.subr.mxu0 0.0
  %454 = vmatpush2.msra.mxu0 0.0
  %455 = vmatprep.subr.mxu0 0.0
  %456 = vmatpush2.msra.mxu0 0.0
  %457 = vmatprep.subr.mxu0 0.0
  %458 = vmatpush2.msra.mxu0 0.0
  %459 = vmatprep.subr.mxu0 0.0
  %460 = vmatpush2.msra.mxu0 0.0
  %461 = vmatprep.subr.mxu0 0.0
  %462 = vmatpush2.msra.mxu0 0.0
  %463 = vmatprep.subr.mxu0 0.0
  %464 = vmatpush2.msra.mxu0 0.0
  %465 = vmatprep.subr.mxu0 0.0
  %466 = vmatpush2.msra.mxu0 0.0
  %467 = vmatprep.subr.mxu0 0.0
  %468 = vmatpush2.msra.mxu0 0.0
  %469 = vmatprep.subr.mxu0 0.0
  %470 = vmatpush2.msra.mxu0 0.0
  %471 = vmatprep.subr.mxu0 0.0
  %472 = vmatpush2.msra.mxu0 0.0
  %473 = vmatprep.subr.mxu0 0.0
  %474 = vmatpush2.msra.mxu0 0.0
  %475 = vmatprep.subr.mxu0 0.0
  %476 = vmatpush2.msra.mxu0 0.0
  %477 = vmatprep.mubr.f32.mxu0 0.0
  %478 = vmatmul.mubr.f32.gmra.mxu0 %v411
  %v479 = vpop.f32.mrf.mxu0
  %v480 = vadd.f32 0.0, %v479
  %v481 = vpop.f32.mrf.mxu0
  %482 = vdwg.mxu0
  %484 = vrot.lane.b32.xlu0 %v407, 32
  %v485 = vpop.permute.xlu0 %484
  %v486 = vsel %vm48, %v485, 0
  %488 = vmatprep.subr.mxu0 0.0
  %489 = vmatpush1.msra.mxu0 0.0
  %490 = vmatprep.subr.mxu0 0.0
  %491 = vmatpush1.msra.mxu0 0.0
  %492 = vmatprep.subr.mxu0 0.0
  %493 = vmatpush1.msra.mxu0 0.0
  %494 = vmatprep.subr.mxu0 0.0
  %495 = vmatpush1.msra.mxu0 0.0
  %496 = vmatprep.subr.mxu0 0.0
  %497 = vmatpush1.msra.mxu0 0.0
  %498 = vmatprep.subr.mxu0 0.0
  %499 = vmatpush1.msra.mxu0 0.0
  %500 = vmatprep.subr.mxu0 0.0
  %501 = vmatpush1.msra.mxu0 0.0
  %502 = vmatprep.subr.mxu0 0.0
  %503 = vmatpush1.msra.mxu0 0.0
  %504 = vmatprep.subr.mxu0 0.0
  %505 = vmatpush1.msra.mxu0 0.0
  %506 = vmatprep.subr.mxu0 0.0
  %507 = vmatpush1.msra.mxu0 0.0
  %508 = vmatprep.subr.mxu0 0.0
  %509 = vmatpush1.msra.mxu0 0.0
  %510 = vmatprep.subr.mxu0 0.0
  %511 = vmatpush1.msra.mxu0 0.0
  %512 = vmatprep.subr.mxu0 0.0
  %513 = vmatpush1.msra.mxu0 %v35
  %514 = vmatprep.subr.mxu0 0.0
  %515 = vmatpush1.msra.mxu0 %v34
  %516 = vmatprep.subr.mxu0 0.0
  %517 = vmatpush1.msra.mxu0 %v33
  %518 = vmatprep.subr.mxu0 0.0
  %519 = vmatpush1.msra.mxu0 %v32
  %520 = vmatprep.subr.mxu0 0.0
  %521 = vmatpush2.msra.mxu0 0.0
  %522 = vmatprep.subr.mxu0 0.0
  %523 = vmatpush2.msra.mxu0 0.0
  %524 = vmatprep.subr.mxu0 0.0
  %525 = vmatpush2.msra.mxu0 0.0
  %526 = vmatprep.subr.mxu0 0.0
  %527 = vmatpush2.msra.mxu0 0.0
  %528 = vmatprep.subr.mxu0 0.0
  %529 = vmatpush2.msra.mxu0 0.0
  %530 = vmatprep.subr.mxu0 0.0
  %531 = vmatpush2.msra.mxu0 0.0
  %532 = vmatprep.subr.mxu0 0.0
  %533 = vmatpush2.msra.mxu0 0.0
  %534 = vmatprep.subr.mxu0 0.0
  %535 = vmatpush2.msra.mxu0 0.0
  %536 = vmatprep.subr.mxu0 0.0
  %537 = vmatpush2.msra.mxu0 0.0
  %538 = vmatprep.subr.mxu0 0.0
  %539 = vmatpush2.msra.mxu0 0.0
  %540 = vmatprep.subr.mxu0 0.0
  %541 = vmatpush2.msra.mxu0 0.0
  %542 = vmatprep.subr.mxu0 0.0
  %543 = vmatpush2.msra.mxu0 0.0
  %544 = vmatprep.subr.mxu0 0.0
  %545 = vmatpush2.msra.mxu0 0.0
  %546 = vmatprep.subr.mxu0 0.0
  %547 = vmatpush2.msra.mxu0 0.0
  %548 = vmatprep.subr.mxu0 0.0
  %549 = vmatpush2.msra.mxu0 0.0
  %550 = vmatprep.subr.mxu0 0.0
  %551 = vmatpush2.msra.mxu0 0.0
  %552 = vmatprep.mubr.f32.mxu0 0.0
  %553 = vmatmul.mubr.f32.gmra.mxu0 %v486
  %v554 = vpop.f32.mrf.mxu0
  %v555 = vadd.f32 %v480, %v554
  %v556 = vpop.f32.mrf.mxu0
  %557 = vdwg.mxu0
  %v558 = vadd.f32 %v555, %v45
  %v559 = vmul.f32 %v558, 0.5
  %v560 = vtanh.pop %v559
  %v561 = vmul.f32 %v560, 0.5
  %v562 = vadd.f32 %v561, 0.5
  %v563 = vtanh.pop %v558
  %v564 = vmul.f32 %v562, %v306
  %566 = vrot.lane.b32.xlu0 %v563, 64
  %v567 = vpop.permute.xlu0 %566
  %v569 = vmul.f32 %v562, %v567
  %571 = vrot.lane.b32.xlu0 %v569, 32
  %v572 = vpop.permute.xlu0 %571
  %v574 = vadd.f32 %v564, %v572
  %v575 = vtanh.pop %v574
  %577 = vrot.lane.b32.xlu0 %v575, 64
  %v578 = vpop.permute.xlu0 %577
  %v580 = vmul.f32 %v562, %v578
  %s581 = scalar_lea.vmem %s0, 4
  %v582 = vld [vmem:[%s581] sm:$0x3]
  %583 = vmatprep.subr.mxu0 0.0
  %584 = vmatpush1.msra.mxu0 0.0
  %585 = vmatprep.subr.mxu0 0.0
  %586 = vmatpush1.msra.mxu0 0.0
  %587 = vmatprep.subr.mxu0 0.0
  %588 = vmatpush1.msra.mxu0 0.0
  %589 = vmatprep.subr.mxu0 0.0
  %590 = vmatpush1.msra.mxu0 0.0
  %591 = vmatprep.subr.mxu0 0.0
  %592 = vmatpush1.msra.mxu0 0.0
  %593 = vmatprep.subr.mxu0 0.0
  %594 = vmatpush1.msra.mxu0 0.0
  %595 = vmatprep.subr.mxu0 0.0
  %596 = vmatpush1.msra.mxu0 0.0
  %597 = vmatprep.subr.mxu0 0.0
  %598 = vmatpush1.msra.mxu0 0.0
  %599 = vmatprep.subr.mxu0 0.0
  %600 = vmatpush1.msra.mxu0 0.0
  %601 = vmatprep.subr.mxu0 0.0
  %602 = vmatpush1.msra.mxu0 0.0
  %603 = vmatprep.subr.mxu0 0.0
  %604 = vmatpush1.msra.mxu0 0.0
  %605 = vmatprep.subr.mxu0 0.0
  %606 = vmatpush1.msra.mxu0 0.0
  %607 = vmatprep.subr.mxu0 0.0
  %608 = vmatpush1.msra.mxu0 %v31
  %609 = vmatprep.subr.mxu0 0.0
  %610 = vmatpush1.msra.mxu0 %v30
  %611 = vmatprep.subr.mxu0 0.0
  %612 = vmatpush1.msra.mxu0 %v29
  %613 = vmatprep.subr.mxu0 0.0
  %614 = vmatpush1.msra.mxu0 %v28
  %615 = vmatprep.subr.mxu0 0.0
  %616 = vmatpush2.msra.mxu0 0.0
  %617 = vmatprep.subr.mxu0 0.0
  %618 = vmatpush2.msra.mxu0 0.0
  %619 = vmatprep.subr.mxu0 0.0
  %620 = vmatpush2.msra.mxu0 0.0
  %621 = vmatprep.subr.mxu0 0.0
  %622 = vmatpush2.msra.mxu0 0.0
  %623 = vmatprep.subr.mxu0 0.0
  %624 = vmatpush2.msra.mxu0 0.0
  %625 = vmatprep.subr.mxu0 0.0
  %626 = vmatpush2.msra.mxu0 0.0
  %627 = vmatprep.subr.mxu0 0.0
  %628 = vmatpush2.msra.mxu0 0.0
  %629 = vmatprep.subr.mxu0 0.0
  %630 = vmatpush2.msra.mxu0 0.0
  %631 = vmatprep.subr.mxu0 0.0
  %632 = vmatpush2.msra.mxu0 0.0
  %633 = vmatprep.subr.mxu0 0.0
  %634 = vmatpush2.msra.mxu0 0.0
  %635 = vmatprep.subr.mxu0 0.0
  %636 = vmatpush2.msra.mxu0 0.0
  %637 = vmatprep.subr.mxu0 0.0
  %638 = vmatpush2.msra.mxu0 0.0
  %639 = vmatprep.subr.mxu0 0.0
  %640 = vmatpush2.msra.mxu0 0.0
  %641 = vmatprep.subr.mxu0 0.0
  %642 = vmatpush2.msra.mxu0 0.0
  %643 = vmatprep.subr.mxu0 0.0
  %644 = vmatpush2.msra.mxu0 0.0
  %645 = vmatprep.subr.mxu0 0.0
  %646 = vmatpush2.msra.mxu0 0.0
  %647 = vmatprep.mubr.f32.mxu0 0.0
  %648 = vmatmul.mubr.f32.gmra.mxu0 %v486
  %v649 = vpop.f32.mrf.mxu0
  %v650 = vadd.f32 0.0, %v649
  %v651 = vpop.f32.mrf.mxu0
  %652 = vdwg.mxu0
  %v653 = vadd.f32 %v582, %v650
  %v654 = vmul.f32 %v653, 0.5
  %v655 = vtanh.pop %v654
  %v656 = vmul.f32 %v655, 0.5
  %v657 = vadd.f32 %v656, 0.5
  %v658 = vtanh.pop %v653
  %v659 = vmul.f32 %v657, %v401
  %661 = vrot.lane.b32.xlu0 %v658, 64
  %v662 = vpop.permute.xlu0 %661
  %v664 = vmul.f32 %v657, %v662
  %666 = vrot.lane.b32.xlu0 %v664, 32
  %v667 = vpop.permute.xlu0 %666
  %v669 = vadd.f32 %v659, %v667
  %v670 = vtanh.pop %v669
  %672 = vrot.lane.b32.xlu0 %v670, 64
  %v673 = vpop.permute.xlu0 %672
  %v675 = vmul.f32 %v657, %v673
  %677 = vrot.lane.b32.xlu0 %v580, 32
  %v678 = vpop.permute.xlu0 %677
  %v679 = vsel %vm48, %v678, 0
  %681 = vmatprep.subr.mxu0 0.0
  %682 = vmatpush1.msra.mxu0 0.0
  %683 = vmatprep.subr.mxu0 0.0
  %684 = vmatpush1.msra.mxu0 0.0
  %685 = vmatprep.subr.mxu0 0.0
  %686 = vmatpush1.msra.mxu0 0.0
  %687 = vmatprep.subr.mxu0 0.0
  %688 = vmatpush1.msra.mxu0 0.0
  %689 = vmatprep.subr.mxu0 0.0
  %690 = vmatpush1.msra.mxu0 0.0
  %691 = vmatprep.subr.mxu0 0.0
  %692 = vmatpush1.msra.mxu0 0.0
  %693 = vmatprep.subr.mxu0 0.0
  %694 = vmatpush1.msra.mxu0 0.0
  %695 = vmatprep.subr.mxu0 0.0
  %696 = vmatpush1.msra.mxu0 0.0
  %697 = vmatprep.subr.mxu0 0.0
  %698 = vmatpush1.msra.mxu0 0.0
  %699 = vmatprep.subr.mxu0 0.0
  %700 = vmatpush1.msra.mxu0 0.0
  %701 = vmatprep.subr.mxu0 0.0
  %702 = vmatpush1.msra.mxu0 0.0
  %703 = vmatprep.subr.mxu0 0.0
  %704 = vmatpush1.msra.mxu0 0.0
  %705 = vmatprep.subr.mxu0 0.0
  %706 = vmatpush1.msra.mxu0 %v39
  %707 = vmatprep.subr.mxu0 0.0
  %708 = vmatpush1.msra.mxu0 %v38
  %709 = vmatprep.subr.mxu0 0.0
  %710 = vmatpush1.msra.mxu0 %v37
  %711 = vmatprep.subr.mxu0 0.0
  %712 = vmatpush1.msra.mxu0 %v36
  %713 = vmatprep.subr.mxu0 0.0
  %714 = vmatpush2.msra.mxu0 0.0
  %715 = vmatprep.subr.mxu0 0.0
  %716 = vmatpush2.msra.mxu0 0.0
  %717 = vmatprep.subr.mxu0 0.0
  %718 = vmatpush2.msra.mxu0 0.0
  %719 = vmatprep.subr.mxu0 0.0
  %720 = vmatpush2.msra.mxu0 0.0
  %721 = vmatprep.subr.mxu0 0.0
  %722 = vmatpush2.msra.mxu0 0.0
  %723 = vmatprep.subr.mxu0 0.0
  %724 = vmatpush2.msra.mxu0 0.0
  %725 = vmatprep.subr.mxu0 0.0
  %726 = vmatpush2.msra.mxu0 0.0
  %727 = vmatprep.subr.mxu0 0.0
  %728 = vmatpush2.msra.mxu0 0.0
  %729 = vmatprep.subr.mxu0 0.0
  %730 = vmatpush2.msra.mxu0 0.0
  %731 = vmatprep.subr.mxu0 0.0
  %732 = vmatpush2.msra.mxu0 0.0
  %733 = vmatprep.subr.mxu0 0.0
  %734 = vmatpush2.msra.mxu0 0.0
  %735 = vmatprep.subr.mxu0 0.0
  %736 = vmatpush2.msra.mxu0 0.0
  %737 = vmatprep.subr.mxu0 0.0
  %738 = vmatpush2.msra.mxu0 0.0
  %739 = vmatprep.subr.mxu0 0.0
  %740 = vmatpush2.msra.mxu0 0.0
  %741 = vmatprep.subr.mxu0 0.0
  %742 = vmatpush2.msra.mxu0 0.0
  %743 = vmatprep.subr.mxu0 0.0
  %744 = vmatpush2.msra.mxu0 0.0
  %745 = vmatprep.mubr.f32.mxu0 0.0
  %746 = vmatmul.mubr.f32.gmra.mxu0 %v679
  %v747 = vpop.f32.mrf.mxu0
  %v748 = vadd.f32 0.0, %v747
  %v749 = vpop.f32.mrf.mxu0
  %750 = vdwg.mxu0
  %752 = vrot.lane.b32.xlu0 %v675, 32
  %v753 = vpop.permute.xlu0 %752
  %v754 = vsel %vm48, %v753, 0
  %756 = vmatprep.subr.mxu0 0.0
  %757 = vmatpush1.msra.mxu0 0.0
  %758 = vmatprep.subr.mxu0 0.0
  %759 = vmatpush1.msra.mxu0 0.0
  %760 = vmatprep.subr.mxu0 0.0
  %761 = vmatpush1.msra.mxu0 0.0
  %762 = vmatprep.subr.mxu0 0.0
  %763 = vmatpush1.msra.mxu0 0.0
  %764 = vmatprep.subr.mxu0 0.0
  %765 = vmatpush1.msra.mxu0 0.0
  %766 = vmatprep.subr.mxu0 0.0
  %767 = vmatpush1.msra.mxu0 0.0
  %768 = vmatprep.subr.mxu0 0.0
  %769 = vmatpush1.msra.mxu0 0.0
  %770 = vmatprep.subr.mxu0 0.0
  %771 = vmatpush1.msra.mxu0 0.0
  %772 = vmatprep.subr.mxu0 0.0
  %773 = vmatpush1.msra.mxu0 0.0
  %774 = vmatprep.subr.mxu0 0.0
  %775 = vmatpush1.msra.mxu0 0.0
  %776 = vmatprep.subr.mxu0 0.0
  %777 = vmatpush1.msra.mxu0 0.0
  %778 = vmatprep.subr.mxu0 0.0
  %779 = vmatpush1.msra.mxu0 0.0
  %780 = vmatprep.subr.mxu0 0.0
  %781 = vmatpush1.msra.mxu0 %v35
  %782 = vmatprep.subr.mxu0 0.0
  %783 = vmatpush1.msra.mxu0 %v34
  %784 = vmatprep.subr.mxu0 0.0
  %785 = vmatpush1.msra.mxu0 %v33
  %786 = vmatprep.subr.mxu0 0.0
  %787 = vmatpush1.msra.mxu0 %v32
  %788 = vmatprep.subr.mxu0 0.0
  %789 = vmatpush2.msra.mxu0 0.0
  %790 = vmatprep.subr.mxu0 0.0
  %791 = vmatpush2.msra.mxu0 0.0
  %792 = vmatprep.subr.mxu0 0.0
  %793 = vmatpush2.msra.mxu0 0.0
  %794 = vmatprep.subr.mxu0 0.0
  %795 = vmatpush2.msra.mxu0 0.0
  %796 = vmatprep.subr.mxu0 0.0
  %797 = vmatpush2.msra.mxu0 0.0
  %798 = vmatprep.subr.mxu0 0.0
  %799 = vmatpush2.msra.mxu0 0.0
  %800 = vmatprep.subr.mxu0 0.0
  %801 = vmatpush2.msra.mxu0 0.0
  %802 = vmatprep.subr.mxu0 0.0
  %803 = vmatpush2.msra.mxu0 0.0
  %804 = vmatprep.subr.mxu0 0.0
  %805 = vmatpush2.msra.mxu0 0.0
  %806 = vmatprep.subr.mxu0 0.0
  %807 = vmatpush2.msra.mxu0 0.0
  %808 = vmatprep.subr.mxu0 0.0
  %809 = vmatpush2.msra.mxu0 0.0
  %810 = vmatprep.subr.mxu0 0.0
  %811 = vmatpush2.msra.mxu0 0.0
  %812 = vmatprep.subr.mxu0 0.0
  %813 = vmatpush2.msra.mxu0 0.0
  %814 = vmatprep.subr.mxu0 0.0
  %815 = vmatpush2.msra.mxu0 0.0
  %816 = vmatprep.subr.mxu0 0.0
  %817 = vmatpush2.msra.mxu0 0.0
  %818 = vmatprep.subr.mxu0 0.0
  %819 = vmatpush2.msra.mxu0 0.0
  %820 = vmatprep.mubr.f32.mxu0 0.0
  %821 = vmatmul.mubr.f32.gmra.mxu0 %v754
  %v822 = vpop.f32.mrf.mxu0
  %v823 = vadd.f32 %v748, %v822
  %v824 = vpop.f32.mrf.mxu0
  %825 = vdwg.mxu0
  %v826 = vadd.f32 %v823, %v45
  %v827 = vmul.f32 %v826, 0.5
  %v828 = vtanh.pop %v827
  %v829 = vmul.f32 %v828, 0.5
  %v830 = vadd.f32 %v829, 0.5
  %v831 = vtanh.pop %v826
  %v832 = vmul.f32 %v830, %v574
  %834 = vrot.lane.b32.xlu0 %v831, 64
  %v835 = vpop.permute.xlu0 %834
  %v837 = vmul.f32 %v830, %v835
  %839 = vrot.lane.b32.xlu0 %v837, 32
  %v840 = vpop.permute.xlu0 %839
  %v842 = vadd.f32 %v832, %v840
  %v843 = vtanh.pop %v842
  %845 = vrot.lane.b32.xlu0 %v843, 64
  %v846 = vpop.permute.xlu0 %845
  %v848 = vmul.f32 %v830, %v846
  %s849 = scalar_lea.vmem %s0, 6
  %v850 = vld [vmem:[%s849] sm:$0x3]
  %851 = vmatprep.subr.mxu0 0.0
  %852 = vmatpush1.msra.mxu0 0.0
  %853 = vmatprep.subr.mxu0 0.0
  %854 = vmatpush1.msra.mxu0 0.0
  %855 = vmatprep.subr.mxu0 0.0
  %856 = vmatpush1.msra.mxu0 0.0
  %857 = vmatprep.subr.mxu0 0.0
  %858 = vmatpush1.msra.mxu0 0.0
  %859 = vmatprep.subr.mxu0 0.0
  %860 = vmatpush1.msra.mxu0 0.0
  %861 = vmatprep.subr.mxu0 0.0
  %862 = vmatpush1.msra.mxu0 0.0
  %863 = vmatprep.subr.mxu0 0.0
  %864 = vmatpush1.msra.mxu0 0.0
  %865 = vmatprep.subr.mxu0 0.0
  %866 = vmatpush1.msra.mxu0 0.0
  %867 = vmatprep.subr.mxu0 0.0
  %868 = vmatpush1.msra.mxu0 0.0
  %869 = vmatprep.subr.mxu0 0.0
  %870 = vmatpush1.msra.mxu0 0.0
  %871 = vmatprep.subr.mxu0 0.0
  %872 = vmatpush1.msra.mxu0 0.0
  %873 = vmatprep.subr.mxu0 0.0
  %874 = vmatpush1.msra.mxu0 0.0
  %875 = vmatprep.subr.mxu0 0.0
  %876 = vmatpush1.msra.mxu0 %v31
  %877 = vmatprep.subr.mxu0 0.0
  %878 = vmatpush1.msra.mxu0 %v30
  %879 = vmatprep.subr.mxu0 0.0
  %880 = vmatpush1.msra.mxu0 %v29
  %881 = vmatprep.subr.mxu0 0.0
  %882 = vmatpush1.msra.mxu0 %v28
  %883 = vmatprep.subr.mxu0 0.0
  %884 = vmatpush2.msra.mxu0 0.0
  %885 = vmatprep.subr.mxu0 0.0
  %886 = vmatpush2.msra.mxu0 0.0
  %887 = vmatprep.subr.mxu0 0.0
  %888 = vmatpush2.msra.mxu0 0.0
  %889 = vmatprep.subr.mxu0 0.0
  %890 = vmatpush2.msra.mxu0 0.0
  %891 = vmatprep.subr.mxu0 0.0
  %892 = vmatpush2.msra.mxu0 0.0
  %893 = vmatprep.subr.mxu0 0.0
  %894 = vmatpush2.msra.mxu0 0.0
  %895 = vmatprep.subr.mxu0 0.0
  %896 = vmatpush2.msra.mxu0 0.0
  %897 = vmatprep.subr.mxu0 0.0
  %898 = vmatpush2.msra.mxu0 0.0
  %899 = vmatprep.subr.mxu0 0.0
  %900 = vmatpush2.msra.mxu0 0.0
  %901 = vmatprep.subr.mxu0 0.0
  %902 = vmatpush2.msra.mxu0 0.0
  %903 = vmatprep.subr.mxu0 0.0
  %904 = vmatpush2.msra.mxu0 0.0
  %905 = vmatprep.subr.mxu0 0.0
  %906 = vmatpush2.msra.mxu0 0.0
  %907 = vmatprep.subr.mxu0 0.0
  %908 = vmatpush2.msra.mxu0 0.0
  %909 = vmatprep.subr.mxu0 0.0
  %910 = vmatpush2.msra.mxu0 0.0
  %911 = vmatprep.subr.mxu0 0.0
  %912 = vmatpush2.msra.mxu0 0.0
  %913 = vmatprep.subr.mxu0 0.0
  %914 = vmatpush2.msra.mxu0 0.0
  %915 = vmatprep.mubr.f32.mxu0 0.0
  %916 = vmatmul.mubr.f32.gmra.mxu0 %v754
  %v917 = vpop.f32.mrf.mxu0
  %v918 = vadd.f32 0.0, %v917
  %v919 = vpop.f32.mrf.mxu0
  %920 = vdwg.mxu0
  %v921 = vadd.f32 %v850, %v918
  %v922 = vmul.f32 %v921, 0.5
  %v923 = vtanh.pop %v922
  %v924 = vmul.f32 %v923, 0.5
  %v925 = vadd.f32 %v924, 0.5
  %v926 = vtanh.pop %v921
  %v927 = vmul.f32 %v925, %v669
  %929 = vrot.lane.b32.xlu0 %v926, 64
  %v930 = vpop.permute.xlu0 %929
  %v932 = vmul.f32 %v925, %v930
  %934 = vrot.lane.b32.xlu0 %v932, 32
  %v935 = vpop.permute.xlu0 %934
  %v937 = vadd.f32 %v927, %v935
  %v938 = vtanh.pop %v937
  %940 = vrot.lane.b32.xlu0 %v938, 64
  %v941 = vpop.permute.xlu0 %940
  %v943 = vmul.f32 %v925, %v941
  %945 = vrot.lane.b32.xlu0 %v848, 32
  %v946 = vpop.permute.xlu0 %945
  %v947 = vsel %vm48, %v946, 0
  %949 = vmatprep.subr.mxu0 0.0
  %950 = vmatpush1.msra.mxu0 0.0
  %951 = vmatprep.subr.mxu0 0.0
  %952 = vmatpush1.msra.mxu0 0.0
  %953 = vmatprep.subr.mxu0 0.0
  %954 = vmatpush1.msra.mxu0 0.0
  %955 = vmatprep.subr.mxu0 0.0
  %956 = vmatpush1.msra.mxu0 0.0
  %957 = vmatprep.subr.mxu0 0.0
  %958 = vmatpush1.msra.mxu0 0.0
  %959 = vmatprep.subr.mxu0 0.0
  %960 = vmatpush1.msra.mxu0 0.0
  %961 = vmatprep.subr.mxu0 0.0
  %962 = vmatpush1.msra.mxu0 0.0
  %963 = vmatprep.subr.mxu0 0.0
  %964 = vmatpush1.msra.mxu0 0.0
  %965 = vmatprep.subr.mxu0 0.0
  %966 = vmatpush1.msra.mxu0 0.0
  %967 = vmatprep.subr.mxu0 0.0
  %968 = vmatpush1.msra.mxu0 0.0
  %969 = vmatprep.subr.mxu0 0.0
  %970 = vmatpush1.msra.mxu0 0.0
  %971 = vmatprep.subr.mxu0 0.0
  %972 = vmatpush1.msra.mxu0 0.0
  %973 = vmatprep.subr.mxu0 0.0
  %974 = vmatpush1.msra.mxu0 %v39
  %975 = vmatprep.subr.mxu0 0.0
  %976 = vmatpush1.msra.mxu0 %v38
  %977 = vmatprep.subr.mxu0 0.0
  %978 = vmatpush1.msra.mxu0 %v37
  %979 = vmatprep.subr.mxu0 0.0
  %980 = vmatpush1.msra.mxu0 %v36
  %981 = vmatprep.subr.mxu0 0.0
  %982 = vmatpush2.msra.mxu0 0.0
  %983 = vmatprep.subr.mxu0 0.0
  %984 = vmatpush2.msra.mxu0 0.0
  %985 = vmatprep.subr.mxu0 0.0
  %986 = vmatpush2.msra.mxu0 0.0
  %987 = vmatprep.subr.mxu0 0.0
  %988 = vmatpush2.msra.mxu0 0.0
  %989 = vmatprep.subr.mxu0 0.0
  %990 = vmatpush2.msra.mxu0 0.0
  %991 = vmatprep.subr.mxu0 0.0
  %992 = vmatpush2.msra.mxu0 0.0
  %993 = vmatprep.subr.mxu0 0.0
  %994 = vmatpush2.msra.mxu0 0.0
  %995 = vmatprep.subr.mxu0 0.0
  %996 = vmatpush2.msra.mxu0 0.0
  %997 = vmatprep.subr.mxu0 0.0
  %998 = vmatpush2.msra.mxu0 0.0
  %999 = vmatprep.subr.mxu0 0.0
  %1000 = vmatpush2.msra.mxu0 0.0
  %1001 = vmatprep.subr.mxu0 0.0
  %1002 = vmatpush2.msra.mxu0 0.0
  %1003 = vmatprep.subr.mxu0 0.0
  %1004 = vmatpush2.msra.mxu0 0.0
  %1005 = vmatprep.subr.mxu0 0.0
  %1006 = vmatpush2.msra.mxu0 0.0
  %1007 = vmatprep.subr.mxu0 0.0
  %1008 = vmatpush2.msra.mxu0 0.0
  %1009 = vmatprep.subr.mxu0 0.0
  %1010 = vmatpush2.msra.mxu0 0.0
  %1011 = vmatprep.subr.mxu0 0.0
  %1012 = vmatpush2.msra.mxu0 0.0
  %1013 = vmatprep.mubr.f32.mxu0 0.0
  %1014 = vmatmul.mubr.f32.gmra.mxu0 %v947
  %v1015 = vpop.f32.mrf.mxu0
  %v1016 = vadd.f32 0.0, %v1015
  %v1017 = vpop.f32.mrf.mxu0
  %1018 = vdwg.mxu0
  %1020 = vrot.lane.b32.xlu0 %v943, 32
  %v1021 = vpop.permute.xlu0 %1020
  %v1022 = vsel %vm48, %v1021, 0
  %1024 = vmatprep.subr.mxu0 0.0
  %1025 = vmatpush1.msra.mxu0 0.0
  %1026 = vmatprep.subr.mxu0 0.0
  %1027 = vmatpush1.msra.mxu0 0.0
  %1028 = vmatprep.subr.mxu0 0.0
  %1029 = vmatpush1.msra.mxu0 0.0
  %1030 = vmatprep.subr.mxu0 0.0
  %1031 = vmatpush1.msra.mxu0 0.0
  %1032 = vmatprep.subr.mxu0 0.0
  %1033 = vmatpush1.msra.mxu0 0.0
  %1034 = vmatprep.subr.mxu0 0.0
  %1035 = vmatpush1.msra.mxu0 0.0
  %1036 = vmatprep.subr.mxu0 0.0
  %1037 = vmatpush1.msra.mxu0 0.0
  %1038 = vmatprep.subr.mxu0 0.0
  %1039 = vmatpush1.msra.mxu0 0.0
  %1040 = vmatprep.subr.mxu0 0.0
  %1041 = vmatpush1.msra.mxu0 0.0
  %1042 = vmatprep.subr.mxu0 0.0
  %1043 = vmatpush1.msra.mxu0 0.0
  %1044 = vmatprep.subr.mxu0 0.0
  %1045 = vmatpush1.msra.mxu0 0.0
  %1046 = vmatprep.subr.mxu0 0.0
  %1047 = vmatpush1.msra.mxu0 0.0
  %1048 = vmatprep.subr.mxu0 0.0
  %1049 = vmatpush1.msra.mxu0 %v35
  %1050 = vmatprep.subr.mxu0 0.0
  %1051 = vmatpush1.msra.mxu0 %v34
  %1052 = vmatprep.subr.mxu0 0.0
  %1053 = vmatpush1.msra.mxu0 %v33
  %1054 = vmatprep.subr.mxu0 0.0
  %1055 = vmatpush1.msra.mxu0 %v32
  %1056 = vmatprep.subr.mxu0 0.0
  %1057 = vmatpush2.msra.mxu0 0.0
  %1058 = vmatprep.subr.mxu0 0.0
  %1059 = vmatpush2.msra.mxu0 0.0
  %1060 = vmatprep.subr.mxu0 0.0
  %1061 = vmatpush2.msra.mxu0 0.0
  %1062 = vmatprep.subr.mxu0 0.0
  %1063 = vmatpush2.msra.mxu0 0.0
  %1064 = vmatprep.subr.mxu0 0.0
  %1065 = vmatpush2.msra.mxu0 0.0
  %1066 = vmatprep.subr.mxu0 0.0
  %1067 = vmatpush2.msra.mxu0 0.0
  %1068 = vmatprep.subr.mxu0 0.0
  %1069 = vmatpush2.msra.mxu0 0.0
  %1070 = vmatprep.subr.mxu0 0.0
  %1071 = vmatpush2.msra.mxu0 0.0
  %1072 = vmatprep.subr.mxu0 0.0
  %1073 = vmatpush2.msra.mxu0 0.0
  %1074 = vmatprep.subr.mxu0 0.0
  %1075 = vmatpush2.msra.mxu0 0.0
  %1076 = vmatprep.subr.mxu0 0.0
  %1077 = vmatpush2.msra.mxu0 0.0
  %1078 = vmatprep.subr.mxu0 0.0
  %1079 = vmatpush2.msra.mxu0 0.0
  %1080 = vmatprep.subr.mxu0 0.0
  %1081 = vmatpush2.msra.mxu0 0.0
  %1082 = vmatprep.subr.mxu0 0.0
  %1083 = vmatpush2.msra.mxu0 0.0
  %1084 = vmatprep.subr.mxu0 0.0
  %1085 = vmatpush2.msra.mxu0 0.0
  %1086 = vmatprep.subr.mxu0 0.0
  %1087 = vmatpush2.msra.mxu0 0.0
  %1088 = vmatprep.mubr.f32.mxu0 0.0
  %1089 = vmatmul.mubr.f32.gmra.mxu0 %v1022
  %v1090 = vpop.f32.mrf.mxu0
  %v1091 = vadd.f32 %v1016, %v1090
  %v1092 = vpop.f32.mrf.mxu0
  %1093 = vdwg.mxu0
  %v1094 = vadd.f32 %v1091, %v45
  %v1095 = vmul.f32 %v1094, 0.5
  %v1096 = vtanh.pop %v1095
  %v1097 = vmul.f32 %v1096, 0.5
  %v1098 = vadd.f32 %v1097, 0.5
  %v1099 = vtanh.pop %v1094
  %v1100 = vmul.f32 %v1098, %v842
  %1102 = vrot.lane.b32.xlu0 %v1099, 64
  %v1103 = vpop.permute.xlu0 %1102
  %v1105 = vmul.f32 %v1098, %v1103
  %1107 = vrot.lane.b32.xlu0 %v1105, 32
  %v1108 = vpop.permute.xlu0 %1107
  %v1110 = vadd.f32 %v1100, %v1108
  %v1111 = vtanh.pop %v1110
  %1113 = vrot.lane.b32.xlu0 %v1111, 64
  %v1114 = vpop.permute.xlu0 %1113
  %v1116 = vmul.f32 %v1098, %v1114
  %s1117 = scalar_lea.vmem %s0, 8
  %v1118 = vld [vmem:[%s1117] sm:$0x3]
  %1119 = vmatprep.subr.mxu0 0.0
  %1120 = vmatpush1.msra.mxu0 0.0
  %1121 = vmatprep.subr.mxu0 0.0
  %1122 = vmatpush1.msra.mxu0 0.0
  %1123 = vmatprep.subr.mxu0 0.0
  %1124 = vmatpush1.msra.mxu0 0.0
  %1125 = vmatprep.subr.mxu0 0.0
  %1126 = vmatpush1.msra.mxu0 0.0
  %1127 = vmatprep.subr.mxu0 0.0
  %1128 = vmatpush1.msra.mxu0 0.0
  %1129 = vmatprep.subr.mxu0 0.0
  %1130 = vmatpush1.msra.mxu0 0.0
  %1131 = vmatprep.subr.mxu0 0.0
  %1132 = vmatpush1.msra.mxu0 0.0
  %1133 = vmatprep.subr.mxu0 0.0
  %1134 = vmatpush1.msra.mxu0 0.0
  %1135 = vmatprep.subr.mxu0 0.0
  %1136 = vmatpush1.msra.mxu0 0.0
  %1137 = vmatprep.subr.mxu0 0.0
  %1138 = vmatpush1.msra.mxu0 0.0
  %1139 = vmatprep.subr.mxu0 0.0
  %1140 = vmatpush1.msra.mxu0 0.0
  %1141 = vmatprep.subr.mxu0 0.0
  %1142 = vmatpush1.msra.mxu0 0.0
  %1143 = vmatprep.subr.mxu0 0.0
  %1144 = vmatpush1.msra.mxu0 %v31
  %1145 = vmatprep.subr.mxu0 0.0
  %1146 = vmatpush1.msra.mxu0 %v30
  %1147 = vmatprep.subr.mxu0 0.0
  %1148 = vmatpush1.msra.mxu0 %v29
  %1149 = vmatprep.subr.mxu0 0.0
  %1150 = vmatpush1.msra.mxu0 %v28
  %1151 = vmatprep.subr.mxu0 0.0
  %1152 = vmatpush2.msra.mxu0 0.0
  %1153 = vmatprep.subr.mxu0 0.0
  %1154 = vmatpush2.msra.mxu0 0.0
  %1155 = vmatprep.subr.mxu0 0.0
  %1156 = vmatpush2.msra.mxu0 0.0
  %1157 = vmatprep.subr.mxu0 0.0
  %1158 = vmatpush2.msra.mxu0 0.0
  %1159 = vmatprep.subr.mxu0 0.0
  %1160 = vmatpush2.msra.mxu0 0.0
  %1161 = vmatprep.subr.mxu0 0.0
  %1162 = vmatpush2.msra.mxu0 0.0
  %1163 = vmatprep.subr.mxu0 0.0
  %1164 = vmatpush2.msra.mxu0 0.0
  %1165 = vmatprep.subr.mxu0 0.0
  %1166 = vmatpush2.msra.mxu0 0.0
  %1167 = vmatprep.subr.mxu0 0.0
  %1168 = vmatpush2.msra.mxu0 0.0
  %1169 = vmatprep.subr.mxu0 0.0
  %1170 = vmatpush2.msra.mxu0 0.0
  %1171 = vmatprep.subr.mxu0 0.0
  %1172 = vmatpush2.msra.mxu0 0.0
  %1173 = vmatprep.subr.mxu0 0.0
  %1174 = vmatpush2.msra.mxu0 0.0
  %1175 = vmatprep.subr.mxu0 0.0
  %1176 = vmatpush2.msra.mxu0 0.0
  %1177 = vmatprep.subr.mxu0 0.0
  %1178 = vmatpush2.msra.mxu0 0.0
  %1179 = vmatprep.subr.mxu0 0.0
  %1180 = vmatpush2.msra.mxu0 0.0
  %1181 = vmatprep.subr.mxu0 0.0
  %1182 = vmatpush2.msra.mxu0 0.0
  %1183 = vmatprep.mubr.f32.mxu0 0.0
  %1184 = vmatmul.mubr.f32.gmra.mxu0 %v1022
  %v1185 = vpop.f32.mrf.mxu0
  %v1186 = vadd.f32 0.0, %v1185
  %v1187 = vpop.f32.mrf.mxu0
  %1188 = vdwg.mxu0
  %v1189 = vadd.f32 %v1118, %v1186
  %v1190 = vmul.f32 %v1189, 0.5
  %v1191 = vtanh.pop %v1190
  %v1192 = vmul.f32 %v1191, 0.5
  %v1193 = vadd.f32 %v1192, 0.5
  %v1194 = vtanh.pop %v1189
  %v1195 = vmul.f32 %v1193, %v937
  %1197 = vrot.lane.b32.xlu0 %v1194, 64
  %v1198 = vpop.permute.xlu0 %1197
  %v1200 = vmul.f32 %v1193, %v1198
  %1202 = vrot.lane.b32.xlu0 %v1200, 32
  %v1203 = vpop.permute.xlu0 %1202
  %v1205 = vadd.f32 %v1195, %v1203
  %v1206 = vtanh.pop %v1205
  %1208 = vrot.lane.b32.xlu0 %v1206, 64
  %v1209 = vpop.permute.xlu0 %1208
  %v1211 = vmul.f32 %v1193, %v1209
  %1213 = vrot.lane.b32.xlu0 %v1116, 32
  %v1214 = vpop.permute.xlu0 %1213
  %v1215 = vsel %vm48, %v1214, 0
  %1217 = vmatprep.subr.mxu0 0.0
  %1218 = vmatpush1.msra.mxu0 0.0
  %1219 = vmatprep.subr.mxu0 0.0
  %1220 = vmatpush1.msra.mxu0 0.0
  %1221 = vmatprep.subr.mxu0 0.0
  %1222 = vmatpush1.msra.mxu0 0.0
  %1223 = vmatprep.subr.mxu0 0.0
  %1224 = vmatpush1.msra.mxu0 0.0
  %1225 = vmatprep.subr.mxu0 0.0
  %1226 = vmatpush1.msra.mxu0 0.0
  %1227 = vmatprep.subr.mxu0 0.0
  %1228 = vmatpush1.msra.mxu0 0.0
  %1229 = vmatprep.subr.mxu0 0.0
  %1230 = vmatpush1.msra.mxu0 0.0
  %1231 = vmatprep.subr.mxu0 0.0
  %1232 = vmatpush1.msra.mxu0 0.0
  %1233 = vmatprep.subr.mxu0 0.0
  %1234 = vmatpush1.msra.mxu0 0.0
  %1235 = vmatprep.subr.mxu0 0.0
  %1236 = vmatpush1.msra.mxu0 0.0
  %1237 = vmatprep.subr.mxu0 0.0
  %1238 = vmatpush1.msra.mxu0 0.0
  %1239 = vmatprep.subr.mxu0 0.0
  %1240 = vmatpush1.msra.mxu0 0.0
  %1241 = vmatprep.subr.mxu0 0.0
  %1242 = vmatpush1.msra.mxu0 %v39
  %1243 = vmatprep.subr.mxu0 0.0
  %1244 = vmatpush1.msra.mxu0 %v38
  %1245 = vmatprep.subr.mxu0 0.0
  %1246 = vmatpush1.msra.mxu0 %v37
  %1247 = vmatprep.subr.mxu0 0.0
  %1248 = vmatpush1.msra.mxu0 %v36
  %1249 = vmatprep.subr.mxu0 0.0
  %1250 = vmatpush2.msra.mxu0 0.0
  %1251 = vmatprep.subr.mxu0 0.0
  %1252 = vmatpush2.msra.mxu0 0.0
  %1253 = vmatprep.subr.mxu0 0.0
  %1254 = vmatpush2.msra.mxu0 0.0
  %1255 = vmatprep.subr.mxu0 0.0
  %1256 = vmatpush2.msra.mxu0 0.0
  %1257 = vmatprep.subr.mxu0 0.0
  %1258 = vmatpush2.msra.mxu0 0.0
  %1259 = vmatprep.subr.mxu0 0.0
  %1260 = vmatpush2.msra.mxu0 0.0
  %1261 = vmatprep.subr.mxu0 0.0
  %1262 = vmatpush2.msra.mxu0 0.0
  %1263 = vmatprep.subr.mxu0 0.0
  %1264 = vmatpush2.msra.mxu0 0.0
  %1265 = vmatprep.subr.mxu0 0.0
  %1266 = vmatpush2.msra.mxu0 0.0
  %1267 = vmatprep.subr.mxu0 0.0
  %1268 = vmatpush2.msra.mxu0 0.0
  %1269 = vmatprep.subr.mxu0 0.0
  %1270 = vmatpush2.msra.mxu0 0.0
  %1271 = vmatprep.subr.mxu0 0.0
  %1272 = vmatpush2.msra.mxu0 0.0
  %1273 = vmatprep.subr.mxu0 0.0
  %1274 = vmatpush2.msra.mxu0 0.0
  %1275 = vmatprep.subr.mxu0 0.0
  %1276 = vmatpush2.msra.mxu0 0.0
  %1277 = vmatprep.subr.mxu0 0.0
  %1278 = vmatpush2.msra.mxu0 0.0
  %1279 = vmatprep.subr.mxu0 0.0
  %1280 = vmatpush2.msra.mxu0 0.0
  %1281 = vmatprep.mubr.f32.mxu0 0.0
  %1282 = vmatmul.mubr.f32.gmra.mxu0 %v1215
  %v1283 = vpop.f32.mrf.mxu0
  %v1284 = vadd.f32 0.0, %v1283
  %v1285 = vpop.f32.mrf.mxu0
  %1286 = vdwg.mxu0
  %1288 = vrot.lane.b32.xlu0 %v1211, 32
  %v1289 = vpop.permute.xlu0 %1288
  %v1290 = vsel %vm48, %v1289, 0
  %1292 = vmatprep.subr.mxu0 0.0
  %1293 = vmatpush1.msra.mxu0 0.0
  %1294 = vmatprep.subr.mxu0 0.0
  %1295 = vmatpush1.msra.mxu0 0.0
  %1296 = vmatprep.subr.mxu0 0.0
  %1297 = vmatpush1.msra.mxu0 0.0
  %1298 = vmatprep.subr.mxu0 0.0
  %1299 = vmatpush1.msra.mxu0 0.0
  %1300 = vmatprep.subr.mxu0 0.0
  %1301 = vmatpush1.msra.mxu0 0.0
  %1302 = vmatprep.subr.mxu0 0.0
  %1303 = vmatpush1.msra.mxu0 0.0
  %1304 = vmatprep.subr.mxu0 0.0
  %1305 = vmatpush1.msra.mxu0 0.0
  %1306 = vmatprep.subr.mxu0 0.0
  %1307 = vmatpush1.msra.mxu0 0.0
  %1308 = vmatprep.subr.mxu0 0.0
  %1309 = vmatpush1.msra.mxu0 0.0
  %1310 = vmatprep.subr.mxu0 0.0
  %1311 = vmatpush1.msra.mxu0 0.0
  %1312 = vmatprep.subr.mxu0 0.0
  %1313 = vmatpush1.msra.mxu0 0.0
  %1314 = vmatprep.subr.mxu0 0.0
  %1315 = vmatpush1.msra.mxu0 0.0
  %1316 = vmatprep.subr.mxu0 0.0
  %1317 = vmatpush1.msra.mxu0 %v35
  %1318 = vmatprep.subr.mxu0 0.0
  %1319 = vmatpush1.msra.mxu0 %v34
  %1320 = vmatprep.subr.mxu0 0.0
  %1321 = vmatpush1.msra.mxu0 %v33
  %1322 = vmatprep.subr.mxu0 0.0
  %1323 = vmatpush1.msra.mxu0 %v32
  %1324 = vmatprep.subr.mxu0 0.0
  %1325 = vmatpush2.msra.mxu0 0.0
  %1326 = vmatprep.subr.mxu0 0.0
  %1327 = vmatpush2.msra.mxu0 0.0
  %1328 = vmatprep.subr.mxu0 0.0
  %1329 = vmatpush2.msra.mxu0 0.0
  %1330 = vmatprep.subr.mxu0 0.0
  %1331 = vmatpush2.msra.mxu0 0.0
  %1332 = vmatprep.subr.mxu0 0.0
  %1333 = vmatpush2.msra.mxu0 0.0
  %1334 = vmatprep.subr.mxu0 0.0
  %1335 = vmatpush2.msra.mxu0 0.0
  %1336 = vmatprep.subr.mxu0 0.0
  %1337 = vmatpush2.msra.mxu0 0.0
  %1338 = vmatprep.subr.mxu0 0.0
  %1339 = vmatpush2.msra.mxu0 0.0
  %1340 = vmatprep.subr.mxu0 0.0
  %1341 = vmatpush2.msra.mxu0 0.0
  %1342 = vmatprep.subr.mxu0 0.0
  %1343 = vmatpush2.msra.mxu0 0.0
  %1344 = vmatprep.subr.mxu0 0.0
  %1345 = vmatpush2.msra.mxu0 0.0
  %1346 = vmatprep.subr.mxu0 0.0
  %1347 = vmatpush2.msra.mxu0 0.0
  %1348 = vmatprep.subr.mxu0 0.0
  %1349 = vmatpush2.msra.mxu0 0.0
  %1350 = vmatprep.subr.mxu0 0.0
  %1351 = vmatpush2.msra.mxu0 0.0
  %1352 = vmatprep.subr.mxu0 0.0
  %1353 = vmatpush2.msra.mxu0 0.0
  %1354 = vmatprep.subr.mxu0 0.0
  %1355 = vmatpush2.msra.mxu0 0.0
  %1356 = vmatprep.mubr.f32.mxu0 0.0
  %1357 = vmatmul.mubr.f32.gmra.mxu0 %v1290
  %v1358 = vpop.f32.mrf.mxu0
  %v1359 = vadd.f32 %v1284, %v1358
  %v1360 = vpop.f32.mrf.mxu0
  %1361 = vdwg.mxu0
  %v1362 = vadd.f32 %v1359, %v45
  %v1363 = vmul.f32 %v1362, 0.5
  %v1364 = vtanh.pop %v1363
  %v1365 = vmul.f32 %v1364, 0.5
  %v1366 = vadd.f32 %v1365, 0.5
  %v1367 = vtanh.pop %v1362
  %v1368 = vmul.f32 %v1366, %v1110
  %1370 = vrot.lane.b32.xlu0 %v1367, 64
  %v1371 = vpop.permute.xlu0 %1370
  %v1373 = vmul.f32 %v1366, %v1371
  %1375 = vrot.lane.b32.xlu0 %v1373, 32
  %v1376 = vpop.permute.xlu0 %1375
  %v1378 = vadd.f32 %v1368, %v1376
  %v1379 = vtanh.pop %v1378
  %1381 = vrot.lane.b32.xlu0 %v1379, 64
  %v1382 = vpop.permute.xlu0 %1381
  %v1384 = vmul.f32 %v1366, %v1382
  %s1385 = scalar_lea.vmem %s0, 10
  %v1386 = vld [vmem:[%s1385] sm:$0x3]
  %1387 = vmatprep.subr.mxu0 0.0
  %1388 = vmatpush1.msra.mxu0 0.0
  %1389 = vmatprep.subr.mxu0 0.0
  %1390 = vmatpush1.msra.mxu0 0.0
  %1391 = vmatprep.subr.mxu0 0.0
  %1392 = vmatpush1.msra.mxu0 0.0
  %1393 = vmatprep.subr.mxu0 0.0
  %1394 = vmatpush1.msra.mxu0 0.0
  %1395 = vmatprep.subr.mxu0 0.0
  %1396 = vmatpush1.msra.mxu0 0.0
  %1397 = vmatprep.subr.mxu0 0.0
  %1398 = vmatpush1.msra.mxu0 0.0
  %1399 = vmatprep.subr.mxu0 0.0
  %1400 = vmatpush1.msra.mxu0 0.0
  %1401 = vmatprep.subr.mxu0 0.0
  %1402 = vmatpush1.msra.mxu0 0.0
  %1403 = vmatprep.subr.mxu0 0.0
  %1404 = vmatpush1.msra.mxu0 0.0
  %1405 = vmatprep.subr.mxu0 0.0
  %1406 = vmatpush1.msra.mxu0 0.0
  %1407 = vmatprep.subr.mxu0 0.0
  %1408 = vmatpush1.msra.mxu0 0.0
  %1409 = vmatprep.subr.mxu0 0.0
  %1410 = vmatpush1.msra.mxu0 0.0
  %1411 = vmatprep.subr.mxu0 0.0
  %1412 = vmatpush1.msra.mxu0 %v31
  %1413 = vmatprep.subr.mxu0 0.0
  %1414 = vmatpush1.msra.mxu0 %v30
  %1415 = vmatprep.subr.mxu0 0.0
  %1416 = vmatpush1.msra.mxu0 %v29
  %1417 = vmatprep.subr.mxu0 0.0
  %1418 = vmatpush1.msra.mxu0 %v28
  %1419 = vmatprep.subr.mxu0 0.0
  %1420 = vmatpush2.msra.mxu0 0.0
  %1421 = vmatprep.subr.mxu0 0.0
  %1422 = vmatpush2.msra.mxu0 0.0
  %1423 = vmatprep.subr.mxu0 0.0
  %1424 = vmatpush2.msra.mxu0 0.0
  %1425 = vmatprep.subr.mxu0 0.0
  %1426 = vmatpush2.msra.mxu0 0.0
  %1427 = vmatprep.subr.mxu0 0.0
  %1428 = vmatpush2.msra.mxu0 0.0
  %1429 = vmatprep.subr.mxu0 0.0
  %1430 = vmatpush2.msra.mxu0 0.0
  %1431 = vmatprep.subr.mxu0 0.0
  %1432 = vmatpush2.msra.mxu0 0.0
  %1433 = vmatprep.subr.mxu0 0.0
  %1434 = vmatpush2.msra.mxu0 0.0
  %1435 = vmatprep.subr.mxu0 0.0
  %1436 = vmatpush2.msra.mxu0 0.0
  %1437 = vmatprep.subr.mxu0 0.0
  %1438 = vmatpush2.msra.mxu0 0.0
  %1439 = vmatprep.subr.mxu0 0.0
  %1440 = vmatpush2.msra.mxu0 0.0
  %1441 = vmatprep.subr.mxu0 0.0
  %1442 = vmatpush2.msra.mxu0 0.0
  %1443 = vmatprep.subr.mxu0 0.0
  %1444 = vmatpush2.msra.mxu0 0.0
  %1445 = vmatprep.subr.mxu0 0.0
  %1446 = vmatpush2.msra.mxu0 0.0
  %1447 = vmatprep.subr.mxu0 0.0
  %1448 = vmatpush2.msra.mxu0 0.0
  %1449 = vmatprep.subr.mxu0 0.0
  %1450 = vmatpush2.msra.mxu0 0.0
  %1451 = vmatprep.mubr.f32.mxu0 0.0
  %1452 = vmatmul.mubr.f32.gmra.mxu0 %v1290
  %v1453 = vpop.f32.mrf.mxu0
  %v1454 = vadd.f32 0.0, %v1453
  %v1455 = vpop.f32.mrf.mxu0
  %1456 = vdwg.mxu0
  %v1457 = vadd.f32 %v1386, %v1454
  %v1458 = vmul.f32 %v1457, 0.5
  %v1459 = vtanh.pop %v1458
  %v1460 = vmul.f32 %v1459, 0.5
  %v1461 = vadd.f32 %v1460, 0.5
  %v1462 = vtanh.pop %v1457
  %v1463 = vmul.f32 %v1461, %v1205
  %1465 = vrot.lane.b32.xlu0 %v1462, 64
  %v1466 = vpop.permute.xlu0 %1465
  %v1468 = vmul.f32 %v1461, %v1466
  %1470 = vrot.lane.b32.xlu0 %v1468, 32
  %v1471 = vpop.permute.xlu0 %1470
  %v1473 = vadd.f32 %v1463, %v1471
  %v1474 = vtanh.pop %v1473
  %1476 = vrot.lane.b32.xlu0 %v1474, 64
  %v1477 = vpop.permute.xlu0 %1476
  %v1479 = vmul.f32 %v1461, %v1477
  %1481 = vrot.lane.b32.xlu0 %v1384, 32
  %v1482 = vpop.permute.xlu0 %1481
  %v1483 = vsel %vm48, %v1482, 0
  %1485 = vmatprep.subr.mxu0 0.0
  %1486 = vmatpush1.msra.mxu0 0.0
  %1487 = vmatprep.subr.mxu0 0.0
  %1488 = vmatpush1.msra.mxu0 0.0
  %1489 = vmatprep.subr.mxu0 0.0
  %1490 = vmatpush1.msra.mxu0 0.0
  %1491 = vmatprep.subr.mxu0 0.0
  %1492 = vmatpush1.msra.mxu0 0.0
  %1493 = vmatprep.subr.mxu0 0.0
  %1494 = vmatpush1.msra.mxu0 0.0
  %1495 = vmatprep.subr.mxu0 0.0
  %1496 = vmatpush1.msra.mxu0 0.0
  %1497 = vmatprep.subr.mxu0 0.0
  %1498 = vmatpush1.msra.mxu0 0.0
  %1499 = vmatprep.subr.mxu0 0.0
  %1500 = vmatpush1.msra.mxu0 0.0
  %1501 = vmatprep.subr.mxu0 0.0
  %1502 = vmatpush1.msra.mxu0 0.0
  %1503 = vmatprep.subr.mxu0 0.0
  %1504 = vmatpush1.msra.mxu0 0.0
  %1505 = vmatprep.subr.mxu0 0.0
  %1506 = vmatpush1.msra.mxu0 0.0
  %1507 = vmatprep.subr.mxu0 0.0
  %1508 = vmatpush1.msra.mxu0 0.0
  %1509 = vmatprep.subr.mxu0 0.0
  %1510 = vmatpush1.msra.mxu0 %v39
  %1511 = vmatprep.subr.mxu0 0.0
  %1512 = vmatpush1.msra.mxu0 %v38
  %1513 = vmatprep.subr.mxu0 0.0
  %1514 = vmatpush1.msra.mxu0 %v37
  %1515 = vmatprep.subr.mxu0 0.0
  %1516 = vmatpush1.msra.mxu0 %v36
  %1517 = vmatprep.subr.mxu0 0.0
  %1518 = vmatpush2.msra.mxu0 0.0
  %1519 = vmatprep.subr.mxu0 0.0
  %1520 = vmatpush2.msra.mxu0 0.0
  %1521 = vmatprep.subr.mxu0 0.0
  %1522 = vmatpush2.msra.mxu0 0.0
  %1523 = vmatprep.subr.mxu0 0.0
  %1524 = vmatpush2.msra.mxu0 0.0
  %1525 = vmatprep.subr.mxu0 0.0
  %1526 = vmatpush2.msra.mxu0 0.0
  %1527 = vmatprep.subr.mxu0 0.0
  %1528 = vmatpush2.msra.mxu0 0.0
  %1529 = vmatprep.subr.mxu0 0.0
  %1530 = vmatpush2.msra.mxu0 0.0
  %1531 = vmatprep.subr.mxu0 0.0
  %1532 = vmatpush2.msra.mxu0 0.0
  %1533 = vmatprep.subr.mxu0 0.0
  %1534 = vmatpush2.msra.mxu0 0.0
  %1535 = vmatprep.subr.mxu0 0.0
  %1536 = vmatpush2.msra.mxu0 0.0
  %1537 = vmatprep.subr.mxu0 0.0
  %1538 = vmatpush2.msra.mxu0 0.0
  %1539 = vmatprep.subr.mxu0 0.0
  %1540 = vmatpush2.msra.mxu0 0.0
  %1541 = vmatprep.subr.mxu0 0.0
  %1542 = vmatpush2.msra.mxu0 0.0
  %1543 = vmatprep.subr.mxu0 0.0
  %1544 = vmatpush2.msra.mxu0 0.0
  %1545 = vmatprep.subr.mxu0 0.0
  %1546 = vmatpush2.msra.mxu0 0.0
  %1547 = vmatprep.subr.mxu0 0.0
  %1548 = vmatpush2.msra.mxu0 0.0
  %1549 = vmatprep.mubr.f32.mxu0 0.0
  %1550 = vmatmul.mubr.f32.gmra.mxu0 %v1483
  %v1551 = vpop.f32.mrf.mxu0
  %v1552 = vadd.f32 0.0, %v1551
  %v1553 = vpop.f32.mrf.mxu0
  %1554 = vdwg.mxu0
  %1556 = vrot.lane.b32.xlu0 %v1479, 32
  %v1557 = vpop.permute.xlu0 %1556
  %v1558 = vsel %vm48, %v1557, 0
  %1560 = vmatprep.subr.mxu0 0.0
  %1561 = vmatpush1.msra.mxu0 0.0
  %1562 = vmatprep.subr.mxu0 0.0
  %1563 = vmatpush1.msra.mxu0 0.0
  %1564 = vmatprep.subr.mxu0 0.0
  %1565 = vmatpush1.msra.mxu0 0.0
  %1566 = vmatprep.subr.mxu0 0.0
  %1567 = vmatpush1.msra.mxu0 0.0
  %1568 = vmatprep.subr.mxu0 0.0
  %1569 = vmatpush1.msra.mxu0 0.0
  %1570 = vmatprep.subr.mxu0 0.0
  %1571 = vmatpush1.msra.mxu0 0.0
  %1572 = vmatprep.subr.mxu0 0.0
  %1573 = vmatpush1.msra.mxu0 0.0
  %1574 = vmatprep.subr.mxu0 0.0
  %1575 = vmatpush1.msra.mxu0 0.0
  %1576 = vmatprep.subr.mxu0 0.0
  %1577 = vmatpush1.msra.mxu0 0.0
  %1578 = vmatprep.subr.mxu0 0.0
  %1579 = vmatpush1.msra.mxu0 0.0
  %1580 = vmatprep.subr.mxu0 0.0
  %1581 = vmatpush1.msra.mxu0 0.0
  %1582 = vmatprep.subr.mxu0 0.0
  %1583 = vmatpush1.msra.mxu0 0.0
  %1584 = vmatprep.subr.mxu0 0.0
  %1585 = vmatpush1.msra.mxu0 %v35
  %1586 = vmatprep.subr.mxu0 0.0
  %1587 = vmatpush1.msra.mxu0 %v34
  %1588 = vmatprep.subr.mxu0 0.0
  %1589 = vmatpush1.msra.mxu0 %v33
  %1590 = vmatprep.subr.mxu0 0.0
  %1591 = vmatpush1.msra.mxu0 %v32
  %1592 = vmatprep.subr.mxu0 0.0
  %1593 = vmatpush2.msra.mxu0 0.0
  %1594 = vmatprep.subr.mxu0 0.0
  %1595 = vmatpush2.msra.mxu0 0.0
  %1596 = vmatprep.subr.mxu0 0.0
  %1597 = vmatpush2.msra.mxu0 0.0
  %1598 = vmatprep.subr.mxu0 0.0
  %1599 = vmatpush2.msra.mxu0 0.0
  %1600 = vmatprep.subr.mxu0 0.0
  %1601 = vmatpush2.msra.mxu0 0.0
  %1602 = vmatprep.subr.mxu0 0.0
  %1603 = vmatpush2.msra.mxu0 0.0
  %1604 = vmatprep.subr.mxu0 0.0
  %1605 = vmatpush2.msra.mxu0 0.0
  %1606 = vmatprep.subr.mxu0 0.0
  %1607 = vmatpush2.msra.mxu0 0.0
  %1608 = vmatprep.subr.mxu0 0.0
  %1609 = vmatpush2.msra.mxu0 0.0
  %1610 = vmatprep.subr.mxu0 0.0
  %1611 = vmatpush2.msra.mxu0 0.0
  %1612 = vmatprep.subr.mxu0 0.0
  %1613 = vmatpush2.msra.mxu0 0.0
  %1614 = vmatprep.subr.mxu0 0.0
  %1615 = vmatpush2.msra.mxu0 0.0
  %1616 = vmatprep.subr.mxu0 0.0
  %1617 = vmatpush2.msra.mxu0 0.0
  %1618 = vmatprep.subr.mxu0 0.0
  %1619 = vmatpush2.msra.mxu0 0.0
  %1620 = vmatprep.subr.mxu0 0.0
  %1621 = vmatpush2.msra.mxu0 0.0
  %1622 = vmatprep.subr.mxu0 0.0
  %1623 = vmatpush2.msra.mxu0 0.0
  %1624 = vmatprep.mubr.f32.mxu0 0.0
  %1625 = vmatmul.mubr.f32.gmra.mxu0 %v1558
  %v1626 = vpop.f32.mrf.mxu0
  %v1627 = vadd.f32 %v1552, %v1626
  %v1628 = vpop.f32.mrf.mxu0
  %1629 = vdwg.mxu0
  %v1630 = vadd.f32 %v1627, %v45
  %v1631 = vmul.f32 %v1630, 0.5
  %v1632 = vtanh.pop %v1631
  %v1633 = vmul.f32 %v1632, 0.5
  %v1634 = vadd.f32 %v1633, 0.5
  %v1635 = vtanh.pop %v1630
  %v1636 = vmul.f32 %v1634, %v1378
  %1638 = vrot.lane.b32.xlu0 %v1635, 64
  %v1639 = vpop.permute.xlu0 %1638
  %v1641 = vmul.f32 %v1634, %v1639
  %1643 = vrot.lane.b32.xlu0 %v1641, 32
  %v1644 = vpop.permute.xlu0 %1643
  %v1646 = vadd.f32 %v1636, %v1644
  %v1647 = vtanh.pop %v1646
  %1649 = vrot.lane.b32.xlu0 %v1647, 64
  %v1650 = vpop.permute.xlu0 %1649
  %v1652 = vmul.f32 %v1634, %v1650
  %s1653 = scalar_lea.vmem %s0, 12
  %v1654 = vld [vmem:[%s1653] sm:$0x3]
  %1655 = vmatprep.subr.mxu0 0.0
  %1656 = vmatpush1.msra.mxu0 0.0
  %1657 = vmatprep.subr.mxu0 0.0
  %1658 = vmatpush1.msra.mxu0 0.0
  %1659 = vmatprep.subr.mxu0 0.0
  %1660 = vmatpush1.msra.mxu0 0.0
  %1661 = vmatprep.subr.mxu0 0.0
  %1662 = vmatpush1.msra.mxu0 0.0
  %1663 = vmatprep.subr.mxu0 0.0
  %1664 = vmatpush1.msra.mxu0 0.0
  %1665 = vmatprep.subr.mxu0 0.0
  %1666 = vmatpush1.msra.mxu0 0.0
  %1667 = vmatprep.subr.mxu0 0.0
  %1668 = vmatpush1.msra.mxu0 0.0
  %1669 = vmatprep.subr.mxu0 0.0
  %1670 = vmatpush1.msra.mxu0 0.0
  %1671 = vmatprep.subr.mxu0 0.0
  %1672 = vmatpush1.msra.mxu0 0.0
  %1673 = vmatprep.subr.mxu0 0.0
  %1674 = vmatpush1.msra.mxu0 0.0
  %1675 = vmatprep.subr.mxu0 0.0
  %1676 = vmatpush1.msra.mxu0 0.0
  %1677 = vmatprep.subr.mxu0 0.0
  %1678 = vmatpush1.msra.mxu0 0.0
  %1679 = vmatprep.subr.mxu0 0.0
  %1680 = vmatpush1.msra.mxu0 %v31
  %1681 = vmatprep.subr.mxu0 0.0
  %1682 = vmatpush1.msra.mxu0 %v30
  %1683 = vmatprep.subr.mxu0 0.0
  %1684 = vmatpush1.msra.mxu0 %v29
  %1685 = vmatprep.subr.mxu0 0.0
  %1686 = vmatpush1.msra.mxu0 %v28
  %1687 = vmatprep.subr.mxu0 0.0
  %1688 = vmatpush2.msra.mxu0 0.0
  %1689 = vmatprep.subr.mxu0 0.0
  %1690 = vmatpush2.msra.mxu0 0.0
  %1691 = vmatprep.subr.mxu0 0.0
  %1692 = vmatpush2.msra.mxu0 0.0
  %1693 = vmatprep.subr.mxu0 0.0
  %1694 = vmatpush2.msra.mxu0 0.0
  %1695 = vmatprep.subr.mxu0 0.0
  %1696 = vmatpush2.msra.mxu0 0.0
  %1697 = vmatprep.subr.mxu0 0.0
  %1698 = vmatpush2.msra.mxu0 0.0
  %1699 = vmatprep.subr.mxu0 0.0
  %1700 = vmatpush2.msra.mxu0 0.0
  %1701 = vmatprep.subr.mxu0 0.0
  %1702 = vmatpush2.msra.mxu0 0.0
  %1703 = vmatprep.subr.mxu0 0.0
  %1704 = vmatpush2.msra.mxu0 0.0
  %1705 = vmatprep.subr.mxu0 0.0
  %1706 = vmatpush2.msra.mxu0 0.0
  %1707 = vmatprep.subr.mxu0 0.0
  %1708 = vmatpush2.msra.mxu0 0.0
  %1709 = vmatprep.subr.mxu0 0.0
  %1710 = vmatpush2.msra.mxu0 0.0
  %1711 = vmatprep.subr.mxu0 0.0
  %1712 = vmatpush2.msra.mxu0 0.0
  %1713 = vmatprep.subr.mxu0 0.0
  %1714 = vmatpush2.msra.mxu0 0.0
  %1715 = vmatprep.subr.mxu0 0.0
  %1716 = vmatpush2.msra.mxu0 0.0
  %1717 = vmatprep.subr.mxu0 0.0
  %1718 = vmatpush2.msra.mxu0 0.0
  %1719 = vmatprep.mubr.f32.mxu0 0.0
  %1720 = vmatmul.mubr.f32.gmra.mxu0 %v1558
  %v1721 = vpop.f32.mrf.mxu0
  %v1722 = vadd.f32 0.0, %v1721
  %v1723 = vpop.f32.mrf.mxu0
  %1724 = vdwg.mxu0
  %v1725 = vadd.f32 %v1654, %v1722
  %v1726 = vmul.f32 %v1725, 0.5
  %v1727 = vtanh.pop %v1726
  %v1728 = vmul.f32 %v1727, 0.5
  %v1729 = vadd.f32 %v1728, 0.5
  %v1730 = vtanh.pop %v1725
  %v1731 = vmul.f32 %v1729, %v1473
  %1733 = vrot.lane.b32.xlu0 %v1730, 64
  %v1734 = vpop.permute.xlu0 %1733
  %v1736 = vmul.f32 %v1729, %v1734
  %1738 = vrot.lane.b32.xlu0 %v1736, 32
  %v1739 = vpop.permute.xlu0 %1738
  %v1741 = vadd.f32 %v1731, %v1739
  %v1742 = vtanh.pop %v1741
  %1744 = vrot.lane.b32.xlu0 %v1742, 64
  %v1745 = vpop.permute.xlu0 %1744
  %v1747 = vmul.f32 %v1729, %v1745
  %1749 = vrot.lane.b32.xlu0 %v1652, 32
  %v1750 = vpop.permute.xlu0 %1749
  %v1751 = vsel %vm48, %v1750, 0
  %1753 = vmatprep.subr.mxu0 0.0
  %1754 = vmatpush1.msra.mxu0 0.0
  %1755 = vmatprep.subr.mxu0 0.0
  %1756 = vmatpush1.msra.mxu0 0.0
  %1757 = vmatprep.subr.mxu0 0.0
  %1758 = vmatpush1.msra.mxu0 0.0
  %1759 = vmatprep.subr.mxu0 0.0
  %1760 = vmatpush1.msra.mxu0 0.0
  %1761 = vmatprep.subr.mxu0 0.0
  %1762 = vmatpush1.msra.mxu0 0.0
  %1763 = vmatprep.subr.mxu0 0.0
  %1764 = vmatpush1.msra.mxu0 0.0
  %1765 = vmatprep.subr.mxu0 0.0
  %1766 = vmatpush1.msra.mxu0 0.0
  %1767 = vmatprep.subr.mxu0 0.0
  %1768 = vmatpush1.msra.mxu0 0.0
  %1769 = vmatprep.subr.mxu0 0.0
  %1770 = vmatpush1.msra.mxu0 0.0
  %1771 = vmatprep.subr.mxu0 0.0
  %1772 = vmatpush1.msra.mxu0 0.0
  %1773 = vmatprep.subr.mxu0 0.0
  %1774 = vmatpush1.msra.mxu0 0.0
  %1775 = vmatprep.subr.mxu0 0.0
  %1776 = vmatpush1.msra.mxu0 0.0
  %1777 = vmatprep.subr.mxu0 0.0
  %1778 = vmatpush1.msra.mxu0 %v39
  %1779 = vmatprep.subr.mxu0 0.0
  %1780 = vmatpush1.msra.mxu0 %v38
  %1781 = vmatprep.subr.mxu0 0.0
  %1782 = vmatpush1.msra.mxu0 %v37
  %1783 = vmatprep.subr.mxu0 0.0
  %1784 = vmatpush1.msra.mxu0 %v36
  %1785 = vmatprep.subr.mxu0 0.0
  %1786 = vmatpush2.msra.mxu0 0.0
  %1787 = vmatprep.subr.mxu0 0.0
  %1788 = vmatpush2.msra.mxu0 0.0
  %1789 = vmatprep.subr.mxu0 0.0
  %1790 = vmatpush2.msra.mxu0 0.0
  %1791 = vmatprep.subr.mxu0 0.0
  %1792 = vmatpush2.msra.mxu0 0.0
  %1793 = vmatprep.subr.mxu0 0.0
  %1794 = vmatpush2.msra.mxu0 0.0
  %1795 = vmatprep.subr.mxu0 0.0
  %1796 = vmatpush2.msra.mxu0 0.0
  %1797 = vmatprep.subr.mxu0 0.0
  %1798 = vmatpush2.msra.mxu0 0.0
  %1799 = vmatprep.subr.mxu0 0.0
  %1800 = vmatpush2.msra.mxu0 0.0
  %1801 = vmatprep.subr.mxu0 0.0
  %1802 = vmatpush2.msra.mxu0 0.0
  %1803 = vmatprep.subr.mxu0 0.0
  %1804 = vmatpush2.msra.mxu0 0.0
  %1805 = vmatprep.subr.mxu0 0.0
  %1806 = vmatpush2.msra.mxu0 0.0
  %1807 = vmatprep.subr.mxu0 0.0
  %1808 = vmatpush2.msra.mxu0 0.0
  %1809 = vmatprep.subr.mxu0 0.0
  %1810 = vmatpush2.msra.mxu0 0.0
  %1811 = vmatprep.subr.mxu0 0.0
  %1812 = vmatpush2.msra.mxu0 0.0
  %1813 = vmatprep.subr.mxu0 0.0
  %1814 = vmatpush2.msra.mxu0 0.0
  %1815 = vmatprep.subr.mxu0 0.0
  %1816 = vmatpush2.msra.mxu0 0.0
  %1817 = vmatprep.mubr.f32.mxu0 0.0
  %1818 = vmatmul.mubr.f32.gmra.mxu0 %v1751
  %v1819 = vpop.f32.mrf.mxu0
  %v1820 = vadd.f32 0.0, %v1819
  %v1821 = vpop.f32.mrf.mxu0
  %1822 = vdwg.mxu0
  %1824 = vrot.lane.b32.xlu0 %v1747, 32
  %v1825 = vpop.permute.xlu0 %1824
  %v1826 = vsel %vm48, %v1825, 0
  %1828 = vmatprep.subr.mxu0 0.0
  %1829 = vmatpush1.msra.mxu0 0.0
  %1830 = vmatprep.subr.mxu0 0.0
  %1831 = vmatpush1.msra.mxu0 0.0
  %1832 = vmatprep.subr.mxu0 0.0
  %1833 = vmatpush1.msra.mxu0 0.0
  %1834 = vmatprep.subr.mxu0 0.0
  %1835 = vmatpush1.msra.mxu0 0.0
  %1836 = vmatprep.subr.mxu0 0.0
  %1837 = vmatpush1.msra.mxu0 0.0
  %1838 = vmatprep.subr.mxu0 0.0
  %1839 = vmatpush1.msra.mxu0 0.0
  %1840 = vmatprep.subr.mxu0 0.0
  %1841 = vmatpush1.msra.mxu0 0.0
  %1842 = vmatprep.subr.mxu0 0.0
  %1843 = vmatpush1.msra.mxu0 0.0
  %1844 = vmatprep.subr.mxu0 0.0
  %1845 = vmatpush1.msra.mxu0 0.0
  %1846 = vmatprep.subr.mxu0 0.0
  %1847 = vmatpush1.msra.mxu0 0.0
  %1848 = vmatprep.subr.mxu0 0.0
  %1849 = vmatpush1.msra.mxu0 0.0
  %1850 = vmatprep.subr.mxu0 0.0
  %1851 = vmatpush1.msra.mxu0 0.0
  %1852 = vmatprep.subr.mxu0 0.0
  %1853 = vmatpush1.msra.mxu0 %v35
  %1854 = vmatprep.subr.mxu0 0.0
  %1855 = vmatpush1.msra.mxu0 %v34
  %1856 = vmatprep.subr.mxu0 0.0
  %1857 = vmatpush1.msra.mxu0 %v33
  %1858 = vmatprep.subr.mxu0 0.0
  %1859 = vmatpush1.msra.mxu0 %v32
  %1860 = vmatprep.subr.mxu0 0.0
  %1861 = vmatpush2.msra.mxu0 0.0
  %1862 = vmatprep.subr.mxu0 0.0
  %1863 = vmatpush2.msra.mxu0 0.0
  %1864 = vmatprep.subr.mxu0 0.0
  %1865 = vmatpush2.msra.mxu0 0.0
  %1866 = vmatprep.subr.mxu0 0.0
  %1867 = vmatpush2.msra.mxu0 0.0
  %1868 = vmatprep.subr.mxu0 0.0
  %1869 = vmatpush2.msra.mxu0 0.0
  %1870 = vmatprep.subr.mxu0 0.0
  %1871 = vmatpush2.msra.mxu0 0.0
  %1872 = vmatprep.subr.mxu0 0.0
  %1873 = vmatpush2.msra.mxu0 0.0
  %1874 = vmatprep.subr.mxu0 0.0
  %1875 = vmatpush2.msra.mxu0 0.0
  %1876 = vmatprep.subr.mxu0 0.0
  %1877 = vmatpush2.msra.mxu0 0.0
  %1878 = vmatprep.subr.mxu0 0.0
  %1879 = vmatpush2.msra.mxu0 0.0
  %1880 = vmatprep.subr.mxu0 0.0
  %1881 = vmatpush2.msra.mxu0 0.0
  %1882 = vmatprep.subr.mxu0 0.0
  %1883 = vmatpush2.msra.mxu0 0.0
  %1884 = vmatprep.subr.mxu0 0.0
  %1885 = vmatpush2.msra.mxu0 0.0
  %1886 = vmatprep.subr.mxu0 0.0
  %1887 = vmatpush2.msra.mxu0 0.0
  %1888 = vmatprep.subr.mxu0 0.0
  %1889 = vmatpush2.msra.mxu0 0.0
  %1890 = vmatprep.subr.mxu0 0.0
  %1891 = vmatpush2.msra.mxu0 0.0
  %1892 = vmatprep.mubr.f32.mxu0 0.0
  %1893 = vmatmul.mubr.f32.gmra.mxu0 %v1826
  %v1894 = vpop.f32.mrf.mxu0
  %v1895 = vadd.f32 %v1820, %v1894
  %v1896 = vpop.f32.mrf.mxu0
  %1897 = vdwg.mxu0
  %v1898 = vadd.f32 %v1895, %v45
  %v1899 = vmul.f32 %v1898, 0.5
  %v1900 = vtanh.pop %v1899
  %v1901 = vmul.f32 %v1900, 0.5
  %v1902 = vadd.f32 %v1901, 0.5
  %v1903 = vtanh.pop %v1898
  %v1904 = vmul.f32 %v1902, %v1646
  %1906 = vrot.lane.b32.xlu0 %v1903, 64
  %v1907 = vpop.permute.xlu0 %1906
  %v1909 = vmul.f32 %v1902, %v1907
  %1911 = vrot.lane.b32.xlu0 %v1909, 32
  %v1912 = vpop.permute.xlu0 %1911
  %v1914 = vadd.f32 %v1904, %v1912
  %v1915 = vtanh.pop %v1914
  %1917 = vrot.lane.b32.xlu0 %v1915, 64
  %v1918 = vpop.permute.xlu0 %1917
  %v1920 = vmul.f32 %v1902, %v1918
  %s1921 = scalar_lea.vmem %s0, 14
  %v1922 = vld [vmem:[%s1921] sm:$0x3]
  %1923 = vmatprep.subr.mxu0 0.0
  %1924 = vmatpush1.msra.mxu0 0.0
  %1925 = vmatprep.subr.mxu0 0.0
  %1926 = vmatpush1.msra.mxu0 0.0
  %1927 = vmatprep.subr.mxu0 0.0
  %1928 = vmatpush1.msra.mxu0 0.0
  %1929 = vmatprep.subr.mxu0 0.0
  %1930 = vmatpush1.msra.mxu0 0.0
  %1931 = vmatprep.subr.mxu0 0.0
  %1932 = vmatpush1.msra.mxu0 0.0
  %1933 = vmatprep.subr.mxu0 0.0
  %1934 = vmatpush1.msra.mxu0 0.0
  %1935 = vmatprep.subr.mxu0 0.0
  %1936 = vmatpush1.msra.mxu0 0.0
  %1937 = vmatprep.subr.mxu0 0.0
  %1938 = vmatpush1.msra.mxu0 0.0
  %1939 = vmatprep.subr.mxu0 0.0
  %1940 = vmatpush1.msra.mxu0 0.0
  %1941 = vmatprep.subr.mxu0 0.0
  %1942 = vmatpush1.msra.mxu0 0.0
  %1943 = vmatprep.subr.mxu0 0.0
  %1944 = vmatpush1.msra.mxu0 0.0
  %1945 = vmatprep.subr.mxu0 0.0
  %1946 = vmatpush1.msra.mxu0 0.0
  %1947 = vmatprep.subr.mxu0 0.0
  %1948 = vmatpush1.msra.mxu0 %v31
  %1949 = vmatprep.subr.mxu0 0.0
  %1950 = vmatpush1.msra.mxu0 %v30
  %1951 = vmatprep.subr.mxu0 0.0
  %1952 = vmatpush1.msra.mxu0 %v29
  %1953 = vmatprep.subr.mxu0 0.0
  %1954 = vmatpush1.msra.mxu0 %v28
  %1955 = vmatprep.subr.mxu0 0.0
  %1956 = vmatpush2.msra.mxu0 0.0
  %1957 = vmatprep.subr.mxu0 0.0
  %1958 = vmatpush2.msra.mxu0 0.0
  %1959 = vmatprep.subr.mxu0 0.0
  %1960 = vmatpush2.msra.mxu0 0.0
  %1961 = vmatprep.subr.mxu0 0.0
  %1962 = vmatpush2.msra.mxu0 0.0
  %1963 = vmatprep.subr.mxu0 0.0
  %1964 = vmatpush2.msra.mxu0 0.0
  %1965 = vmatprep.subr.mxu0 0.0
  %1966 = vmatpush2.msra.mxu0 0.0
  %1967 = vmatprep.subr.mxu0 0.0
  %1968 = vmatpush2.msra.mxu0 0.0
  %1969 = vmatprep.subr.mxu0 0.0
  %1970 = vmatpush2.msra.mxu0 0.0
  %1971 = vmatprep.subr.mxu0 0.0
  %1972 = vmatpush2.msra.mxu0 0.0
  %1973 = vmatprep.subr.mxu0 0.0
  %1974 = vmatpush2.msra.mxu0 0.0
  %1975 = vmatprep.subr.mxu0 0.0
  %1976 = vmatpush2.msra.mxu0 0.0
  %1977 = vmatprep.subr.mxu0 0.0
  %1978 = vmatpush2.msra.mxu0 0.0
  %1979 = vmatprep.subr.mxu0 0.0
  %1980 = vmatpush2.msra.mxu0 0.0
  %1981 = vmatprep.subr.mxu0 0.0
  %1982 = vmatpush2.msra.mxu0 0.0
  %1983 = vmatprep.subr.mxu0 0.0
  %1984 = vmatpush2.msra.mxu0 0.0
  %1985 = vmatprep.subr.mxu0 0.0
  %1986 = vmatpush2.msra.mxu0 0.0
  %1987 = vmatprep.mubr.f32.mxu0 0.0
  %1988 = vmatmul.mubr.f32.gmra.mxu0 %v1826
  %v1989 = vpop.f32.mrf.mxu0
  %v1990 = vadd.f32 0.0, %v1989
  %v1991 = vpop.f32.mrf.mxu0
  %1992 = vdwg.mxu0
  %v1993 = vadd.f32 %v1922, %v1990
  %v1994 = vmul.f32 %v1993, 0.5
  %v1995 = vtanh.pop %v1994
  %v1996 = vmul.f32 %v1995, 0.5
  %v1997 = vadd.f32 %v1996, 0.5
  %v1998 = vtanh.pop %v1993
  %v1999 = vmul.f32 %v1997, %v1741
  %2001 = vrot.lane.b32.xlu0 %v1998, 64
  %v2002 = vpop.permute.xlu0 %2001
  %v2004 = vmul.f32 %v1997, %v2002
  %2006 = vrot.lane.b32.xlu0 %v2004, 32
  %v2007 = vpop.permute.xlu0 %2006
  %v2009 = vadd.f32 %v1999, %v2007
  %v2010 = vtanh.pop %v2009
  %2012 = vrot.lane.b32.xlu0 %v2010, 64
  %v2013 = vpop.permute.xlu0 %2012
  %v2015 = vmul.f32 %v1997, %v2013
  %2017 = vrot.lane.b32.xlu0 %v1920, 32
  %v2018 = vpop.permute.xlu0 %2017
  %v2019 = vsel %vm48, %v2018, 0
  %2021 = vmatprep.subr.mxu0 0.0
  %2022 = vmatpush1.msra.mxu0 0.0
  %2023 = vmatprep.subr.mxu0 0.0
  %2024 = vmatpush1.msra.mxu0 0.0
  %2025 = vmatprep.subr.mxu0 0.0
  %2026 = vmatpush1.msra.mxu0 0.0
  %2027 = vmatprep.subr.mxu0 0.0
  %2028 = vmatpush1.msra.mxu0 0.0
  %2029 = vmatprep.subr.mxu0 0.0
  %2030 = vmatpush1.msra.mxu0 0.0
  %2031 = vmatprep.subr.mxu0 0.0
  %2032 = vmatpush1.msra.mxu0 0.0
  %2033 = vmatprep.subr.mxu0 0.0
  %2034 = vmatpush1.msra.mxu0 0.0
  %2035 = vmatprep.subr.mxu0 0.0
  %2036 = vmatpush1.msra.mxu0 0.0
  %2037 = vmatprep.subr.mxu0 0.0
  %2038 = vmatpush1.msra.mxu0 0.0
  %2039 = vmatprep.subr.mxu0 0.0
  %2040 = vmatpush1.msra.mxu0 0.0
  %2041 = vmatprep.subr.mxu0 0.0
  %2042 = vmatpush1.msra.mxu0 0.0
  %2043 = vmatprep.subr.mxu0 0.0
  %2044 = vmatpush1.msra.mxu0 0.0
  %2045 = vmatprep.subr.mxu0 0.0
  %2046 = vmatpush1.msra.mxu0 %v39
  %2047 = vmatprep.subr.mxu0 0.0
  %2048 = vmatpush1.msra.mxu0 %v38
  %2049 = vmatprep.subr.mxu0 0.0
  %2050 = vmatpush1.msra.mxu0 %v37
  %2051 = vmatprep.subr.mxu0 0.0
  %2052 = vmatpush1.msra.mxu0 %v36
  %2053 = vmatprep.subr.mxu0 0.0
  %2054 = vmatpush2.msra.mxu0 0.0
  %2055 = vmatprep.subr.mxu0 0.0
  %2056 = vmatpush2.msra.mxu0 0.0
  %2057 = vmatprep.subr.mxu0 0.0
  %2058 = vmatpush2.msra.mxu0 0.0
  %2059 = vmatprep.subr.mxu0 0.0
  %2060 = vmatpush2.msra.mxu0 0.0
  %2061 = vmatprep.subr.mxu0 0.0
  %2062 = vmatpush2.msra.mxu0 0.0
  %2063 = vmatprep.subr.mxu0 0.0
  %2064 = vmatpush2.msra.mxu0 0.0
  %2065 = vmatprep.subr.mxu0 0.0
  %2066 = vmatpush2.msra.mxu0 0.0
  %2067 = vmatprep.subr.mxu0 0.0
  %2068 = vmatpush2.msra.mxu0 0.0
  %2069 = vmatprep.subr.mxu0 0.0
  %2070 = vmatpush2.msra.mxu0 0.0
  %2071 = vmatprep.subr.mxu0 0.0
  %2072 = vmatpush2.msra.mxu0 0.0
  %2073 = vmatprep.subr.mxu0 0.0
  %2074 = vmatpush2.msra.mxu0 0.0
  %2075 = vmatprep.subr.mxu0 0.0
  %2076 = vmatpush2.msra.mxu0 0.0
  %2077 = vmatprep.subr.mxu0 0.0
  %2078 = vmatpush2.msra.mxu0 0.0
  %2079 = vmatprep.subr.mxu0 0.0
  %2080 = vmatpush2.msra.mxu0 0.0
  %2081 = vmatprep.subr.mxu0 0.0
  %2082 = vmatpush2.msra.mxu0 0.0
  %2083 = vmatprep.subr.mxu0 0.0
  %2084 = vmatpush2.msra.mxu0 0.0
  %2085 = vmatprep.mubr.f32.mxu0 0.0
  %2086 = vmatmul.mubr.f32.gmra.mxu0 %v2019
  %v2087 = vpop.f32.mrf.mxu0
  %v2088 = vadd.f32 0.0, %v2087
  %v2089 = vpop.f32.mrf.mxu0
  %2090 = vdwg.mxu0
  %2092 = vrot.lane.b32.xlu0 %v2015, 32
  %v2093 = vpop.permute.xlu0 %2092
  %v2094 = vsel %vm48, %v2093, 0
  %2096 = vmatprep.subr.mxu0 0.0
  %2097 = vmatpush1.msra.mxu0 0.0
  %2098 = vmatprep.subr.mxu0 0.0
  %2099 = vmatpush1.msra.mxu0 0.0
  %2100 = vmatprep.subr.mxu0 0.0
  %2101 = vmatpush1.msra.mxu0 0.0
  %2102 = vmatprep.subr.mxu0 0.0
  %2103 = vmatpush1.msra.mxu0 0.0
  %2104 = vmatprep.subr.mxu0 0.0
  %2105 = vmatpush1.msra.mxu0 0.0
  %2106 = vmatprep.subr.mxu0 0.0
  %2107 = vmatpush1.msra.mxu0 0.0
  %2108 = vmatprep.subr.mxu0 0.0
  %2109 = vmatpush1.msra.mxu0 0.0
  %2110 = vmatprep.subr.mxu0 0.0
  %2111 = vmatpush1.msra.mxu0 0.0
  %2112 = vmatprep.subr.mxu0 0.0
  %2113 = vmatpush1.msra.mxu0 0.0
  %2114 = vmatprep.subr.mxu0 0.0
  %2115 = vmatpush1.msra.mxu0 0.0
  %2116 = vmatprep.subr.mxu0 0.0
  %2117 = vmatpush1.msra.mxu0 0.0
  %2118 = vmatprep.subr.mxu0 0.0
  %2119 = vmatpush1.msra.mxu0 0.0
  %2120 = vmatprep.subr.mxu0 0.0
  %2121 = vmatpush1.msra.mxu0 %v35
  %2122 = vmatprep.subr.mxu0 0.0
  %2123 = vmatpush1.msra.mxu0 %v34
  %2124 = vmatprep.subr.mxu0 0.0
  %2125 = vmatpush1.msra.mxu0 %v33
  %2126 = vmatprep.subr.mxu0 0.0
  %2127 = vmatpush1.msra.mxu0 %v32
  %2128 = vmatprep.subr.mxu0 0.0
  %2129 = vmatpush2.msra.mxu0 0.0
  %2130 = vmatprep.subr.mxu0 0.0
  %2131 = vmatpush2.msra.mxu0 0.0
  %2132 = vmatprep.subr.mxu0 0.0
  %2133 = vmatpush2.msra.mxu0 0.0
  %2134 = vmatprep.subr.mxu0 0.0
  %2135 = vmatpush2.msra.mxu0 0.0
  %2136 = vmatprep.subr.mxu0 0.0
  %2137 = vmatpush2.msra.mxu0 0.0
  %2138 = vmatprep.subr.mxu0 0.0
  %2139 = vmatpush2.msra.mxu0 0.0
  %2140 = vmatprep.subr.mxu0 0.0
  %2141 = vmatpush2.msra.mxu0 0.0
  %2142 = vmatprep.subr.mxu0 0.0
  %2143 = vmatpush2.msra.mxu0 0.0
  %2144 = vmatprep.subr.mxu0 0.0
  %2145 = vmatpush2.msra.mxu0 0.0
  %2146 = vmatprep.subr.mxu0 0.0
  %2147 = vmatpush2.msra.mxu0 0.0
  %2148 = vmatprep.subr.mxu0 0.0
  %2149 = vmatpush2.msra.mxu0 0.0
  %2150 = vmatprep.subr.mxu0 0.0
  %2151 = vmatpush2.msra.mxu0 0.0
  %2152 = vmatprep.subr.mxu0 0.0
  %2153 = vmatpush2.msra.mxu0 0.0
  %2154 = vmatprep.subr.mxu0 0.0
  %2155 = vmatpush2.msra.mxu0 0.0
  %2156 = vmatprep.subr.mxu0 0.0
  %2157 = vmatpush2.msra.mxu0 0.0
  %2158 = vmatprep.subr.mxu0 0.0
  %2159 = vmatpush2.msra.mxu0 0.0
  %2160 = vmatprep.mubr.f32.mxu0 0.0
  %2161 = vmatmul.mubr.f32.gmra.mxu0 %v2094
  %v2162 = vpop.f32.mrf.mxu0
  %v2163 = vadd.f32 %v2088, %v2162
  %v2164 = vpop.f32.mrf.mxu0
  %2165 = vdwg.mxu0
  %v2166 = vadd.f32 %v2163, %v45
  %v2167 = vmul.f32 %v2166, 0.5
  %v2168 = vtanh.pop %v2167
  %v2169 = vmul.f32 %v2168, 0.5
  %v2170 = vadd.f32 %v2169, 0.5
  %v2171 = vtanh.pop %v2166
  %v2172 = vmul.f32 %v2170, %v1914
  %2174 = vrot.lane.b32.xlu0 %v2171, 64
  %v2175 = vpop.permute.xlu0 %2174
  %v2177 = vmul.f32 %v2170, %v2175
  %2179 = vrot.lane.b32.xlu0 %v2177, 32
  %v2180 = vpop.permute.xlu0 %2179
  %v2182 = vadd.f32 %v2172, %v2180
  %v2183 = vtanh.pop %v2182
  %2185 = vrot.lane.b32.xlu0 %v2183, 64
  %v2186 = vpop.permute.xlu0 %2185
  %v2188 = vmul.f32 %v2170, %v2186
  %v2189 = vld [vmem:[%s5] sm:$0xff]
  %v2190 = vld [vmem:[%s5 + $0x8] sm:$0xff]
  %v2191 = vld [vmem:[%s5 + $0x10] sm:$0xff]
  %v2192 = vld [vmem:[%s5 + $0x18] sm:$0xff]
  %v2193 = vld [vmem:[#allocation2] sm:$0x1]
  %v2195 = vlaneseq
  %v2196 = vshrl.u32 %v2195, 7
  %v2197 = vsub.s32 0, %v2196
  %v2198 = vrot.slane %v2193, %v2197
  %2201 = vrot.lane.b32.xlu0 %v2188, 32
  %v2202 = vpop.permute.xlu0 %2201
  %v2203 = vsel %vm48, %v2202, 0
  %2205 = vmatprep.subr.mxu0 0.0
  %2206 = vmatpush1.msra.mxu0 0.0
  %2207 = vmatprep.subr.mxu0 0.0
  %2208 = vmatpush1.msra.mxu0 0.0
  %2209 = vmatprep.subr.mxu0 0.0
  %2210 = vmatpush1.msra.mxu0 0.0
  %2211 = vmatprep.subr.mxu0 0.0
  %2212 = vmatpush1.msra.mxu0 0.0
  %2213 = vmatprep.subr.mxu0 0.0
  %2214 = vmatpush1.msra.mxu0 0.0
  %2215 = vmatprep.subr.mxu0 0.0
  %2216 = vmatpush1.msra.mxu0 0.0
  %2217 = vmatprep.subr.mxu0 0.0
  %2218 = vmatpush1.msra.mxu0 0.0
  %2219 = vmatprep.subr.mxu0 0.0
  %2220 = vmatpush1.msra.mxu0 0.0
  %2221 = vmatprep.subr.mxu0 0.0
  %2222 = vmatpush1.msra.mxu0 0.0
  %2223 = vmatprep.subr.mxu0 0.0
  %2224 = vmatpush1.msra.mxu0 0.0
  %2225 = vmatprep.subr.mxu0 0.0
  %2226 = vmatpush1.msra.mxu0 0.0
  %2227 = vmatprep.subr.mxu0 0.0
  %2228 = vmatpush1.msra.mxu0 0.0
  %2229 = vmatprep.subr.mxu0 0.0
  %2230 = vmatpush1.msra.mxu0 %v2192
  %2231 = vmatprep.subr.mxu0 0.0
  %2232 = vmatpush1.msra.mxu0 %v2191
  %2233 = vmatprep.subr.mxu0 0.0
  %2234 = vmatpush1.msra.mxu0 %v2190
  %2235 = vmatprep.subr.mxu0 0.0
  %2236 = vmatpush1.msra.mxu0 %v2189
  %2237 = vmatprep.subr.mxu0 0.0
  %2238 = vmatpush2.msra.mxu0 0.0
  %2239 = vmatprep.subr.mxu0 0.0
  %2240 = vmatpush2.msra.mxu0 0.0
  %2241 = vmatprep.subr.mxu0 0.0
  %2242 = vmatpush2.msra.mxu0 0.0
  %2243 = vmatprep.subr.mxu0 0.0
  %2244 = vmatpush2.msra.mxu0 0.0
  %2245 = vmatprep.subr.mxu0 0.0
  %2246 = vmatpush2.msra.mxu0 0.0
  %2247 = vmatprep.subr.mxu0 0.0
  %2248 = vmatpush2.msra.mxu0 0.0
  %2249 = vmatprep.subr.mxu0 0.0
  %2250 = vmatpush2.msra.mxu0 0.0
  %2251 = vmatprep.subr.mxu0 0.0
  %2252 = vmatpush2.msra.mxu0 0.0
  %2253 = vmatprep.subr.mxu0 0.0
  %2254 = vmatpush2.msra.mxu0 0.0
  %2255 = vmatprep.subr.mxu0 0.0
  %2256 = vmatpush2.msra.mxu0 0.0
  %2257 = vmatprep.subr.mxu0 0.0
  %2258 = vmatpush2.msra.mxu0 0.0
  %2259 = vmatprep.subr.mxu0 0.0
  %2260 = vmatpush2.msra.mxu0 0.0
  %2261 = vmatprep.subr.mxu0 0.0
  %2262 = vmatpush2.msra.mxu0 0.0
  %2263 = vmatprep.subr.mxu0 0.0
  %2264 = vmatpush2.msra.mxu0 0.0
  %2265 = vmatprep.subr.mxu0 0.0
  %2266 = vmatpush2.msra.mxu0 0.0
  %2267 = vmatprep.subr.mxu0 0.0
  %2268 = vmatpush2.msra.mxu0 0.0
  %2269 = vmatprep.mubr.f32.mxu0 0.0
  %2270 = vmatmul.mubr.f32.gmra.mxu0 %v2203
  %v2271 = vpop.f32.mrf.mxu0
  %v2272 = vadd.f32 %v2198, %v2271
  %v2273 = vpop.f32.mrf.mxu0
  %2274 = vdwg.mxu0
  %vm2275 = vcmask 1024
  %2276 = vst.msk [vmem:[%s7] sm:$0x3] %vm2275, %v2272
  // Predicated region
  $region30: #{speech_lstm_forward.1} parent=0 // pred_check
    _
  $region31: #{speech_lstm_forward.1} parent=0 // pred_check_branch
    %2278 = sbr.rel (0) target = $region33
  $region32: #{speech_lstm_forward.1} parent=0 // pred_region
    _
  $region33: #{speech_lstm_forward.1} parent=0 // pred_fallthru
    _
  // Predicated region
  $region34: #{speech_lstm_forward.1} parent=0 // pred_check
    _
  $region35: #{speech_lstm_forward.1} parent=0 // pred_check_branch
    %2280 = sbr.rel (0) target = $region37
  $region36: #{speech_lstm_forward.1} parent=0 // pred_region
    _
  $region37: #{speech_lstm_forward.1} parent=0 // pred_fallthru
    _

</llo_original>
